<compile_context>
chip_gen: v5e
topology: v5e:2x2
jax: 0.10.0
libtpu: 0.0.40
codegen_flags: <defaults>
</compile_context>

<pallas_src>
import functools

import jax
import jax.numpy as jnp
from jax.experimental import pallas as pl
from jax.experimental.pallas import tpu as pltpu

HIDDEN = 64
# bf16 MXU operands with f32 accumulation (review item for v5e/v6e/v7x).
# Switch to jnp.float32 to recover exact f32 (PyTorch) matmul numerics.
MATMUL_DTYPE = jnp.bfloat16


# ---------------------------------------------------------------------------
# Fused kernel: one grid step == one batch element, everything stays in VMEM.
# ---------------------------------------------------------------------------
def fused_classifier_kernel(patches_ref, cw_ref, cb_ref,
                            wih_ref, whh_ref, bl_ref,
                            w1_ref, b1_ref, w2_ref, b2_ref, w3_ref, b3_ref,
                            out_ref, *, seq_len, p_pad):
    f32 = jnp.float32
    md = MATMUL_DTYPE

    # ---- Conv2d(1, 64, 3): ONE flattened matmul over all S*P_pad patch rows ----
    flat = patches_ref[0]                                               # (S*P_pad, 9)
    conv = jnp.dot(flat, cw_ref[...], preferred_element_type=f32)       # (S*P_pad, 64)
    # MaxPool2d((5,30)) covers the full conv map -> global max over positions.
    conv = conv.reshape(seq_len, p_pad, HIDDEN)                         # p_pad % 8 == 0
    pooled = jnp.max(conv, axis=1) + cb_ref[...]                        # bias after max

    # ---- LSTM: input projection hoisted out of the sequential loop ----
    gates_x = jnp.dot(pooled.astype(md), wih_ref[...],
                      preferred_element_type=f32) + bl_ref[...]         # (S, 256)

    h = jnp.zeros((1, HIDDEN), f32)
    c = jnp.zeros((1, HIDDEN), f32)
    for t in range(seq_len):                    # small static trip count, fully unrolled
        gates = gates_x[t:t + 1, :] + jnp.dot(h.astype(md), whh_ref[...],
                                              preferred_element_type=f32)   # (1, 256)
        # gate order (i, f, g, o): sigmoid the (i, f) 128-lane pair in one shot
        sig_if = jax.nn.sigmoid(gates[:, :2 * HIDDEN])
        i_g = sig_if[:, :HIDDEN]
        f_g = sig_if[:, HIDDEN:]
        g_g = jnp.tanh(gates[:, 2 * HIDDEN:3 * HIDDEN])
        o_g = jax.nn.sigmoid(gates[:, 3 * HIDDEN:])
        c = f_g * c + i_g * g_g
        h = o_g * jnp.tanh(c)

    # ---- MLP head: Linear(64,256)+ReLU -> Linear(256,32)+ReLU -> Linear(32,2) ----
    # TODO(synk): nn.Dropout is identity at inference; training-mode dropout not implemented.
    z = jnp.dot(h.astype(md), w1_ref[...], preferred_element_type=f32) + b1_ref[...]
    z = jnp.maximum(z, 0.0)
    z = jnp.dot(z.astype(md), w2_ref[...], preferred_element_type=f32) + b2_ref[...]
    z = jnp.maximum(z, 0.0)
    z = jnp.dot(z.astype(md), w3_ref[...], preferred_element_type=f32) + b3_ref[...]
    out_ref[0] = z                                                      # (1, 2)


# ---------------------------------------------------------------------------
# Glue
# ---------------------------------------------------------------------------
def im2col_3x3(x):
    # x: (N, H, W) -> (N, (H-2)*(W-2), 9); patch index = ki*3 + kj (matches conv_w rows)
    n, h, w = x.shape
    oh, ow = h - 2, w - 2
    cols = [x[:, i:i + oh, j:j + ow] for i in range(3) for j in range(3)]
    return jnp.stack(cols, axis=-1).reshape(n, oh * ow, 9)


def init_params(key):
    ks = jax.random.split(key, 12)

    def u(k, shape, fan_in):
        bound = 1.0 / (fan_in ** 0.5)
        return jax.random.uniform(k, shape, jnp.float32, -bound, bound)

    return dict(
        conv_w=u(ks[0], (9, HIDDEN), 9),                  # (k*k*Cin, Cout)
        conv_b=u(ks[1], (1, HIDDEN), 9),
        w_ih=u(ks[2], (HIDDEN, 4 * HIDDEN), HIDDEN),      # gate order i, f, g, o
        w_hh=u(ks[3], (HIDDEN, 4 * HIDDEN), HIDDEN),
        # b_ih + b_hh (two independent draws, matching PyTorch init statistics)
        b_lstm=u(ks[4], (1, 4 * HIDDEN), HIDDEN) + u(ks[11], (1, 4 * HIDDEN), HIDDEN),
        w1=u(ks[5], (64, 256), 64),
        b1=u(ks[6], (1, 256), 64),
        w2=u(ks[7], (256, 32), 256),
        b2=u(ks[8], (1, 32), 256),
        w3=u(ks[9], (32, 2), 32),
        b3=u(ks[10], (1, 2), 32),
    )


def neural_classifier_forward(params, data):
    b, s, h, w = data.shape
    # MaxPool2d((5,30)) must reduce the conv map to 1x1 so the LSTM input size is 64,
    # exactly as the PyTorch .view((B, S, -1)) + LSTM(64, ...) requires.
    assert (h - 2) == 5 and (w - 2) == 30, "spatial dims must give a 1x1 pooled map"

    n = b * s
    x = data.reshape(n, h, w)                      # nn.Flatten(0,1); C_in=1 is implicit
    patches = im2col_3x3(x)                        # (N, P=150, 9)
    p = patches.shape[1]
    p_pad = ((p + 7) // 8) * 8                     # sublane-align P; duplicated rows
    if p_pad != p:                                 # leave the max unchanged
        patches = jnp.concatenate([patches, patches[:, :p_pad - p, :]], axis=1)
    patches = patches.reshape(b, s * p_pad, 9).astype(MATMUL_DTYPE)

    md = MATMUL_DTYPE
    kernel = functools.partial(fused_classifier_kernel, seq_len=s, p_pad=p_pad)

    out = pl.pallas_call(
        kernel,
        out_shape=jax.ShapeDtypeStruct((b, 1, 2), jnp.float32),
        grid=(b,),
        in_specs=[
            pl.BlockSpec((1, s * p_pad, 9), lambda i: (i, 0, 0)),      # patches (per batch)
            pl.BlockSpec((9, HIDDEN), lambda i: (0, 0)),               # conv_w
            pl.BlockSpec((1, HIDDEN), lambda i: (0, 0)),               # conv_b
            pl.BlockSpec((HIDDEN, 4 * HIDDEN), lambda i: (0, 0)),      # w_ih
            pl.BlockSpec((HIDDEN, 4 * HIDDEN), lambda i: (0, 0)),      # w_hh
            pl.BlockSpec((1, 4 * HIDDEN), lambda i: (0, 0)),           # b_lstm
            pl.BlockSpec((HIDDEN, 256), lambda i: (0, 0)),             # w1
            pl.BlockSpec((1, 256), lambda i: (0, 0)),                  # b1
            pl.BlockSpec((256, 32), lambda i: (0, 0)),                 # w2
            pl.BlockSpec((1, 32), lambda i: (0, 0)),                   # b2
            pl.BlockSpec((32, 2), lambda i: (0, 0)),                   # w3
            pl.BlockSpec((1, 2), lambda i: (0, 0)),                    # b3
        ],
        out_specs=pl.BlockSpec((1, 1, 2), lambda i: (i, 0, 0)),
        compiler_params=pltpu.CompilerParams(
            dimension_semantics=("parallel",)),    # batch elements -> both TCs on v7x
    )(patches,
      params['conv_w'].astype(md), params['conv_b'],
      params['w_ih'].astype(md), params['w_hh'].astype(md), params['b_lstm'],
      params['w1'].astype(md), params['b1'],
      params['w2'].astype(md), params['b2'],
      params['w3'].astype(md), params['b3'])
    return out[:, 0, :]                            # (B, 2)


def reference_forward(params, data):
    # Pure-JAX reference of the same forward, with identical matmul precision policy.
    md = MATMUL_DTYPE
    b, s, h, w = data.shape
    x = data.reshape(b * s, h, w)
    patches = im2col_3x3(x)
    conv = jnp.einsum('npk,kc->npc', patches.astype(md), params['conv_w'].astype(md),
                      preferred_element_type=jnp.float32)
    pooled = jnp.max(conv, axis=1) + params['conv_b']
    feat = pooled.reshape(b, s, HIDDEN)
    hh = jnp.zeros((b, HIDDEN), jnp.float32)
    cc = jnp.zeros((b, HIDDEN), jnp.float32)
    w_ih = params['w_ih'].astype(md)
    w_hh = params['w_hh'].astype(md)
    for t in range(s):
        gates = (jnp.dot(feat[:, t, :].astype(md), w_ih, preferred_element_type=jnp.float32)
                 + jnp.dot(hh.astype(md), w_hh, preferred_element_type=jnp.float32)
                 + params['b_lstm'])
        i = jax.nn.sigmoid(gates[:, :HIDDEN])
        f = jax.nn.sigmoid(gates[:, HIDDEN:2 * HIDDEN])
        g = jnp.tanh(gates[:, 2 * HIDDEN:3 * HIDDEN])
        o = jax.nn.sigmoid(gates[:, 3 * HIDDEN:])
        cc = f * cc + i * g
        hh = o * jnp.tanh(cc)
    z = jnp.maximum(jnp.dot(hh.astype(md), params['w1'].astype(md),
                            preferred_element_type=jnp.float32) + params['b1'], 0.0)
    z = jnp.maximum(jnp.dot(z.astype(md), params['w2'].astype(md),
                            preferred_element_type=jnp.float32) + params['b2'], 0.0)
    return jnp.dot(z.astype(md), params['w3'].astype(md),
                   preferred_element_type=jnp.float32) + params['b3']


if __name__ == "__main__":
    key = jax.random.PRNGKey(0)
    pkey, dkey = jax.random.split(key)
    params = init_params(pkey)

    # (B, S, H, W) = (2, 8, 7, 32): conv map (5, 30) -> MaxPool(5,30) -> 1x1 -> LSTM dim 64.
    data = jax.random.normal(dkey, (2, 8, 7, 32), dtype=jnp.float32)

    out = jax.jit(neural_classifier_forward)(params, data)
    out = jax.block_until_ready(out)
    assert out.shape == (2, 2) and out.dtype == jnp.float32

    ref = reference_forward(params, data)
    assert jnp.allclose(out, ref, rtol=1e-3, atol=1e-3), (out, ref)

    print("KERNEL_OK")
</pallas_src>

<mosaic_0001>
module attributes {stable_mosaic.version = 11 : i64} {
  func.func @fused_classifier_kernel(%arg0: i32, %arg1: memref<1x1216x9xbf16, #tpu.memory_space<vmem>>, %arg2: memref<9x64xbf16, #tpu.memory_space<vmem>>, %arg3: memref<1x64xf32, #tpu.memory_space<vmem>>, %arg4: memref<64x256xbf16, #tpu.memory_space<vmem>>, %arg5: memref<64x256xbf16, #tpu.memory_space<vmem>>, %arg6: memref<1x256xf32, #tpu.memory_space<vmem>>, %arg7: memref<64x256xbf16, #tpu.memory_space<vmem>>, %arg8: memref<1x256xf32, #tpu.memory_space<vmem>>, %arg9: memref<256x32xbf16, #tpu.memory_space<vmem>>, %arg10: memref<1x32xf32, #tpu.memory_space<vmem>>, %arg11: memref<32x2xbf16, #tpu.memory_space<vmem>>, %arg12: memref<1x2xf32, #tpu.memory_space<vmem>>, %arg13: memref<1x1x2xf32, #tpu.memory_space<vmem>>) attributes {dimension_semantics = [#tpu.dimension_semantics<parallel>], iteration_bounds = array<i64: 2>, scalar_prefetch = 0 : i64, scratch_operands = 0 : i64, tpu.core_type = #tpu.core_type<tc>, window_params = [{transform_indices = @transform_0, window_bounds = array<i64: 1, 1216, 9>}, {pipeline_mode = #tpu.pipeline_mode<synchronous>, transform_indices = @transform_1, window_bounds = array<i64: 9, 64>}, {pipeline_mode = #tpu.pipeline_mode<synchronous>, transform_indices = @transform_2, window_bounds = array<i64: 1, 64>}, {pipeline_mode = #tpu.pipeline_mode<synchronous>, transform_indices = @transform_3, window_bounds = array<i64: 64, 256>}, {pipeline_mode = #tpu.pipeline_mode<synchronous>, transform_indices = @transform_4, window_bounds = array<i64: 64, 256>}, {pipeline_mode = #tpu.pipeline_mode<synchronous>, transform_indices = @transform_5, window_bounds = array<i64: 1, 256>}, {pipeline_mode = #tpu.pipeline_mode<synchronous>, transform_indices = @transform_6, window_bounds = array<i64: 64, 256>}, {pipeline_mode = #tpu.pipeline_mode<synchronous>, transform_indices = @transform_7, window_bounds = array<i64: 1, 256>}, {pipeline_mode = #tpu.pipeline_mode<synchronous>, transform_indices = @transform_8, window_bounds = array<i64: 256, 32>}, {pipeline_mode = #tpu.pipeline_mode<synchronous>, transform_indices = @transform_9, window_bounds = array<i64: 1, 32>}, {pipeline_mode = #tpu.pipeline_mode<synchronous>, transform_indices = @transform_10, window_bounds = array<i64: 32, 2>}, {pipeline_mode = #tpu.pipeline_mode<synchronous>, transform_indices = @transform_11, window_bounds = array<i64: 1, 2>}, {transform_indices = @transform_12, window_bounds = array<i64: 1, 1, 2>}]} {
    %c0 = arith.constant 0 : index
    %c0_0 = arith.constant 0 : index
    %c0_1 = arith.constant 0 : index
    %0 = vector.load %arg1[%c0, %c0_0, %c0_1] : memref<1x1216x9xbf16, #tpu.memory_space<vmem>>, vector<1x1216x9xbf16>
    %1 = vector.shape_cast %0 : vector<1x1216x9xbf16> to vector<1216x9xbf16>
    %c0_2 = arith.constant 0 : index
    %c0_3 = arith.constant 0 : index
    %2 = vector.load %arg2[%c0_2, %c0_3] : memref<9x64xbf16, #tpu.memory_space<vmem>>, vector<9x64xbf16>
    %cst = arith.constant dense<0.000000e+00> : vector<1216x64xf32>
    %3 = tpu.matmul %1, %2, %cst {dimension_numbers = #tpu.dot_dimension_numbers<[1], [0], [0], [1], [0, 0, 1, 1], [], []>} : vector<1216x9xbf16>, vector<9x64xbf16>, vector<1216x64xf32> -> vector<1216x64xf32>
    %4 = vector.shape_cast %3 : vector<1216x64xf32> to vector<8x152x64xf32>
    %cst_4 = arith.constant dense<0xFF800000> : vector<8x64xf32>
    %5 = vector.multi_reduction <maximumf>, %4, %cst_4 [1] : vector<8x152x64xf32> to vector<8x64xf32>
    %c0_5 = arith.constant 0 : index
    %c0_6 = arith.constant 0 : index
    %6 = vector.load %arg3[%c0_5, %c0_6] : memref<1x64xf32, #tpu.memory_space<vmem>>, vector<1x64xf32>
    %7 = vector.broadcast %6 : vector<1x64xf32> to vector<8x64xf32>
    %8 = arith.addf %5, %7 : vector<8x64xf32>
    %9 = arith.truncf %8 : vector<8x64xf32> to vector<8x64xbf16>
    %c0_7 = arith.constant 0 : index
    %c0_8 = arith.constant 0 : index
    %10 = vector.load %arg4[%c0_7, %c0_8] : memref<64x256xbf16, #tpu.memory_space<vmem>>, vector<64x256xbf16>
    %cst_9 = arith.constant dense<0.000000e+00> : vector<8x256xf32>
    %11 = tpu.matmul %9, %10, %cst_9 {dimension_numbers = #tpu.dot_dimension_numbers<[1], [0], [0], [1], [0, 0, 1, 1], [], []>} : vector<8x64xbf16>, vector<64x256xbf16>, vector<8x256xf32> -> vector<8x256xf32>
    %c0_10 = arith.constant 0 : index
    %c0_11 = arith.constant 0 : index
    %12 = vector.load %arg6[%c0_10, %c0_11] : memref<1x256xf32, #tpu.memory_space<vmem>>, vector<1x256xf32>
    %13 = vector.broadcast %12 : vector<1x256xf32> to vector<8x256xf32>
    %14 = arith.addf %11, %13 : vector<8x256xf32>
    %cst_12 = arith.constant 0.000000e+00 : f32
    %15 = vector.broadcast %cst_12 : f32 to vector<1x64xf32>
    %cst_13 = arith.constant 0.000000e+00 : f32
    %16 = vector.broadcast %cst_13 : f32 to vector<1x64xf32>
    %17 = vector.extract_strided_slice %14 {offsets = [0, 0], sizes = [1, 256], strides = [1, 1]} : vector<8x256xf32> to vector<1x256xf32>
    %18 = arith.truncf %15 : vector<1x64xf32> to vector<1x64xbf16>
    %c0_14 = arith.constant 0 : index
    %c0_15 = arith.constant 0 : index
    %19 = vector.load %arg5[%c0_14, %c0_15] : memref<64x256xbf16, #tpu.memory_space<vmem>>, vector<64x256xbf16>
    %cst_16 = arith.constant dense<0.000000e+00> : vector<1x256xf32>
    %20 = tpu.matmul %18, %19, %cst_16 {dimension_numbers = #tpu.dot_dimension_numbers<[1], [0], [0], [1], [0, 0, 1, 1], [], []>} : vector<1x64xbf16>, vector<64x256xbf16>, vector<1x256xf32> -> vector<1x256xf32>
    %21 = arith.addf %17, %20 : vector<1x256xf32>
    %22 = vector.extract_strided_slice %21 {offsets = [0, 0], sizes = [1, 128], strides = [1, 1]} : vector<1x256xf32> to vector<1x128xf32>
    %23 = arith.negf %22 : vector<1x128xf32>
    %24 = math.exp %23 : vector<1x128xf32>
    %cst_17 = arith.constant 1.000000e+00 : f32
    %25 = vector.broadcast %cst_17 : f32 to vector<1x128xf32>
    %26 = arith.addf %25, %24 : vector<1x128xf32>
    %27 = arith.divf %25, %26 : vector<1x128xf32>
    %28 = vector.extract_strided_slice %27 {offsets = [0, 0], sizes = [1, 64], strides = [1, 1]} : vector<1x128xf32> to vector<1x64xf32>
    %29 = vector.extract_strided_slice %27 {offsets = [0, 64], sizes = [1, 64], strides = [1, 1]} : vector<1x128xf32> to vector<1x64xf32>
    %30 = vector.extract_strided_slice %21 {offsets = [0, 128], sizes = [1, 64], strides = [1, 1]} : vector<1x256xf32> to vector<1x64xf32>
    %31 = math.tanh %30 : vector<1x64xf32>
    %32 = vector.extract_strided_slice %21 {offsets = [0, 192], sizes = [1, 64], strides = [1, 1]} : vector<1x256xf32> to vector<1x64xf32>
    %33 = arith.negf %32 : vector<1x64xf32>
    %34 = math.exp %33 : vector<1x64xf32>
    %cst_18 = arith.constant 1.000000e+00 : f32
    %35 = vector.broadcast %cst_18 : f32 to vector<1x64xf32>
    %36 = arith.addf %35, %34 : vector<1x64xf32>
    %37 = arith.divf %35, %36 : vector<1x64xf32>
    %38 = arith.mulf %29, %16 : vector<1x64xf32>
    %39 = arith.mulf %28, %31 : vector<1x64xf32>
    %40 = arith.addf %38, %39 : vector<1x64xf32>
    %41 = math.tanh %40 : vector<1x64xf32>
    %42 = arith.mulf %37, %41 : vector<1x64xf32>
    %43 = vector.extract_strided_slice %14 {offsets = [1, 0], sizes = [1, 256], strides = [1, 1]} : vector<8x256xf32> to vector<1x256xf32>
    %44 = arith.truncf %42 : vector<1x64xf32> to vector<1x64xbf16>
    %c0_19 = arith.constant 0 : index
    %c0_20 = arith.constant 0 : index
    %45 = vector.load %arg5[%c0_19, %c0_20] : memref<64x256xbf16, #tpu.memory_space<vmem>>, vector<64x256xbf16>
    %cst_21 = arith.constant dense<0.000000e+00> : vector<1x256xf32>
    %46 = tpu.matmul %44, %45, %cst_21 {dimension_numbers = #tpu.dot_dimension_numbers<[1], [0], [0], [1], [0, 0, 1, 1], [], []>} : vector<1x64xbf16>, vector<64x256xbf16>, vector<1x256xf32> -> vector<1x256xf32>
    %47 = arith.addf %43, %46 : vector<1x256xf32>
    %48 = vector.extract_strided_slice %47 {offsets = [0, 0], sizes = [1, 128], strides = [1, 1]} : vector<1x256xf32> to vector<1x128xf32>
    %49 = arith.negf %48 : vector<1x128xf32>
    %50 = math.exp %49 : vector<1x128xf32>
    %cst_22 = arith.constant 1.000000e+00 : f32
    %51 = vector.broadcast %cst_22 : f32 to vector<1x128xf32>
    %52 = arith.addf %51, %50 : vector<1x128xf32>
    %53 = arith.divf %51, %52 : vector<1x128xf32>
    %54 = vector.extract_strided_slice %53 {offsets = [0, 0], sizes = [1, 64], strides = [1, 1]} : vector<1x128xf32> to vector<1x64xf32>
    %55 = vector.extract_strided_slice %53 {offsets = [0, 64], sizes = [1, 64], strides = [1, 1]} : vector<1x128xf32> to vector<1x64xf32>
    %56 = vector.extract_strided_slice %47 {offsets = [0, 128], sizes = [1, 64], strides = [1, 1]} : vector<1x256xf32> to vector<1x64xf32>
    %57 = math.tanh %56 : vector<1x64xf32>
    %58 = vector.extract_strided_slice %47 {offsets = [0, 192], sizes = [1, 64], strides = [1, 1]} : vector<1x256xf32> to vector<1x64xf32>
    %59 = arith.negf %58 : vector<1x64xf32>
    %60 = math.exp %59 : vector<1x64xf32>
    %cst_23 = arith.constant 1.000000e+00 : f32
    %61 = vector.broadcast %cst_23 : f32 to vector<1x64xf32>
    %62 = arith.addf %61, %60 : vector<1x64xf32>
    %63 = arith.divf %61, %62 : vector<1x64xf32>
    %64 = arith.mulf %55, %40 : vector<1x64xf32>
    %65 = arith.mulf %54, %57 : vector<1x64xf32>
    %66 = arith.addf %64, %65 : vector<1x64xf32>
    %67 = math.tanh %66 : vector<1x64xf32>
    %68 = arith.mulf %63, %67 : vector<1x64xf32>
    %69 = vector.extract_strided_slice %14 {offsets = [2, 0], sizes = [1, 256], strides = [1, 1]} : vector<8x256xf32> to vector<1x256xf32>
    %70 = arith.truncf %68 : vector<1x64xf32> to vector<1x64xbf16>
    %c0_24 = arith.constant 0 : index
    %c0_25 = arith.constant 0 : index
    %71 = vector.load %arg5[%c0_24, %c0_25] : memref<64x256xbf16, #tpu.memory_space<vmem>>, vector<64x256xbf16>
    %cst_26 = arith.constant dense<0.000000e+00> : vector<1x256xf32>
    %72 = tpu.matmul %70, %71, %cst_26 {dimension_numbers = #tpu.dot_dimension_numbers<[1], [0], [0], [1], [0, 0, 1, 1], [], []>} : vector<1x64xbf16>, vector<64x256xbf16>, vector<1x256xf32> -> vector<1x256xf32>
    %73 = arith.addf %69, %72 : vector<1x256xf32>
    %74 = vector.extract_strided_slice %73 {offsets = [0, 0], sizes = [1, 128], strides = [1, 1]} : vector<1x256xf32> to vector<1x128xf32>
    %75 = arith.negf %74 : vector<1x128xf32>
    %76 = math.exp %75 : vector<1x128xf32>
    %cst_27 = arith.constant 1.000000e+00 : f32
    %77 = vector.broadcast %cst_27 : f32 to vector<1x128xf32>
    %78 = arith.addf %77, %76 : vector<1x128xf32>
    %79 = arith.divf %77, %78 : vector<1x128xf32>
    %80 = vector.extract_strided_slice %79 {offsets = [0, 0], sizes = [1, 64], strides = [1, 1]} : vector<1x128xf32> to vector<1x64xf32>
    %81 = vector.extract_strided_slice %79 {offsets = [0, 64], sizes = [1, 64], strides = [1, 1]} : vector<1x128xf32> to vector<1x64xf32>
    %82 = vector.extract_strided_slice %73 {offsets = [0, 128], sizes = [1, 64], strides = [1, 1]} : vector<1x256xf32> to vector<1x64xf32>
    %83 = math.tanh %82 : vector<1x64xf32>
    %84 = vector.extract_strided_slice %73 {offsets = [0, 192], sizes = [1, 64], strides = [1, 1]} : vector<1x256xf32> to vector<1x64xf32>
    %85 = arith.negf %84 : vector<1x64xf32>
    %86 = math.exp %85 : vector<1x64xf32>
    %cst_28 = arith.constant 1.000000e+00 : f32
    %87 = vector.broadcast %cst_28 : f32 to vector<1x64xf32>
    %88 = arith.addf %87, %86 : vector<1x64xf32>
    %89 = arith.divf %87, %88 : vector<1x64xf32>
    %90 = arith.mulf %81, %66 : vector<1x64xf32>
    %91 = arith.mulf %80, %83 : vector<1x64xf32>
    %92 = arith.addf %90, %91 : vector<1x64xf32>
    %93 = math.tanh %92 : vector<1x64xf32>
    %94 = arith.mulf %89, %93 : vector<1x64xf32>
    %95 = vector.extract_strided_slice %14 {offsets = [3, 0], sizes = [1, 256], strides = [1, 1]} : vector<8x256xf32> to vector<1x256xf32>
    %96 = arith.truncf %94 : vector<1x64xf32> to vector<1x64xbf16>
    %c0_29 = arith.constant 0 : index
    %c0_30 = arith.constant 0 : index
    %97 = vector.load %arg5[%c0_29, %c0_30] : memref<64x256xbf16, #tpu.memory_space<vmem>>, vector<64x256xbf16>
    %cst_31 = arith.constant dense<0.000000e+00> : vector<1x256xf32>
    %98 = tpu.matmul %96, %97, %cst_31 {dimension_numbers = #tpu.dot_dimension_numbers<[1], [0], [0], [1], [0, 0, 1, 1], [], []>} : vector<1x64xbf16>, vector<64x256xbf16>, vector<1x256xf32> -> vector<1x256xf32>
    %99 = arith.addf %95, %98 : vector<1x256xf32>
    %100 = vector.extract_strided_slice %99 {offsets = [0, 0], sizes = [1, 128], strides = [1, 1]} : vector<1x256xf32> to vector<1x128xf32>
    %101 = arith.negf %100 : vector<1x128xf32>
    %102 = math.exp %101 : vector<1x128xf32>
    %cst_32 = arith.constant 1.000000e+00 : f32
    %103 = vector.broadcast %cst_32 : f32 to vector<1x128xf32>
    %104 = arith.addf %103, %102 : vector<1x128xf32>
    %105 = arith.divf %103, %104 : vector<1x128xf32>
    %106 = vector.extract_strided_slice %105 {offsets = [0, 0], sizes = [1, 64], strides = [1, 1]} : vector<1x128xf32> to vector<1x64xf32>
    %107 = vector.extract_strided_slice %105 {offsets = [0, 64], sizes = [1, 64], strides = [1, 1]} : vector<1x128xf32> to vector<1x64xf32>
    %108 = vector.extract_strided_slice %99 {offsets = [0, 128], sizes = [1, 64], strides = [1, 1]} : vector<1x256xf32> to vector<1x64xf32>
    %109 = math.tanh %108 : vector<1x64xf32>
    %110 = vector.extract_strided_slice %99 {offsets = [0, 192], sizes = [1, 64], strides = [1, 1]} : vector<1x256xf32> to vector<1x64xf32>
    %111 = arith.negf %110 : vector<1x64xf32>
    %112 = math.exp %111 : vector<1x64xf32>
    %cst_33 = arith.constant 1.000000e+00 : f32
    %113 = vector.broadcast %cst_33 : f32 to vector<1x64xf32>
    %114 = arith.addf %113, %112 : vector<1x64xf32>
    %115 = arith.divf %113, %114 : vector<1x64xf32>
    %116 = arith.mulf %107, %92 : vector<1x64xf32>
    %117 = arith.mulf %106, %109 : vector<1x64xf32>
    %118 = arith.addf %116, %117 : vector<1x64xf32>
    %119 = math.tanh %118 : vector<1x64xf32>
    %120 = arith.mulf %115, %119 : vector<1x64xf32>
    %121 = vector.extract_strided_slice %14 {offsets = [4, 0], sizes = [1, 256], strides = [1, 1]} : vector<8x256xf32> to vector<1x256xf32>
    %122 = arith.truncf %120 : vector<1x64xf32> to vector<1x64xbf16>
    %c0_34 = arith.constant 0 : index
    %c0_35 = arith.constant 0 : index
    %123 = vector.load %arg5[%c0_34, %c0_35] : memref<64x256xbf16, #tpu.memory_space<vmem>>, vector<64x256xbf16>
    %cst_36 = arith.constant dense<0.000000e+00> : vector<1x256xf32>
    %124 = tpu.matmul %122, %123, %cst_36 {dimension_numbers = #tpu.dot_dimension_numbers<[1], [0], [0], [1], [0, 0, 1, 1], [], []>} : vector<1x64xbf16>, vector<64x256xbf16>, vector<1x256xf32> -> vector<1x256xf32>
    %125 = arith.addf %121, %124 : vector<1x256xf32>
    %126 = vector.extract_strided_slice %125 {offsets = [0, 0], sizes = [1, 128], strides = [1, 1]} : vector<1x256xf32> to vector<1x128xf32>
    %127 = arith.negf %126 : vector<1x128xf32>
    %128 = math.exp %127 : vector<1x128xf32>
    %cst_37 = arith.constant 1.000000e+00 : f32
    %129 = vector.broadcast %cst_37 : f32 to vector<1x128xf32>
    %130 = arith.addf %129, %128 : vector<1x128xf32>
    %131 = arith.divf %129, %130 : vector<1x128xf32>
    %132 = vector.extract_strided_slice %131 {offsets = [0, 0], sizes = [1, 64], strides = [1, 1]} : vector<1x128xf32> to vector<1x64xf32>
    %133 = vector.extract_strided_slice %131 {offsets = [0, 64], sizes = [1, 64], strides = [1, 1]} : vector<1x128xf32> to vector<1x64xf32>
    %134 = vector.extract_strided_slice %125 {offsets = [0, 128], sizes = [1, 64], strides = [1, 1]} : vector<1x256xf32> to vector<1x64xf32>
    %135 = math.tanh %134 : vector<1x64xf32>
    %136 = vector.extract_strided_slice %125 {offsets = [0, 192], sizes = [1, 64], strides = [1, 1]} : vector<1x256xf32> to vector<1x64xf32>
    %137 = arith.negf %136 : vector<1x64xf32>
    %138 = math.exp %137 : vector<1x64xf32>
    %cst_38 = arith.constant 1.000000e+00 : f32
    %139 = vector.broadcast %cst_38 : f32 to vector<1x64xf32>
    %140 = arith.addf %139, %138 : vector<1x64xf32>
    %141 = arith.divf %139, %140 : vector<1x64xf32>
    %142 = arith.mulf %133, %118 : vector<1x64xf32>
    %143 = arith.mulf %132, %135 : vector<1x64xf32>
    %144 = arith.addf %142, %143 : vector<1x64xf32>
    %145 = math.tanh %144 : vector<1x64xf32>
    %146 = arith.mulf %141, %145 : vector<1x64xf32>
    %147 = vector.extract_strided_slice %14 {offsets = [5, 0], sizes = [1, 256], strides = [1, 1]} : vector<8x256xf32> to vector<1x256xf32>
    %148 = arith.truncf %146 : vector<1x64xf32> to vector<1x64xbf16>
    %c0_39 = arith.constant 0 : index
    %c0_40 = arith.constant 0 : index
    %149 = vector.load %arg5[%c0_39, %c0_40] : memref<64x256xbf16, #tpu.memory_space<vmem>>, vector<64x256xbf16>
    %cst_41 = arith.constant dense<0.000000e+00> : vector<1x256xf32>
    %150 = tpu.matmul %148, %149, %cst_41 {dimension_numbers = #tpu.dot_dimension_numbers<[1], [0], [0], [1], [0, 0, 1, 1], [], []>} : vector<1x64xbf16>, vector<64x256xbf16>, vector<1x256xf32> -> vector<1x256xf32>
    %151 = arith.addf %147, %150 : vector<1x256xf32>
    %152 = vector.extract_strided_slice %151 {offsets = [0, 0], sizes = [1, 128], strides = [1, 1]} : vector<1x256xf32> to vector<1x128xf32>
    %153 = arith.negf %152 : vector<1x128xf32>
    %154 = math.exp %153 : vector<1x128xf32>
    %cst_42 = arith.constant 1.000000e+00 : f32
    %155 = vector.broadcast %cst_42 : f32 to vector<1x128xf32>
    %156 = arith.addf %155, %154 : vector<1x128xf32>
    %157 = arith.divf %155, %156 : vector<1x128xf32>
    %158 = vector.extract_strided_slice %157 {offsets = [0, 0], sizes = [1, 64], strides = [1, 1]} : vector<1x128xf32> to vector<1x64xf32>
    %159 = vector.extract_strided_slice %157 {offsets = [0, 64], sizes = [1, 64], strides = [1, 1]} : vector<1x128xf32> to vector<1x64xf32>
    %160 = vector.extract_strided_slice %151 {offsets = [0, 128], sizes = [1, 64], strides = [1, 1]} : vector<1x256xf32> to vector<1x64xf32>
    %161 = math.tanh %160 : vector<1x64xf32>
    %162 = vector.extract_strided_slice %151 {offsets = [0, 192], sizes = [1, 64], strides = [1, 1]} : vector<1x256xf32> to vector<1x64xf32>
    %163 = arith.negf %162 : vector<1x64xf32>
    %164 = math.exp %163 : vector<1x64xf32>
    %cst_43 = arith.constant 1.000000e+00 : f32
    %165 = vector.broadcast %cst_43 : f32 to vector<1x64xf32>
    %166 = arith.addf %165, %164 : vector<1x64xf32>
    %167 = arith.divf %165, %166 : vector<1x64xf32>
    %168 = arith.mulf %159, %144 : vector<1x64xf32>
    %169 = arith.mulf %158, %161 : vector<1x64xf32>
    %170 = arith.addf %168, %169 : vector<1x64xf32>
    %171 = math.tanh %170 : vector<1x64xf32>
    %172 = arith.mulf %167, %171 : vector<1x64xf32>
    %173 = vector.extract_strided_slice %14 {offsets = [6, 0], sizes = [1, 256], strides = [1, 1]} : vector<8x256xf32> to vector<1x256xf32>
    %174 = arith.truncf %172 : vector<1x64xf32> to vector<1x64xbf16>
    %c0_44 = arith.constant 0 : index
    %c0_45 = arith.constant 0 : index
    %175 = vector.load %arg5[%c0_44, %c0_45] : memref<64x256xbf16, #tpu.memory_space<vmem>>, vector<64x256xbf16>
    %cst_46 = arith.constant dense<0.000000e+00> : vector<1x256xf32>
    %176 = tpu.matmul %174, %175, %cst_46 {dimension_numbers = #tpu.dot_dimension_numbers<[1], [0], [0], [1], [0, 0, 1, 1], [], []>} : vector<1x64xbf16>, vector<64x256xbf16>, vector<1x256xf32> -> vector<1x256xf32>
    %177 = arith.addf %173, %176 : vector<1x256xf32>
    %178 = vector.extract_strided_slice %177 {offsets = [0, 0], sizes = [1, 128], strides = [1, 1]} : vector<1x256xf32> to vector<1x128xf32>
    %179 = arith.negf %178 : vector<1x128xf32>
    %180 = math.exp %179 : vector<1x128xf32>
    %cst_47 = arith.constant 1.000000e+00 : f32
    %181 = vector.broadcast %cst_47 : f32 to vector<1x128xf32>
    %182 = arith.addf %181, %180 : vector<1x128xf32>
    %183 = arith.divf %181, %182 : vector<1x128xf32>
    %184 = vector.extract_strided_slice %183 {offsets = [0, 0], sizes = [1, 64], strides = [1, 1]} : vector<1x128xf32> to vector<1x64xf32>
    %185 = vector.extract_strided_slice %183 {offsets = [0, 64], sizes = [1, 64], strides = [1, 1]} : vector<1x128xf32> to vector<1x64xf32>
    %186 = vector.extract_strided_slice %177 {offsets = [0, 128], sizes = [1, 64], strides = [1, 1]} : vector<1x256xf32> to vector<1x64xf32>
    %187 = math.tanh %186 : vector<1x64xf32>
    %188 = vector.extract_strided_slice %177 {offsets = [0, 192], sizes = [1, 64], strides = [1, 1]} : vector<1x256xf32> to vector<1x64xf32>
    %189 = arith.negf %188 : vector<1x64xf32>
    %190 = math.exp %189 : vector<1x64xf32>
    %cst_48 = arith.constant 1.000000e+00 : f32
    %191 = vector.broadcast %cst_48 : f32 to vector<1x64xf32>
    %192 = arith.addf %191, %190 : vector<1x64xf32>
    %193 = arith.divf %191, %192 : vector<1x64xf32>
    %194 = arith.mulf %185, %170 : vector<1x64xf32>
    %195 = arith.mulf %184, %187 : vector<1x64xf32>
    %196 = arith.addf %194, %195 : vector<1x64xf32>
    %197 = math.tanh %196 : vector<1x64xf32>
    %198 = arith.mulf %193, %197 : vector<1x64xf32>
    %199 = vector.extract_strided_slice %14 {offsets = [7, 0], sizes = [1, 256], strides = [1, 1]} : vector<8x256xf32> to vector<1x256xf32>
    %200 = arith.truncf %198 : vector<1x64xf32> to vector<1x64xbf16>
    %c0_49 = arith.constant 0 : index
    %c0_50 = arith.constant 0 : index
    %201 = vector.load %arg5[%c0_49, %c0_50] : memref<64x256xbf16, #tpu.memory_space<vmem>>, vector<64x256xbf16>
    %cst_51 = arith.constant dense<0.000000e+00> : vector<1x256xf32>
    %202 = tpu.matmul %200, %201, %cst_51 {dimension_numbers = #tpu.dot_dimension_numbers<[1], [0], [0], [1], [0, 0, 1, 1], [], []>} : vector<1x64xbf16>, vector<64x256xbf16>, vector<1x256xf32> -> vector<1x256xf32>
    %203 = arith.addf %199, %202 : vector<1x256xf32>
    %204 = vector.extract_strided_slice %203 {offsets = [0, 0], sizes = [1, 128], strides = [1, 1]} : vector<1x256xf32> to vector<1x128xf32>
    %205 = arith.negf %204 : vector<1x128xf32>
    %206 = math.exp %205 : vector<1x128xf32>
    %cst_52 = arith.constant 1.000000e+00 : f32
    %207 = vector.broadcast %cst_52 : f32 to vector<1x128xf32>
    %208 = arith.addf %207, %206 : vector<1x128xf32>
    %209 = arith.divf %207, %208 : vector<1x128xf32>
    %210 = vector.extract_strided_slice %209 {offsets = [0, 0], sizes = [1, 64], strides = [1, 1]} : vector<1x128xf32> to vector<1x64xf32>
    %211 = vector.extract_strided_slice %209 {offsets = [0, 64], sizes = [1, 64], strides = [1, 1]} : vector<1x128xf32> to vector<1x64xf32>
    %212 = vector.extract_strided_slice %203 {offsets = [0, 128], sizes = [1, 64], strides = [1, 1]} : vector<1x256xf32> to vector<1x64xf32>
    %213 = math.tanh %212 : vector<1x64xf32>
    %214 = vector.extract_strided_slice %203 {offsets = [0, 192], sizes = [1, 64], strides = [1, 1]} : vector<1x256xf32> to vector<1x64xf32>
    %215 = arith.negf %214 : vector<1x64xf32>
    %216 = math.exp %215 : vector<1x64xf32>
    %cst_53 = arith.constant 1.000000e+00 : f32
    %217 = vector.broadcast %cst_53 : f32 to vector<1x64xf32>
    %218 = arith.addf %217, %216 : vector<1x64xf32>
    %219 = arith.divf %217, %218 : vector<1x64xf32>
    %220 = arith.mulf %211, %196 : vector<1x64xf32>
    %221 = arith.mulf %210, %213 : vector<1x64xf32>
    %222 = arith.addf %220, %221 : vector<1x64xf32>
    %223 = math.tanh %222 : vector<1x64xf32>
    %224 = arith.mulf %219, %223 : vector<1x64xf32>
    %225 = arith.truncf %224 : vector<1x64xf32> to vector<1x64xbf16>
    %c0_54 = arith.constant 0 : index
    %c0_55 = arith.constant 0 : index
    %226 = vector.load %arg7[%c0_54, %c0_55] : memref<64x256xbf16, #tpu.memory_space<vmem>>, vector<64x256xbf16>
    %cst_56 = arith.constant dense<0.000000e+00> : vector<1x256xf32>
    %227 = tpu.matmul %225, %226, %cst_56 {dimension_numbers = #tpu.dot_dimension_numbers<[1], [0], [0], [1], [0, 0, 1, 1], [], []>} : vector<1x64xbf16>, vector<64x256xbf16>, vector<1x256xf32> -> vector<1x256xf32>
    %c0_57 = arith.constant 0 : index
    %c0_58 = arith.constant 0 : index
    %228 = vector.load %arg8[%c0_57, %c0_58] : memref<1x256xf32, #tpu.memory_space<vmem>>, vector<1x256xf32>
    %229 = arith.addf %227, %228 : vector<1x256xf32>
    %cst_59 = arith.constant 0.000000e+00 : f32
    %230 = vector.broadcast %cst_59 : f32 to vector<1x256xf32>
    %231 = arith.maximumf %229, %230 : vector<1x256xf32>
    %232 = arith.truncf %231 : vector<1x256xf32> to vector<1x256xbf16>
    %c0_60 = arith.constant 0 : index
    %c0_61 = arith.constant 0 : index
    %233 = vector.load %arg9[%c0_60, %c0_61] : memref<256x32xbf16, #tpu.memory_space<vmem>>, vector<256x32xbf16>
    %cst_62 = arith.constant dense<0.000000e+00> : vector<1x32xf32>
    %234 = tpu.matmul %232, %233, %cst_62 {dimension_numbers = #tpu.dot_dimension_numbers<[1], [0], [0], [1], [0, 0, 1, 1], [], []>} : vector<1x256xbf16>, vector<256x32xbf16>, vector<1x32xf32> -> vector<1x32xf32>
    %c0_63 = arith.constant 0 : index
    %c0_64 = arith.constant 0 : index
    %235 = vector.load %arg10[%c0_63, %c0_64] : memref<1x32xf32, #tpu.memory_space<vmem>>, vector<1x32xf32>
    %236 = arith.addf %234, %235 : vector<1x32xf32>
    %cst_65 = arith.constant 0.000000e+00 : f32
    %237 = vector.broadcast %cst_65 : f32 to vector<1x32xf32>
    %238 = arith.maximumf %236, %237 : vector<1x32xf32>
    %239 = arith.truncf %238 : vector<1x32xf32> to vector<1x32xbf16>
    %c0_66 = arith.constant 0 : index
    %c0_67 = arith.constant 0 : index
    %240 = vector.load %arg11[%c0_66, %c0_67] : memref<32x2xbf16, #tpu.memory_space<vmem>>, vector<32x2xbf16>
    %cst_68 = arith.constant dense<0.000000e+00> : vector<1x2xf32>
    %241 = tpu.matmul %239, %240, %cst_68 {dimension_numbers = #tpu.dot_dimension_numbers<[1], [0], [0], [1], [0, 0, 1, 1], [], []>} : vector<1x32xbf16>, vector<32x2xbf16>, vector<1x2xf32> -> vector<1x2xf32>
    %c0_69 = arith.constant 0 : index
    %c0_70 = arith.constant 0 : index
    %242 = vector.load %arg12[%c0_69, %c0_70] : memref<1x2xf32, #tpu.memory_space<vmem>>, vector<1x2xf32>
    %243 = arith.addf %241, %242 : vector<1x2xf32>
    %c0_71 = arith.constant 0 : index
    %c0_72 = arith.constant 0 : index
    %c0_73 = arith.constant 0 : index
    %244 = vector.load %arg13[%c0_71, %c0_72, %c0_73] : memref<1x1x2xf32, #tpu.memory_space<vmem>>, vector<1x1x2xf32>
    %245 = vector.shape_cast %244 : vector<1x1x2xf32> to vector<1x2xf32>
    %246 = vector.shape_cast %243 : vector<1x2xf32> to vector<1x1x2xf32>
    tpu.vector_store %arg13[%c0_71, %c0_72, %c0_73], %246 {strides = array<i32>} : memref<1x1x2xf32, #tpu.memory_space<vmem>>, vector<1x1x2xf32>,
    return
  }
  func.func @transform_0(%arg0: i32) -> (i32, i32, i32) {
    %c0_i32 = arith.constant 0 : i32
    %c0_i32_0 = arith.constant 0 : i32
    %c0_i32_1 = arith.constant 0 : i32
    return %arg0, %c0_i32, %c0_i32_0 : i32, i32, i32
  }
  func.func @transform_1(%arg0: i32) -> (i32, i32) {
    %c0_i32 = arith.constant 0 : i32
    %c0_i32_0 = arith.constant 0 : i32
    %c0_i32_1 = arith.constant 0 : i32
    return %c0_i32, %c0_i32_0 : i32, i32
  }
  func.func @transform_2(%arg0: i32) -> (i32, i32) {
    %c0_i32 = arith.constant 0 : i32
    %c0_i32_0 = arith.constant 0 : i32
    %c0_i32_1 = arith.constant 0 : i32
    return %c0_i32, %c0_i32_0 : i32, i32
  }
  func.func @transform_3(%arg0: i32) -> (i32, i32) {
    %c0_i32 = arith.constant 0 : i32
    %c0_i32_0 = arith.constant 0 : i32
    %c0_i32_1 = arith.constant 0 : i32
    return %c0_i32, %c0_i32_0 : i32, i32
  }
  func.func @transform_4(%arg0: i32) -> (i32, i32) {
    %c0_i32 = arith.constant 0 : i32
    %c0_i32_0 = arith.constant 0 : i32
    %c0_i32_1 = arith.constant 0 : i32
    return %c0_i32, %c0_i32_0 : i32, i32
  }
  func.func @transform_5(%arg0: i32) -> (i32, i32) {
    %c0_i32 = arith.constant 0 : i32
    %c0_i32_0 = arith.constant 0 : i32
    %c0_i32_1 = arith.constant 0 : i32
    return %c0_i32, %c0_i32_0 : i32, i32
  }
  func.func @transform_6(%arg0: i32) -> (i32, i32) {
    %c0_i32 = arith.constant 0 : i32
    %c0_i32_0 = arith.constant 0 : i32
    %c0_i32_1 = arith.constant 0 : i32
    return %c0_i32, %c0_i32_0 : i32, i32
  }
  func.func @transform_7(%arg0: i32) -> (i32, i32) {
    %c0_i32 = arith.constant 0 : i32
    %c0_i32_0 = arith.constant 0 : i32
    %c0_i32_1 = arith.constant 0 : i32
    return %c0_i32, %c0_i32_0 : i32, i32
  }
  func.func @transform_8(%arg0: i32) -> (i32, i32) {
    %c0_i32 = arith.constant 0 : i32
    %c0_i32_0 = arith.constant 0 : i32
    %c0_i32_1 = arith.constant 0 : i32
    return %c0_i32, %c0_i32_0 : i32, i32
  }
  func.func @transform_9(%arg0: i32) -> (i32, i32) {
    %c0_i32 = arith.constant 0 : i32
    %c0_i32_0 = arith.constant 0 : i32
    %c0_i32_1 = arith.constant 0 : i32
    return %c0_i32, %c0_i32_0 : i32, i32
  }
  func.func @transform_10(%arg0: i32) -> (i32, i32) {
    %c0_i32 = arith.constant 0 : i32
    %c0_i32_0 = arith.constant 0 : i32
    %c0_i32_1 = arith.constant 0 : i32
    return %c0_i32, %c0_i32_0 : i32, i32
  }
  func.func @transform_11(%arg0: i32) -> (i32, i32) {
    %c0_i32 = arith.constant 0 : i32
    %c0_i32_0 = arith.constant 0 : i32
    %c0_i32_1 = arith.constant 0 : i32
    return %c0_i32, %c0_i32_0 : i32, i32
  }
  func.func @transform_12(%arg0: i32) -> (i32, i32, i32) {
    %c0_i32 = arith.constant 0 : i32
    %c0_i32_0 = arith.constant 0 : i32
    %c0_i32_1 = arith.constant 0 : i32
    return %arg0, %c0_i32, %c0_i32_0 : i32, i32, i32
  }
}

</mosaic_0001>

<llo_original>
// kernel: neural_classifier_forward.1
$region0: #{neural_classifier_forward.1}
  #allocation0 [shape = 'u32[]', space=smem, size = 0x4, offset = 0x4, fixed_abs, tag = 'smem constant byte address 0x4 - core index']
  #allocation1 [shape = 'u32[72,128]{1,0:T(1,128)}', space=vmem, size = 0x9000, scoped, tag = 'internal scratch']
  %s0 = inlined_call_operand.vmem [shape: bf16[2,1216,9], index: 0, kind: input, shape index: {}]
  %s1 = inlined_call_operand.vmem [shape: bf16[9,64], index: 1, kind: input, shape index: {}]
  %s2 = inlined_call_operand.vmem [shape: f32[1,64], index: 2, kind: input, shape index: {}]
  %s3 = inlined_call_operand.vmem [shape: bf16[64,256], index: 3, kind: input, shape index: {}]
  %s4 = inlined_call_operand.vmem [shape: bf16[64,256], index: 4, kind: input, shape index: {}]
  %s5 = inlined_call_operand.vmem [shape: f32[1,256], index: 5, kind: input, shape index: {}]
  %s6 = inlined_call_operand.vmem [shape: bf16[64,256], index: 6, kind: input, shape index: {}]
  %s7 = inlined_call_operand.vmem [shape: f32[1,256], index: 7, kind: input, shape index: {}]
  %s8 = inlined_call_operand.vmem [shape: bf16[256,32], index: 8, kind: input, shape index: {}]
  %s9 = inlined_call_operand.vmem [shape: f32[1,32], index: 9, kind: input, shape index: {}]
  %s10 = inlined_call_operand.vmem [shape: bf16[32,2], index: 10, kind: input, shape index: {}]
  %s11 = inlined_call_operand.vmem [shape: f32[1,2], index: 11, kind: input, shape index: {}]
  %s12 = inlined_call_operand.hbm [shape: f32[2,1,2], index: 12, kind: output, shape index: {}]
  %s13 = sld [smem:[#allocation0]]
  $region81: #{neural_classifier_forward.1} parent=0
    _
  %s15 = ssub.s32 1, %s13
  %s16 = scalar_select 0, %s15, %s13
  $region1: #{neural_classifier_forward.1} parent=0
    #allocation2 [shape = 'u8[1024]{0}', space=vmem, size = 0x400, scoped, tag = 'output window, operand 0']
    #allocation3 [shape = 's32[2]{0}', space=sflag, size = 0x8, scoped, tag = 'scoped memory for neural_classifier_forward.1']
    %17 = vsyncpa [#allocation3], 0
    %s18 = scalar_lea.sflag [#allocation3], 1
    %19 = vsyncpa %s18, 0
    loop: start=0, step=1, limit=4
    $region2: #{neural_classifier_forward.1} parent=1 // loop_pre_header
      _
    $region3: #{neural_classifier_forward.1} parent=1 // loop_header
      %s21 = sphi 0, %s25
      %p22 = scmp.ge.s32.totalorder %s21, 4
      %s31 = sphi 0, %s33
      %s34 = sphi 0, %s31
      %s35 = sphi 0, %s34
      %s51 = sphi 0, %s35
      %s55 = sphi 0, %s55
      %s57 = sphi 0, %s55
      %s58 = sphi 0, %s57
      %s72 = sphi 0, %s58
      %s76 = sphi 0, %s76
      %s78 = sphi 0, %s76
      %s79 = sphi 0, %s78
      %s93 = sphi 0, %s79
      %s97 = sphi 0, %s97
      %s99 = sphi 0, %s97
      %s100 = sphi 0, %s99
      %s114 = sphi 0, %s100
      %s118 = sphi 0, %s118
      %s120 = sphi 0, %s118
      %s121 = sphi 0, %s120
      %s135 = sphi 0, %s121
      %s139 = sphi 0, %s139
      %s141 = sphi 0, %s139
      %s142 = sphi 0, %s141
      %s156 = sphi 0, %s142
      %s160 = sphi 0, %s160
      %s162 = sphi 0, %s160
      %s163 = sphi 0, %s162
      %s177 = sphi 0, %s163
      %s181 = sphi 0, %s181
      %s183 = sphi 0, %s181
      %s184 = sphi 0, %s183
      %s198 = sphi 0, %s184
      %s202 = sphi 0, %s202
      %s204 = sphi 0, %s202
      %s205 = sphi 0, %s204
      %s219 = sphi 0, %s205
      %s223 = sphi 0, %s223
      %s225 = sphi 0, %s223
      %s226 = sphi 0, %s225
      %s240 = sphi 0, %s226
      %s244 = sphi 0, %s244
      %s246 = sphi 0, %s244
      %s247 = sphi 0, %s246
      %s261 = sphi 0, %s247
      %s265 = sphi 0, %s265
      %s267 = sphi 0, %s265
      %s268 = sphi 0, %s267
      %s282 = sphi 0, %s268
      %s288 = sphi 0, %s290
      %s291 = sphi 0, %s288
      %s292 = sphi 0, %s291
      %s308 = sphi 0, %s292
    $region4: #{neural_classifier_forward.1} parent=1 // loop_header_branch
      %24 = sbr.rel (%p22) target = $region8
    $region5: #{neural_classifier_forward.1} parent=1 // loop_body
      %s26 = ssub.s32 %s21, 1
      %s27 = ssub.s32 %s21, 2
      %s28 = sadd.s32 %s21, 1
      %s29 = ssub.s32 %s21, %s28
      %p30 = scmp.eq.s32.totalorder %s29, 0
      %s32 = sadd.s32 %s31, 1
      %s33 = scalar_select %p30, %s31, %s32
      %p36 = pneg %p30
      %p37 = scmp.eq.s32.totalorder %s21, 1
      %p38 = por %p36, %p37
      %p39 = scmp.ne.s32.totalorder %s31, %s34
      %p40 = scmp.eq.s32.totalorder %s21, 0
      %p41 = por %p39, %p40
      %p42 = scmp.ne.s32.totalorder %s31, %s34
      %p43 = scmp.eq.s32.totalorder %s26, 1
      %p44 = por %p42, %p43
      %p45 = scmp.ne.s32.totalorder %s34, %s35
      %p46 = scmp.eq.s32.totalorder %s26, 0
      %p47 = por %p45, %p46
      %p48 = scmp.ne.s32.totalorder %s34, %s35
      %p49 = scmp.eq.s32.totalorder %s27, 1
      %p50 = por %p48, %p49
      %p52 = scmp.ne.s32.totalorder %s35, %s51
      %p53 = scmp.eq.s32.totalorder %s27, 0
      %p54 = por %p52, %p53
      %s56 = sadd.s32 %s55, 1
      %p59 = scmp.eq.s32.totalorder %s21, 1
      %p60 = scmp.ne.s32.totalorder %s55, %s57
      %p61 = scmp.eq.s32.totalorder %s21, 0
      %p62 = por %p60, %p61
      %p63 = scmp.ne.s32.totalorder %s55, %s57
      %p64 = scmp.eq.s32.totalorder %s26, 1
      %p65 = por %p63, %p64
      %p66 = scmp.ne.s32.totalorder %s57, %s58
      %p67 = scmp.eq.s32.totalorder %s26, 0
      %p68 = por %p66, %p67
      %p69 = scmp.ne.s32.totalorder %s57, %s58
      %p70 = scmp.eq.s32.totalorder %s27, 1
      %p71 = por %p69, %p70
      %p73 = scmp.ne.s32.totalorder %s58, %s72
      %p74 = scmp.eq.s32.totalorder %s27, 0
      %p75 = por %p73, %p74
      %s77 = sadd.s32 %s76, 1
      %p80 = scmp.eq.s32.totalorder %s21, 1
      %p81 = scmp.ne.s32.totalorder %s76, %s78
      %p82 = scmp.eq.s32.totalorder %s21, 0
      %p83 = por %p81, %p82
      %p84 = scmp.ne.s32.totalorder %s76, %s78
      %p85 = scmp.eq.s32.totalorder %s26, 1
      %p86 = por %p84, %p85
      %p87 = scmp.ne.s32.totalorder %s78, %s79
      %p88 = scmp.eq.s32.totalorder %s26, 0
      %p89 = por %p87, %p88
      %p90 = scmp.ne.s32.totalorder %s78, %s79
      %p91 = scmp.eq.s32.totalorder %s27, 1
      %p92 = por %p90, %p91
      %p94 = scmp.ne.s32.totalorder %s79, %s93
      %p95 = scmp.eq.s32.totalorder %s27, 0
      %p96 = por %p94, %p95
      %s98 = sadd.s32 %s97, 1
      %p101 = scmp.eq.s32.totalorder %s21, 1
      %p102 = scmp.ne.s32.totalorder %s97, %s99
      %p103 = scmp.eq.s32.totalorder %s21, 0
      %p104 = por %p102, %p103
      %p105 = scmp.ne.s32.totalorder %s97, %s99
      %p106 = scmp.eq.s32.totalorder %s26, 1
      %p107 = por %p105, %p106
      %p108 = scmp.ne.s32.totalorder %s99, %s100
      %p109 = scmp.eq.s32.totalorder %s26, 0
      %p110 = por %p108, %p109
      %p111 = scmp.ne.s32.totalorder %s99, %s100
      %p112 = scmp.eq.s32.totalorder %s27, 1
      %p113 = por %p111, %p112
      %p115 = scmp.ne.s32.totalorder %s100, %s114
      %p116 = scmp.eq.s32.totalorder %s27, 0
      %p117 = por %p115, %p116
      %s119 = sadd.s32 %s118, 1
      %p122 = scmp.eq.s32.totalorder %s21, 1
      %p123 = scmp.ne.s32.totalorder %s118, %s120
      %p124 = scmp.eq.s32.totalorder %s21, 0
      %p125 = por %p123, %p124
      %p126 = scmp.ne.s32.totalorder %s118, %s120
      %p127 = scmp.eq.s32.totalorder %s26, 1
      %p128 = por %p126, %p127
      %p129 = scmp.ne.s32.totalorder %s120, %s121
      %p130 = scmp.eq.s32.totalorder %s26, 0
      %p131 = por %p129, %p130
      %p132 = scmp.ne.s32.totalorder %s120, %s121
      %p133 = scmp.eq.s32.totalorder %s27, 1
      %p134 = por %p132, %p133
      %p136 = scmp.ne.s32.totalorder %s121, %s135
      %p137 = scmp.eq.s32.totalorder %s27, 0
      %p138 = por %p136, %p137
      %s140 = sadd.s32 %s139, 1
      %p143 = scmp.eq.s32.totalorder %s21, 1
      %p144 = scmp.ne.s32.totalorder %s139, %s141
      %p145 = scmp.eq.s32.totalorder %s21, 0
      %p146 = por %p144, %p145
      %p147 = scmp.ne.s32.totalorder %s139, %s141
      %p148 = scmp.eq.s32.totalorder %s26, 1
      %p149 = por %p147, %p148
      %p150 = scmp.ne.s32.totalorder %s141, %s142
      %p151 = scmp.eq.s32.totalorder %s26, 0
      %p152 = por %p150, %p151
      %p153 = scmp.ne.s32.totalorder %s141, %s142
      %p154 = scmp.eq.s32.totalorder %s27, 1
      %p155 = por %p153, %p154
      %p157 = scmp.ne.s32.totalorder %s142, %s156
      %p158 = scmp.eq.s32.totalorder %s27, 0
      %p159 = por %p157, %p158
      %s161 = sadd.s32 %s160, 1
      %p164 = scmp.eq.s32.totalorder %s21, 1
      %p165 = scmp.ne.s32.totalorder %s160, %s162
      %p166 = scmp.eq.s32.totalorder %s21, 0
      %p167 = por %p165, %p166
      %p168 = scmp.ne.s32.totalorder %s160, %s162
      %p169 = scmp.eq.s32.totalorder %s26, 1
      %p170 = por %p168, %p169
      %p171 = scmp.ne.s32.totalorder %s162, %s163
      %p172 = scmp.eq.s32.totalorder %s26, 0
      %p173 = por %p171, %p172
      %p174 = scmp.ne.s32.totalorder %s162, %s163
      %p175 = scmp.eq.s32.totalorder %s27, 1
      %p176 = por %p174, %p175
      %p178 = scmp.ne.s32.totalorder %s163, %s177
      %p179 = scmp.eq.s32.totalorder %s27, 0
      %p180 = por %p178, %p179
      %s182 = sadd.s32 %s181, 1
      %p185 = scmp.eq.s32.totalorder %s21, 1
      %p186 = scmp.ne.s32.totalorder %s181, %s183
      %p187 = scmp.eq.s32.totalorder %s21, 0
      %p188 = por %p186, %p187
      %p189 = scmp.ne.s32.totalorder %s181, %s183
      %p190 = scmp.eq.s32.totalorder %s26, 1
      %p191 = por %p189, %p190
      %p192 = scmp.ne.s32.totalorder %s183, %s184
      %p193 = scmp.eq.s32.totalorder %s26, 0
      %p194 = por %p192, %p193
      %p195 = scmp.ne.s32.totalorder %s183, %s184
      %p196 = scmp.eq.s32.totalorder %s27, 1
      %p197 = por %p195, %p196
      %p199 = scmp.ne.s32.totalorder %s184, %s198
      %p200 = scmp.eq.s32.totalorder %s27, 0
      %p201 = por %p199, %p200
      %s203 = sadd.s32 %s202, 1
      %p206 = scmp.eq.s32.totalorder %s21, 1
      %p207 = scmp.ne.s32.totalorder %s202, %s204
      %p208 = scmp.eq.s32.totalorder %s21, 0
      %p209 = por %p207, %p208
      %p210 = scmp.ne.s32.totalorder %s202, %s204
      %p211 = scmp.eq.s32.totalorder %s26, 1
      %p212 = por %p210, %p211
      %p213 = scmp.ne.s32.totalorder %s204, %s205
      %p214 = scmp.eq.s32.totalorder %s26, 0
      %p215 = por %p213, %p214
      %p216 = scmp.ne.s32.totalorder %s204, %s205
      %p217 = scmp.eq.s32.totalorder %s27, 1
      %p218 = por %p216, %p217
      %p220 = scmp.ne.s32.totalorder %s205, %s219
      %p221 = scmp.eq.s32.totalorder %s27, 0
      %p222 = por %p220, %p221
      %s224 = sadd.s32 %s223, 1
      %p227 = scmp.eq.s32.totalorder %s21, 1
      %p228 = scmp.ne.s32.totalorder %s223, %s225
      %p229 = scmp.eq.s32.totalorder %s21, 0
      %p230 = por %p228, %p229
      %p231 = scmp.ne.s32.totalorder %s223, %s225
      %p232 = scmp.eq.s32.totalorder %s26, 1
      %p233 = por %p231, %p232
      %p234 = scmp.ne.s32.totalorder %s225, %s226
      %p235 = scmp.eq.s32.totalorder %s26, 0
      %p236 = por %p234, %p235
      %p237 = scmp.ne.s32.totalorder %s225, %s226
      %p238 = scmp.eq.s32.totalorder %s27, 1
      %p239 = por %p237, %p238
      %p241 = scmp.ne.s32.totalorder %s226, %s240
      %p242 = scmp.eq.s32.totalorder %s27, 0
      %p243 = por %p241, %p242
      %s245 = sadd.s32 %s244, 1
      %p248 = scmp.eq.s32.totalorder %s21, 1
      %p249 = scmp.ne.s32.totalorder %s244, %s246
      %p250 = scmp.eq.s32.totalorder %s21, 0
      %p251 = por %p249, %p250
      %p252 = scmp.ne.s32.totalorder %s244, %s246
      %p253 = scmp.eq.s32.totalorder %s26, 1
      %p254 = por %p252, %p253
      %p255 = scmp.ne.s32.totalorder %s246, %s247
      %p256 = scmp.eq.s32.totalorder %s26, 0
      %p257 = por %p255, %p256
      %p258 = scmp.ne.s32.totalorder %s246, %s247
      %p259 = scmp.eq.s32.totalorder %s27, 1
      %p260 = por %p258, %p259
      %p262 = scmp.ne.s32.totalorder %s247, %s261
      %p263 = scmp.eq.s32.totalorder %s27, 0
      %p264 = por %p262, %p263
      %s266 = sadd.s32 %s265, 1
      %p269 = scmp.eq.s32.totalorder %s21, 1
      %p270 = scmp.ne.s32.totalorder %s265, %s267
      %p271 = scmp.eq.s32.totalorder %s21, 0
      %p272 = por %p270, %p271
      %p273 = scmp.ne.s32.totalorder %s265, %s267
      %p274 = scmp.eq.s32.totalorder %s26, 1
      %p275 = por %p273, %p274
      %p276 = scmp.ne.s32.totalorder %s267, %s268
      %p277 = scmp.eq.s32.totalorder %s26, 0
      %p278 = por %p276, %p277
      %p279 = scmp.ne.s32.totalorder %s267, %s268
      %p280 = scmp.eq.s32.totalorder %s27, 1
      %p281 = por %p279, %p280
      %p283 = scmp.ne.s32.totalorder %s268, %s282
      %p284 = scmp.eq.s32.totalorder %s27, 0
      %p285 = por %p283, %p284
      %s286 = ssub.s32 %s21, %s28
      %p287 = scmp.eq.s32.totalorder %s286, 0
      %s289 = sadd.s32 %s288, 1
      %s290 = scalar_select %p287, %s288, %s289
      %p293 = pneg %p287
      %p294 = scmp.eq.s32.totalorder %s21, 1
      %p295 = por %p293, %p294
      %p296 = scmp.ne.s32.totalorder %s288, %s291
      %p297 = scmp.eq.s32.totalorder %s21, 0
      %p298 = por %p296, %p297
      %p299 = scmp.ne.s32.totalorder %s288, %s291
      %p300 = scmp.eq.s32.totalorder %s26, 1
      %p301 = por %p299, %p300
      %p302 = scmp.ne.s32.totalorder %s291, %s292
      %p303 = scmp.eq.s32.totalorder %s26, 0
      %p304 = por %p302, %p303
      %p305 = scmp.ne.s32.totalorder %s291, %s292
      %p306 = scmp.eq.s32.totalorder %s27, 1
      %p307 = por %p305, %p306
      %p309 = scmp.ne.s32.totalorder %s292, %s308
      %p310 = scmp.eq.s32.totalorder %s27, 0
      %p311 = por %p309, %p310
      %p312 = scmp.le.s32.totalorder 1, %s21
      %p313 = scmp.lt.s32.totalorder %s21, 3
      %p314 = pnand %p312, %p313
      %p315 = pneg %p314
      // Predicated region
      $region9: #{neural_classifier_forward.1} parent=5 // pred_check
        _
      $region10: #{neural_classifier_forward.1} parent=5 // pred_check_branch
        %317 = sbr.rel (%p314) target = $region12
      $region11: #{neural_classifier_forward.1} parent=5 // pred_region
        %s318 = ssub.s32 %s21, 1
        // Predicated region
        $region13: #{neural_classifier_forward.1} parent=11 // pred_check
          %p319 = pneg %p68
        $region14: #{neural_classifier_forward.1} parent=11 // pred_check_branch
          %321 = sbr.rel (%p319) target = $region16
        $region15: #{neural_classifier_forward.1} parent=11 // pred_region
          _
        $region16: #{neural_classifier_forward.1} parent=11 // pred_fallthru
          _
        // Predicated region
        $region17: #{neural_classifier_forward.1} parent=11 // pred_check
          %p322 = pneg %p89
        $region18: #{neural_classifier_forward.1} parent=11 // pred_check_branch
          %324 = sbr.rel (%p322) target = $region20
        $region19: #{neural_classifier_forward.1} parent=11 // pred_region
          _
        $region20: #{neural_classifier_forward.1} parent=11 // pred_fallthru
          _
        // Predicated region
        $region21: #{neural_classifier_forward.1} parent=11 // pred_check
          %p325 = pneg %p110
        $region22: #{neural_classifier_forward.1} parent=11 // pred_check_branch
          %327 = sbr.rel (%p325) target = $region24
        $region23: #{neural_classifier_forward.1} parent=11 // pred_region
          _
        $region24: #{neural_classifier_forward.1} parent=11 // pred_fallthru
          _
        // Predicated region
        $region25: #{neural_classifier_forward.1} parent=11 // pred_check
          %p328 = pneg %p131
        $region26: #{neural_classifier_forward.1} parent=11 // pred_check_branch
          %330 = sbr.rel (%p328) target = $region28
        $region27: #{neural_classifier_forward.1} parent=11 // pred_region
          _
        $region28: #{neural_classifier_forward.1} parent=11 // pred_fallthru
          _
        // Predicated region
        $region29: #{neural_classifier_forward.1} parent=11 // pred_check
          %p331 = pneg %p152
        $region30: #{neural_classifier_forward.1} parent=11 // pred_check_branch
          %333 = sbr.rel (%p331) target = $region32
        $region31: #{neural_classifier_forward.1} parent=11 // pred_region
          _
        $region32: #{neural_classifier_forward.1} parent=11 // pred_fallthru
          _
        // Predicated region
        $region33: #{neural_classifier_forward.1} parent=11 // pred_check
          %p334 = pneg %p173
        $region34: #{neural_classifier_forward.1} parent=11 // pred_check_branch
          %336 = sbr.rel (%p334) target = $region36
        $region35: #{neural_classifier_forward.1} parent=11 // pred_region
          _
        $region36: #{neural_classifier_forward.1} parent=11 // pred_fallthru
          _
        // Predicated region
        $region37: #{neural_classifier_forward.1} parent=11 // pred_check
          %p337 = pneg %p194
        $region38: #{neural_classifier_forward.1} parent=11 // pred_check_branch
          %339 = sbr.rel (%p337) target = $region40
        $region39: #{neural_classifier_forward.1} parent=11 // pred_region
          _
        $region40: #{neural_classifier_forward.1} parent=11 // pred_fallthru
          _
        // Predicated region
        $region41: #{neural_classifier_forward.1} parent=11 // pred_check
          %p340 = pneg %p215
        $region42: #{neural_classifier_forward.1} parent=11 // pred_check_branch
          %342 = sbr.rel (%p340) target = $region44
        $region43: #{neural_classifier_forward.1} parent=11 // pred_region
          _
        $region44: #{neural_classifier_forward.1} parent=11 // pred_fallthru
          _
        // Predicated region
        $region45: #{neural_classifier_forward.1} parent=11 // pred_check
          %p343 = pneg %p236
        $region46: #{neural_classifier_forward.1} parent=11 // pred_check_branch
          %345 = sbr.rel (%p343) target = $region48
        $region47: #{neural_classifier_forward.1} parent=11 // pred_region
          _
        $region48: #{neural_classifier_forward.1} parent=11 // pred_fallthru
          _
        // Predicated region
        $region49: #{neural_classifier_forward.1} parent=11 // pred_check
          %p346 = pneg %p257
        $region50: #{neural_classifier_forward.1} parent=11 // pred_check_branch
          %348 = sbr.rel (%p346) target = $region52
        $region51: #{neural_classifier_forward.1} parent=11 // pred_region
          _
        $region52: #{neural_classifier_forward.1} parent=11 // pred_fallthru
          _
        // Predicated region
        $region53: #{neural_classifier_forward.1} parent=11 // pred_check
          %p349 = pneg %p278
        $region54: #{neural_classifier_forward.1} parent=11 // pred_check_branch
          %351 = sbr.rel (%p349) target = $region56
        $region55: #{neural_classifier_forward.1} parent=11 // pred_region
          _
        $region56: #{neural_classifier_forward.1} parent=11 // pred_fallthru
          _
      $region12: #{neural_classifier_forward.1} parent=5 // pred_fallthru
        _
      %p352 = scmp.lt.s32.totalorder %s21, 2
      // Predicated region
      $region57: #{neural_classifier_forward.1} parent=5 // pred_check
        %p353 = pneg %p352
      $region58: #{neural_classifier_forward.1} parent=5 // pred_check_branch
        %355 = sbr.rel (%p353) target = $region60
      $region59: #{neural_classifier_forward.1} parent=5 // pred_region
        // Predicated region
        $region61: #{neural_classifier_forward.1} parent=59 // pred_check
          %p356 = pneg %p41
        $region62: #{neural_classifier_forward.1} parent=59 // pred_check_branch
          %358 = sbr.rel (%p356) target = $region64
        $region63: #{neural_classifier_forward.1} parent=59 // pred_region
          %p359 = scmp.lt.s32.totalorder %s21, 1
          %s360 = scalar_select %p359, %s21, 1
          %s361 = smul.addr %s360, 152
          %s362 = smul.addr %s361, 4
          %s363 = scalar_lea.vmem %s0, %s362
        $region64: #{neural_classifier_forward.1} parent=59 // pred_fallthru
          _
      $region60: #{neural_classifier_forward.1} parent=5 // pred_fallthru
        _
      %p364 = scmp.le.s32.totalorder 1, %s21
      %p365 = scmp.lt.s32.totalorder %s21, 3
      %p366 = pnand %p364, %p365
      %p367 = pneg %p366
      // Predicated region
      $region65: #{neural_classifier_forward.1} parent=5 // pred_check
        _
      $region66: #{neural_classifier_forward.1} parent=5 // pred_check_branch
        %369 = sbr.rel (%p366) target = $region68
      $region67: #{neural_classifier_forward.1} parent=5 // pred_region
        %s370 = ssub.s32 %s21, 1
        %p371 = scmp.lt.s32.totalorder %s26, 1
        %s372 = scalar_select %p371, %s26, 1
        %s373 = smul.addr %s372, 152
        %s374 = smul.addr %s373, 4
        %s375 = scalar_lea.vmem %s0, %s374
        %p376 = pneg %p47
        %p377 = pneg %p44
        %p378 = pneg %p68
        %p379 = pneg %p65
        %p380 = pneg %p89
        %p381 = pneg %p86
        %p382 = pneg %p110
        %p383 = pneg %p107
        %p384 = pneg %p131
        %p385 = pneg %p128
        %p386 = pneg %p152
        %p387 = pneg %p149
        %p388 = pneg %p173
        %p389 = pneg %p170
        %p390 = pneg %p194
        %p391 = pneg %p191
        %p392 = pneg %p215
        %p393 = pneg %p212
        %p394 = pneg %p236
        %p395 = pneg %p233
        %p396 = pneg %p257
        %p397 = pneg %p254
        %p398 = pneg %p278
        %p399 = pneg %p275
        %p400 = pneg %p304
        %p401 = pneg %p301
        %s402 = sand.u32 %s291, 1
        %s403 = scalar_lea.sflag [#allocation3], %s402
        %s404 = sand.u32 %s291, 1
        %s405 = scalar_lea.vmem [#allocation2], %s404
        %p406 = scmp.lt.s32.totalorder %s26, 1
        %s407 = scalar_select %p406, %s26, 1
        %s408 = smul.addr %s407, 152
        %s409 = smul.addr %s408, 4
        %s410 = scalar_lea.vmem %s0, %s409
        %v412 = vld [vmem:[%s410] sm:$0xf]
        %v413 = vld [vmem:[%s410 + $0x4] sm:$0xf]
        %v414 = vld [vmem:[%s410 + $0x8] sm:$0xf]
        %v415 = vld [vmem:[%s410 + $0xc] sm:$0xf]
        %v416 = vld [vmem:[%s410 + $0x10] sm:$0xf]
        %v417 = vld [vmem:[%s410 + $0x14] sm:$0xf]
        %v418 = vld [vmem:[%s410 + $0x18] sm:$0xf]
        %v419 = vld [vmem:[%s410 + $0x1c] sm:$0xf]
        %v420 = vld [vmem:[%s410 + $0x20] sm:$0xf]
        %v421 = vld [vmem:[%s410 + $0x24] sm:$0xf]
        %v422 = vld [vmem:[%s410 + $0x28] sm:$0xf]
        %v423 = vld [vmem:[%s410 + $0x2c] sm:$0xf]
        %v424 = vld [vmem:[%s410 + $0x30] sm:$0xf]
        %v425 = vld [vmem:[%s410 + $0x34] sm:$0xf]
        %v426 = vld [vmem:[%s410 + $0x38] sm:$0xf]
        %v427 = vld [vmem:[%s410 + $0x3c] sm:$0xf]
        %v428 = vld [vmem:[%s410 + $0x40] sm:$0xf]
        %v429 = vld [vmem:[%s410 + $0x44] sm:$0xf]
        %v430 = vld [vmem:[%s410 + $0x48] sm:$0xf]
        %v431 = vld [vmem:[%s410 + $0x4c] sm:$0xf]
        %v432 = vld [vmem:[%s410 + $0x50] sm:$0xf]
        %v433 = vld [vmem:[%s410 + $0x54] sm:$0xf]
        %v434 = vld [vmem:[%s410 + $0x58] sm:$0xf]
        %v435 = vld [vmem:[%s410 + $0x5c] sm:$0xf]
        %v436 = vld [vmem:[%s410 + $0x60] sm:$0xf]
        %v437 = vld [vmem:[%s410 + $0x64] sm:$0xf]
        %v438 = vld [vmem:[%s410 + $0x68] sm:$0xf]
        %v439 = vld [vmem:[%s410 + $0x6c] sm:$0xf]
        %v440 = vld [vmem:[%s410 + $0x70] sm:$0xf]
        %v441 = vld [vmem:[%s410 + $0x74] sm:$0xf]
        %v442 = vld [vmem:[%s410 + $0x78] sm:$0xf]
        %v443 = vld [vmem:[%s410 + $0x7c] sm:$0xf]
        %v444 = vld [vmem:[%s410 + $0x80] sm:$0xf]
        %v445 = vld [vmem:[%s410 + $0x84] sm:$0xf]
        %v446 = vld [vmem:[%s410 + $0x88] sm:$0xf]
        %v447 = vld [vmem:[%s410 + $0x8c] sm:$0xf]
        %v448 = vld [vmem:[%s410 + $0x90] sm:$0xf]
        %v449 = vld [vmem:[%s410 + $0x94] sm:$0xf]
        %v450 = vld [vmem:[%s410 + $0x98] sm:$0xf]
        %v451 = vld [vmem:[%s410 + $0x9c] sm:$0xf]
        %v452 = vld [vmem:[%s410 + $0xa0] sm:$0xf]
        %v453 = vld [vmem:[%s410 + $0xa4] sm:$0xf]
        %v454 = vld [vmem:[%s410 + $0xa8] sm:$0xf]
        %v455 = vld [vmem:[%s410 + $0xac] sm:$0xf]
        %v456 = vld [vmem:[%s410 + $0xb0] sm:$0xf]
        %v457 = vld [vmem:[%s410 + $0xb4] sm:$0xf]
        %v458 = vld [vmem:[%s410 + $0xb8] sm:$0xf]
        %v459 = vld [vmem:[%s410 + $0xbc] sm:$0xf]
        %v460 = vld [vmem:[%s410 + $0xc0] sm:$0xf]
        %v461 = vld [vmem:[%s410 + $0xc4] sm:$0xf]
        %v462 = vld [vmem:[%s410 + $0xc8] sm:$0xf]
        %v463 = vld [vmem:[%s410 + $0xcc] sm:$0xf]
        %v464 = vld [vmem:[%s410 + $0xd0] sm:$0xf]
        %v465 = vld [vmem:[%s410 + $0xd4] sm:$0xf]
        %v466 = vld [vmem:[%s410 + $0xd8] sm:$0xf]
        %v467 = vld [vmem:[%s410 + $0xdc] sm:$0xf]
        %v468 = vld [vmem:[%s410 + $0xe0] sm:$0xf]
        %v469 = vld [vmem:[%s410 + $0xe4] sm:$0xf]
        %v470 = vld [vmem:[%s410 + $0xe8] sm:$0xf]
        %v471 = vld [vmem:[%s410 + $0xec] sm:$0xf]
        %v472 = vld [vmem:[%s410 + $0xf0] sm:$0xf]
        %v473 = vld [vmem:[%s410 + $0xf4] sm:$0xf]
        %v474 = vld [vmem:[%s410 + $0xf8] sm:$0xf]
        %v475 = vld [vmem:[%s410 + $0xfc] sm:$0xf]
        %v476 = vld [vmem:[%s410 + $0x100] sm:$0xf]
        %v477 = vld [vmem:[%s410 + $0x104] sm:$0xf]
        %v478 = vld [vmem:[%s410 + $0x108] sm:$0xf]
        %v479 = vld [vmem:[%s410 + $0x10c] sm:$0xf]
        %v480 = vld [vmem:[%s410 + $0x110] sm:$0xf]
        %v481 = vld [vmem:[%s410 + $0x114] sm:$0xf]
        %v482 = vld [vmem:[%s410 + $0x118] sm:$0xf]
        %v483 = vld [vmem:[%s410 + $0x11c] sm:$0xf]
        %v484 = vld [vmem:[%s410 + $0x120] sm:$0xf]
        %v485 = vld [vmem:[%s410 + $0x124] sm:$0xf]
        %v486 = vld [vmem:[%s410 + $0x128] sm:$0xf]
        %v487 = vld [vmem:[%s410 + $0x12c] sm:$0xf]
        %v488 = vld [vmem:[%s410 + $0x130] sm:$0xf]
        %v489 = vld [vmem:[%s410 + $0x134] sm:$0xf]
        %v490 = vld [vmem:[%s410 + $0x138] sm:$0xf]
        %v491 = vld [vmem:[%s410 + $0x13c] sm:$0xf]
        %v492 = vld [vmem:[%s410 + $0x140] sm:$0xf]
        %v493 = vld [vmem:[%s410 + $0x144] sm:$0xf]
        %v494 = vld [vmem:[%s410 + $0x148] sm:$0xf]
        %v495 = vld [vmem:[%s410 + $0x14c] sm:$0xf]
        %v496 = vld [vmem:[%s410 + $0x150] sm:$0xf]
        %v497 = vld [vmem:[%s410 + $0x154] sm:$0xf]
        %v498 = vld [vmem:[%s410 + $0x158] sm:$0xf]
        %v499 = vld [vmem:[%s410 + $0x15c] sm:$0xf]
        %v500 = vld [vmem:[%s410 + $0x160] sm:$0xf]
        %v501 = vld [vmem:[%s410 + $0x164] sm:$0xf]
        %v502 = vld [vmem:[%s410 + $0x168] sm:$0xf]
        %v503 = vld [vmem:[%s410 + $0x16c] sm:$0xf]
        %v504 = vld [vmem:[%s410 + $0x170] sm:$0xf]
        %v505 = vld [vmem:[%s410 + $0x174] sm:$0xf]
        %v506 = vld [vmem:[%s410 + $0x178] sm:$0xf]
        %v507 = vld [vmem:[%s410 + $0x17c] sm:$0xf]
        %v508 = vld [vmem:[%s410 + $0x180] sm:$0xf]
        %v509 = vld [vmem:[%s410 + $0x184] sm:$0xf]
        %v510 = vld [vmem:[%s410 + $0x188] sm:$0xf]
        %v511 = vld [vmem:[%s410 + $0x18c] sm:$0xf]
        %v512 = vld [vmem:[%s410 + $0x190] sm:$0xf]
        %v513 = vld [vmem:[%s410 + $0x194] sm:$0xf]
        %v514 = vld [vmem:[%s410 + $0x198] sm:$0xf]
        %v515 = vld [vmem:[%s410 + $0x19c] sm:$0xf]
        %v516 = vld [vmem:[%s410 + $0x1a0] sm:$0xf]
        %v517 = vld [vmem:[%s410 + $0x1a4] sm:$0xf]
        %v518 = vld [vmem:[%s410 + $0x1a8] sm:$0xf]
        %v519 = vld [vmem:[%s410 + $0x1ac] sm:$0xf]
        %v520 = vld [vmem:[%s410 + $0x1b0] sm:$0xf]
        %v521 = vld [vmem:[%s410 + $0x1b4] sm:$0xf]
        %v522 = vld [vmem:[%s410 + $0x1b8] sm:$0xf]
        %v523 = vld [vmem:[%s410 + $0x1bc] sm:$0xf]
        %v524 = vld [vmem:[%s410 + $0x1c0] sm:$0xf]
        %v525 = vld [vmem:[%s410 + $0x1c4] sm:$0xf]
        %v526 = vld [vmem:[%s410 + $0x1c8] sm:$0xf]
        %v527 = vld [vmem:[%s410 + $0x1cc] sm:$0xf]
        %v528 = vld [vmem:[%s410 + $0x1d0] sm:$0xf]
        %v529 = vld [vmem:[%s410 + $0x1d4] sm:$0xf]
        %v530 = vld [vmem:[%s410 + $0x1d8] sm:$0xf]
        %v531 = vld [vmem:[%s410 + $0x1dc] sm:$0xf]
        %v532 = vld [vmem:[%s410 + $0x1e0] sm:$0xf]
        %v533 = vld [vmem:[%s410 + $0x1e4] sm:$0xf]
        %v534 = vld [vmem:[%s410 + $0x1e8] sm:$0xf]
        %v535 = vld [vmem:[%s410 + $0x1ec] sm:$0xf]
        %v536 = vld [vmem:[%s410 + $0x1f0] sm:$0xf]
        %v537 = vld [vmem:[%s410 + $0x1f4] sm:$0xf]
        %v538 = vld [vmem:[%s410 + $0x1f8] sm:$0xf]
        %v539 = vld [vmem:[%s410 + $0x1fc] sm:$0xf]
        %v540 = vld [vmem:[%s410 + $0x200] sm:$0xf]
        %v541 = vld [vmem:[%s410 + $0x204] sm:$0xf]
        %v542 = vld [vmem:[%s410 + $0x208] sm:$0xf]
        %v543 = vld [vmem:[%s410 + $0x20c] sm:$0xf]
        %v544 = vld [vmem:[%s410 + $0x210] sm:$0xf]
        %v545 = vld [vmem:[%s410 + $0x214] sm:$0xf]
        %v546 = vld [vmem:[%s410 + $0x218] sm:$0xf]
        %v547 = vld [vmem:[%s410 + $0x21c] sm:$0xf]
        %v548 = vld [vmem:[%s410 + $0x220] sm:$0xf]
        %v549 = vld [vmem:[%s410 + $0x224] sm:$0xf]
        %v550 = vld [vmem:[%s410 + $0x228] sm:$0xf]
        %v551 = vld [vmem:[%s410 + $0x22c] sm:$0xf]
        %v552 = vld [vmem:[%s410 + $0x230] sm:$0xf]
        %v553 = vld [vmem:[%s410 + $0x234] sm:$0xf]
        %v554 = vld [vmem:[%s410 + $0x238] sm:$0xf]
        %v555 = vld [vmem:[%s410 + $0x23c] sm:$0xf]
        %v556 = vld [vmem:[%s410 + $0x240] sm:$0xf]
        %v557 = vld [vmem:[%s410 + $0x244] sm:$0xf]
        %v558 = vld [vmem:[%s410 + $0x248] sm:$0xf]
        %v559 = vld [vmem:[%s410 + $0x24c] sm:$0xf]
        %v560 = vld [vmem:[%s410 + $0x250] sm:$0xf]
        %v561 = vld [vmem:[%s410 + $0x254] sm:$0xf]
        %v562 = vld [vmem:[%s410 + $0x258] sm:$0xf]
        %v563 = vld [vmem:[%s410 + $0x25c] sm:$0xf]
        %v564 = vld [vmem:[%s1] sm:$0xf]
        %v565 = vld [vmem:[%s1 + $0x4] sm:$0x1]
        %v718 = vunpack.c.l.b16 %v412
        %v719 = vunpack.c.l.b16 %v413
        %v720 = vunpack.c.l.b16 %v414
        %v721 = vunpack.c.l.b16 %v415
        %v722 = vunpack.c.l.b16 %v416
        %v723 = vunpack.c.l.b16 %v417
        %v724 = vunpack.c.l.b16 %v418
        %v725 = vunpack.c.l.b16 %v419
        %v726 = vunpack.c.l.b16 %v420
        %v727 = vunpack.c.l.b16 %v421
        %v728 = vunpack.c.l.b16 %v422
        %v729 = vunpack.c.l.b16 %v423
        %v730 = vunpack.c.l.b16 %v424
        %v731 = vunpack.c.l.b16 %v425
        %v732 = vunpack.c.l.b16 %v426
        %v733 = vunpack.c.l.b16 %v427
        %v734 = vunpack.c.l.b16 %v428
        %v735 = vunpack.c.l.b16 %v429
        %v736 = vunpack.c.l.b16 %v430
        %v737 = vunpack.c.l.b16 %v431
        %v738 = vunpack.c.l.b16 %v432
        %v739 = vunpack.c.l.b16 %v433
        %v740 = vunpack.c.l.b16 %v434
        %v741 = vunpack.c.l.b16 %v435
        %v742 = vunpack.c.l.b16 %v436
        %v743 = vunpack.c.l.b16 %v437
        %v744 = vunpack.c.l.b16 %v438
        %v745 = vunpack.c.l.b16 %v439
        %v746 = vunpack.c.l.b16 %v440
        %v747 = vunpack.c.l.b16 %v441
        %v748 = vunpack.c.l.b16 %v442
        %v749 = vunpack.c.l.b16 %v443
        %v750 = vunpack.c.l.b16 %v444
        %v751 = vunpack.c.l.b16 %v445
        %v752 = vunpack.c.l.b16 %v446
        %v753 = vunpack.c.l.b16 %v447
        %v754 = vunpack.c.l.b16 %v448
        %v755 = vunpack.c.l.b16 %v449
        %v756 = vunpack.c.l.b16 %v450
        %v757 = vunpack.c.l.b16 %v451
        %v758 = vunpack.c.l.b16 %v452
        %v759 = vunpack.c.l.b16 %v453
        %v760 = vunpack.c.l.b16 %v454
        %v761 = vunpack.c.l.b16 %v455
        %v762 = vunpack.c.l.b16 %v456
        %v763 = vunpack.c.l.b16 %v457
        %v764 = vunpack.c.l.b16 %v458
        %v765 = vunpack.c.l.b16 %v459
        %v766 = vunpack.c.l.b16 %v460
        %v767 = vunpack.c.l.b16 %v461
        %v768 = vunpack.c.l.b16 %v462
        %v769 = vunpack.c.l.b16 %v463
        %v770 = vunpack.c.l.b16 %v464
        %v771 = vunpack.c.l.b16 %v465
        %v772 = vunpack.c.l.b16 %v466
        %v773 = vunpack.c.l.b16 %v467
        %v774 = vunpack.c.l.b16 %v468
        %v775 = vunpack.c.l.b16 %v469
        %v776 = vunpack.c.l.b16 %v470
        %v777 = vunpack.c.l.b16 %v471
        %v778 = vunpack.c.l.b16 %v472
        %v779 = vunpack.c.l.b16 %v473
        %v780 = vunpack.c.l.b16 %v474
        %v781 = vunpack.c.l.b16 %v475
        %v782 = vunpack.c.l.b16 %v476
        %v783 = vunpack.c.l.b16 %v477
        %v784 = vunpack.c.l.b16 %v478
        %v785 = vunpack.c.l.b16 %v479
        %v786 = vunpack.c.l.b16 %v480
        %v787 = vunpack.c.l.b16 %v481
        %v788 = vunpack.c.l.b16 %v482
        %v789 = vunpack.c.l.b16 %v483
        %v790 = vunpack.c.l.b16 %v484
        %v791 = vunpack.c.l.b16 %v485
        %v792 = vunpack.c.l.b16 %v486
        %v793 = vunpack.c.l.b16 %v487
        %v794 = vunpack.c.l.b16 %v488
        %v795 = vunpack.c.l.b16 %v489
        %v796 = vunpack.c.l.b16 %v490
        %v797 = vunpack.c.l.b16 %v491
        %v798 = vunpack.c.l.b16 %v492
        %v799 = vunpack.c.l.b16 %v493
        %v800 = vunpack.c.l.b16 %v494
        %v801 = vunpack.c.l.b16 %v495
        %v802 = vunpack.c.l.b16 %v496
        %v803 = vunpack.c.l.b16 %v497
        %v804 = vunpack.c.l.b16 %v498
        %v805 = vunpack.c.l.b16 %v499
        %v806 = vunpack.c.l.b16 %v500
        %v807 = vunpack.c.l.b16 %v501
        %v808 = vunpack.c.l.b16 %v502
        %v809 = vunpack.c.l.b16 %v503
        %v810 = vunpack.c.l.b16 %v504
        %v811 = vunpack.c.l.b16 %v505
        %v812 = vunpack.c.l.b16 %v506
        %v813 = vunpack.c.l.b16 %v507
        %v814 = vunpack.c.l.b16 %v508
        %v815 = vunpack.c.l.b16 %v509
        %v816 = vunpack.c.l.b16 %v510
        %v817 = vunpack.c.l.b16 %v511
        %v818 = vunpack.c.l.b16 %v512
        %v819 = vunpack.c.l.b16 %v513
        %v820 = vunpack.c.l.b16 %v514
        %v821 = vunpack.c.l.b16 %v515
        %v822 = vunpack.c.l.b16 %v516
        %v823 = vunpack.c.l.b16 %v517
        %v824 = vunpack.c.l.b16 %v518
        %v825 = vunpack.c.l.b16 %v519
        %v826 = vunpack.c.l.b16 %v520
        %v827 = vunpack.c.l.b16 %v521
        %v828 = vunpack.c.l.b16 %v522
        %v829 = vunpack.c.l.b16 %v523
        %v830 = vunpack.c.l.b16 %v524
        %v831 = vunpack.c.l.b16 %v525
        %v832 = vunpack.c.l.b16 %v526
        %v833 = vunpack.c.l.b16 %v527
        %v834 = vunpack.c.l.b16 %v528
        %v835 = vunpack.c.l.b16 %v529
        %v836 = vunpack.c.l.b16 %v530
        %v837 = vunpack.c.l.b16 %v531
        %v838 = vunpack.c.l.b16 %v532
        %v839 = vunpack.c.l.b16 %v533
        %v840 = vunpack.c.l.b16 %v534
        %v841 = vunpack.c.l.b16 %v535
        %v842 = vunpack.c.l.b16 %v536
        %v843 = vunpack.c.l.b16 %v537
        %v844 = vunpack.c.l.b16 %v538
        %v845 = vunpack.c.l.b16 %v539
        %v846 = vunpack.c.l.b16 %v540
        %v847 = vunpack.c.l.b16 %v541
        %v848 = vunpack.c.l.b16 %v542
        %v849 = vunpack.c.l.b16 %v543
        %v850 = vunpack.c.l.b16 %v544
        %v851 = vunpack.c.l.b16 %v545
        %v852 = vunpack.c.l.b16 %v546
        %v853 = vunpack.c.l.b16 %v547
        %v854 = vunpack.c.l.b16 %v548
        %v855 = vunpack.c.l.b16 %v549
        %v856 = vunpack.c.l.b16 %v550
        %v857 = vunpack.c.l.b16 %v551
        %v858 = vunpack.c.l.b16 %v552
        %v859 = vunpack.c.l.b16 %v553
        %v860 = vunpack.c.l.b16 %v554
        %v861 = vunpack.c.l.b16 %v555
        %v862 = vunpack.c.l.b16 %v556
        %v863 = vunpack.c.l.b16 %v557
        %v864 = vunpack.c.l.b16 %v558
        %v865 = vunpack.c.l.b16 %v559
        %v866 = vunpack.c.l.b16 %v560
        %v867 = vunpack.c.l.b16 %v561
        %v868 = vunpack.c.l.b16 %v562
        %v869 = vunpack.c.l.b16 %v563
        %v870 = vpack.c.b16 %v719, %v718
        %v871 = vpack.c.b16 %v721, %v720
        %v872 = vpack.c.b16 %v723, %v722
        %v873 = vpack.c.b16 %v725, %v724
        %v874 = vpack.c.b16 %v727, %v726
        %v875 = vpack.c.b16 %v729, %v728
        %v876 = vpack.c.b16 %v731, %v730
        %v877 = vpack.c.b16 %v733, %v732
        %v878 = vpack.c.b16 %v735, %v734
        %v879 = vpack.c.b16 %v737, %v736
        %v880 = vpack.c.b16 %v739, %v738
        %v881 = vpack.c.b16 %v741, %v740
        %v882 = vpack.c.b16 %v743, %v742
        %v883 = vpack.c.b16 %v745, %v744
        %v884 = vpack.c.b16 %v747, %v746
        %v885 = vpack.c.b16 %v749, %v748
        %v886 = vpack.c.b16 %v751, %v750
        %v887 = vpack.c.b16 %v753, %v752
        %v888 = vpack.c.b16 %v755, %v754
        %v889 = vpack.c.b16 %v757, %v756
        %v890 = vpack.c.b16 %v759, %v758
        %v891 = vpack.c.b16 %v761, %v760
        %v892 = vpack.c.b16 %v763, %v762
        %v893 = vpack.c.b16 %v765, %v764
        %v894 = vpack.c.b16 %v767, %v766
        %v895 = vpack.c.b16 %v769, %v768
        %v896 = vpack.c.b16 %v771, %v770
        %v897 = vpack.c.b16 %v773, %v772
        %v898 = vpack.c.b16 %v775, %v774
        %v899 = vpack.c.b16 %v777, %v776
        %v900 = vpack.c.b16 %v779, %v778
        %v901 = vpack.c.b16 %v781, %v780
        %v902 = vpack.c.b16 %v783, %v782
        %v903 = vpack.c.b16 %v785, %v784
        %v904 = vpack.c.b16 %v787, %v786
        %v905 = vpack.c.b16 %v789, %v788
        %v906 = vpack.c.b16 %v791, %v790
        %v907 = vpack.c.b16 %v793, %v792
        %v908 = vpack.c.b16 %v795, %v794
        %v909 = vpack.c.b16 %v797, %v796
        %v910 = vpack.c.b16 %v799, %v798
        %v911 = vpack.c.b16 %v801, %v800
        %v912 = vpack.c.b16 %v803, %v802
        %v913 = vpack.c.b16 %v805, %v804
        %v914 = vpack.c.b16 %v807, %v806
        %v915 = vpack.c.b16 %v809, %v808
        %v916 = vpack.c.b16 %v811, %v810
        %v917 = vpack.c.b16 %v813, %v812
        %v918 = vpack.c.b16 %v815, %v814
        %v919 = vpack.c.b16 %v817, %v816
        %v920 = vpack.c.b16 %v819, %v818
        %v921 = vpack.c.b16 %v821, %v820
        %v922 = vpack.c.b16 %v823, %v822
        %v923 = vpack.c.b16 %v825, %v824
        %v924 = vpack.c.b16 %v827, %v826
        %v925 = vpack.c.b16 %v829, %v828
        %v926 = vpack.c.b16 %v831, %v830
        %v927 = vpack.c.b16 %v833, %v832
        %v928 = vpack.c.b16 %v835, %v834
        %v929 = vpack.c.b16 %v837, %v836
        %v930 = vpack.c.b16 %v839, %v838
        %v931 = vpack.c.b16 %v841, %v840
        %v932 = vpack.c.b16 %v843, %v842
        %v933 = vpack.c.b16 %v845, %v844
        %v934 = vpack.c.b16 %v847, %v846
        %v935 = vpack.c.b16 %v849, %v848
        %v936 = vpack.c.b16 %v851, %v850
        %v937 = vpack.c.b16 %v853, %v852
        %v938 = vpack.c.b16 %v855, %v854
        %v939 = vpack.c.b16 %v857, %v856
        %v940 = vpack.c.b16 %v859, %v858
        %v941 = vpack.c.b16 %v861, %v860
        %v942 = vpack.c.b16 %v863, %v862
        %v943 = vpack.c.b16 %v865, %v864
        %v944 = vpack.c.b16 %v867, %v866
        %v945 = vpack.c.b16 %v869, %v868
        %v948 = vunpack.c.l.b16 %v564
        %v949 = vunpack.c.l.b16 %v565
        %v950 = vpack.c.b16 %v949, %v948
        %vm951 = vcmask 72704
        %v953 = vsel %vm951, %v870, 0
        %v956 = vsel %vm951, %v871, 0
        %v959 = vsel %vm951, %v872, 0
        %v962 = vsel %vm951, %v873, 0
        %v965 = vsel %vm951, %v874, 0
        %v968 = vsel %vm951, %v875, 0
        %v971 = vsel %vm951, %v876, 0
        %v974 = vsel %vm951, %v877, 0
        %v977 = vsel %vm951, %v878, 0
        %v980 = vsel %vm951, %v879, 0
        %v983 = vsel %vm951, %v880, 0
        %v986 = vsel %vm951, %v881, 0
        %v989 = vsel %vm951, %v882, 0
        %v992 = vsel %vm951, %v883, 0
        %v995 = vsel %vm951, %v884, 0
        %v998 = vsel %vm951, %v885, 0
        %v1001 = vsel %vm951, %v886, 0
        %v1004 = vsel %vm951, %v887, 0
        %v1007 = vsel %vm951, %v888, 0
        %v1010 = vsel %vm951, %v889, 0
        %v1013 = vsel %vm951, %v890, 0
        %v1016 = vsel %vm951, %v891, 0
        %v1019 = vsel %vm951, %v892, 0
        %v1022 = vsel %vm951, %v893, 0
        %v1025 = vsel %vm951, %v894, 0
        %v1028 = vsel %vm951, %v895, 0
        %v1031 = vsel %vm951, %v896, 0
        %v1034 = vsel %vm951, %v897, 0
        %v1037 = vsel %vm951, %v898, 0
        %v1040 = vsel %vm951, %v899, 0
        %v1043 = vsel %vm951, %v900, 0
        %v1046 = vsel %vm951, %v901, 0
        %v1049 = vsel %vm951, %v902, 0
        %v1052 = vsel %vm951, %v903, 0
        %v1055 = vsel %vm951, %v904, 0
        %v1058 = vsel %vm951, %v905, 0
        %v1061 = vsel %vm951, %v906, 0
        %v1064 = vsel %vm951, %v907, 0
        %v1067 = vsel %vm951, %v908, 0
        %v1070 = vsel %vm951, %v909, 0
        %v1073 = vsel %vm951, %v910, 0
        %v1076 = vsel %vm951, %v911, 0
        %v1079 = vsel %vm951, %v912, 0
        %v1082 = vsel %vm951, %v913, 0
        %v1085 = vsel %vm951, %v914, 0
        %v1088 = vsel %vm951, %v915, 0
        %v1091 = vsel %vm951, %v916, 0
        %v1094 = vsel %vm951, %v917, 0
        %v1097 = vsel %vm951, %v918, 0
        %v1100 = vsel %vm951, %v919, 0
        %v1103 = vsel %vm951, %v920, 0
        %v1106 = vsel %vm951, %v921, 0
        %v1109 = vsel %vm951, %v922, 0
        %v1112 = vsel %vm951, %v923, 0
        %v1115 = vsel %vm951, %v924, 0
        %v1118 = vsel %vm951, %v925, 0
        %v1121 = vsel %vm951, %v926, 0
        %v1124 = vsel %vm951, %v927, 0
        %v1127 = vsel %vm951, %v928, 0
        %v1130 = vsel %vm951, %v929, 0
        %v1133 = vsel %vm951, %v930, 0
        %v1136 = vsel %vm951, %v931, 0
        %v1139 = vsel %vm951, %v932, 0
        %v1142 = vsel %vm951, %v933, 0
        %v1145 = vsel %vm951, %v934, 0
        %v1148 = vsel %vm951, %v935, 0
        %v1151 = vsel %vm951, %v936, 0
        %v1154 = vsel %vm951, %v937, 0
        %v1157 = vsel %vm951, %v938, 0
        %v1160 = vsel %vm951, %v939, 0
        %v1163 = vsel %vm951, %v940, 0
        %v1166 = vsel %vm951, %v941, 0
        %v1169 = vsel %vm951, %v942, 0
        %v1172 = vsel %vm951, %v943, 0
        %v1175 = vsel %vm951, %v944, 0
        %v1178 = vsel %vm951, %v945, 0
        %vm1180 = vcmask 1043456
        %vm1181 = vcmask 1044480
        %v1182 = vsel %vm1180, 4294967295, 65535
        %v1183 = vsel %vm1181, %v1182, 0
        %v1185 = vand.u32 %v950, %v1183
        %1187 = vmatpush.bf16.msra.mxu0 0
        %1188 = vmatpush.bf16.msra.mxu0 0
        %1189 = vmatpush.bf16.msra.mxu0 0
        %1190 = vmatpush.bf16.msra.mxu0 0
        %1191 = vmatpush.bf16.msra.mxu0 0
        %1192 = vmatpush.bf16.msra.mxu0 0
        %1193 = vmatpush.bf16.msra.mxu0 0
        %1194 = vmatpush.bf16.msra.mxu0 %v1185
        %1195 = vmatmul.bf16.gmra.mxu0 %v953
        %v1196 = vpop.f32.mrf.mxu0
        %v1197 = vadd.f32 0.0, %v1196
        %v1198 = vpop.f32.mrf.mxu0
        %v1199 = vadd.f32 0.0, %v1198
        %1200 = vmatmul.bf16.gmra.mxu0 %v956
        %v1201 = vpop.f32.mrf.mxu0
        %v1202 = vadd.f32 0.0, %v1201
        %v1203 = vpop.f32.mrf.mxu0
        %v1204 = vadd.f32 0.0, %v1203
        %1205 = vmatmul.bf16.gmra.mxu0 %v959
        %v1206 = vpop.f32.mrf.mxu0
        %v1207 = vadd.f32 0.0, %v1206
        %v1208 = vpop.f32.mrf.mxu0
        %v1209 = vadd.f32 0.0, %v1208
        %1210 = vmatmul.bf16.gmra.mxu0 %v962
        %v1211 = vpop.f32.mrf.mxu0
        %v1212 = vadd.f32 0.0, %v1211
        %v1213 = vpop.f32.mrf.mxu0
        %v1214 = vadd.f32 0.0, %v1213
        %1215 = vmatmul.bf16.gmra.mxu0 %v965
        %v1216 = vpop.f32.mrf.mxu0
        %v1217 = vadd.f32 0.0, %v1216
        %v1218 = vpop.f32.mrf.mxu0
        %v1219 = vadd.f32 0.0, %v1218
        %1220 = vmatmul.bf16.gmra.mxu0 %v968
        %v1221 = vpop.f32.mrf.mxu0
        %v1222 = vadd.f32 0.0, %v1221
        %v1223 = vpop.f32.mrf.mxu0
        %v1224 = vadd.f32 0.0, %v1223
        %1225 = vmatmul.bf16.gmra.mxu0 %v971
        %v1226 = vpop.f32.mrf.mxu0
        %v1227 = vadd.f32 0.0, %v1226
        %v1228 = vpop.f32.mrf.mxu0
        %v1229 = vadd.f32 0.0, %v1228
        %1230 = vmatmul.bf16.gmra.mxu0 %v974
        %v1231 = vpop.f32.mrf.mxu0
        %v1232 = vadd.f32 0.0, %v1231
        %v1233 = vpop.f32.mrf.mxu0
        %v1234 = vadd.f32 0.0, %v1233
        %1235 = vmatmul.bf16.gmra.mxu0 %v977
        %v1236 = vpop.f32.mrf.mxu0
        %v1237 = vadd.f32 0.0, %v1236
        %v1238 = vpop.f32.mrf.mxu0
        %v1239 = vadd.f32 0.0, %v1238
        %1240 = vmatmul.bf16.gmra.mxu0 %v980
        %v1241 = vpop.f32.mrf.mxu0
        %v1242 = vadd.f32 0.0, %v1241
        %v1243 = vpop.f32.mrf.mxu0
        %v1244 = vadd.f32 0.0, %v1243
        %1245 = vmatmul.bf16.gmra.mxu0 %v983
        %v1246 = vpop.f32.mrf.mxu0
        %v1247 = vadd.f32 0.0, %v1246
        %v1248 = vpop.f32.mrf.mxu0
        %v1249 = vadd.f32 0.0, %v1248
        %1250 = vmatmul.bf16.gmra.mxu0 %v986
        %v1251 = vpop.f32.mrf.mxu0
        %v1252 = vadd.f32 0.0, %v1251
        %v1253 = vpop.f32.mrf.mxu0
        %v1254 = vadd.f32 0.0, %v1253
        %1255 = vmatmul.bf16.gmra.mxu0 %v989
        %v1256 = vpop.f32.mrf.mxu0
        %v1257 = vadd.f32 0.0, %v1256
        %v1258 = vpop.f32.mrf.mxu0
        %v1259 = vadd.f32 0.0, %v1258
        %1260 = vmatmul.bf16.gmra.mxu0 %v992
        %v1261 = vpop.f32.mrf.mxu0
        %v1262 = vadd.f32 0.0, %v1261
        %v1263 = vpop.f32.mrf.mxu0
        %v1264 = vadd.f32 0.0, %v1263
        %1265 = vmatmul.bf16.gmra.mxu0 %v995
        %v1266 = vpop.f32.mrf.mxu0
        %v1267 = vadd.f32 0.0, %v1266
        %v1268 = vpop.f32.mrf.mxu0
        %v1269 = vadd.f32 0.0, %v1268
        %1270 = vmatmul.bf16.gmra.mxu0 %v998
        %v1271 = vpop.f32.mrf.mxu0
        %v1272 = vadd.f32 0.0, %v1271
        %v1273 = vpop.f32.mrf.mxu0
        %v1274 = vadd.f32 0.0, %v1273
        %1275 = vmatmul.bf16.gmra.mxu0 %v1001
        %v1276 = vpop.f32.mrf.mxu0
        %v1277 = vadd.f32 0.0, %v1276
        %v1278 = vpop.f32.mrf.mxu0
        %v1279 = vadd.f32 0.0, %v1278
        %1280 = vmatmul.bf16.gmra.mxu0 %v1004
        %v1281 = vpop.f32.mrf.mxu0
        %v1282 = vadd.f32 0.0, %v1281
        %v1283 = vpop.f32.mrf.mxu0
        %v1284 = vadd.f32 0.0, %v1283
        %1285 = vmatmul.bf16.gmra.mxu0 %v1007
        %v1286 = vpop.f32.mrf.mxu0
        %v1287 = vadd.f32 0.0, %v1286
        %v1288 = vpop.f32.mrf.mxu0
        %v1289 = vadd.f32 0.0, %v1288
        %1290 = vmatmul.bf16.gmra.mxu0 %v1010
        %v1291 = vpop.f32.mrf.mxu0
        %v1292 = vadd.f32 0.0, %v1291
        %v1293 = vpop.f32.mrf.mxu0
        %v1294 = vadd.f32 0.0, %v1293
        %1295 = vmatmul.bf16.gmra.mxu0 %v1013
        %v1296 = vpop.f32.mrf.mxu0
        %v1297 = vadd.f32 0.0, %v1296
        %v1298 = vpop.f32.mrf.mxu0
        %v1299 = vadd.f32 0.0, %v1298
        %1300 = vmatmul.bf16.gmra.mxu0 %v1016
        %v1301 = vpop.f32.mrf.mxu0
        %v1302 = vadd.f32 0.0, %v1301
        %v1303 = vpop.f32.mrf.mxu0
        %v1304 = vadd.f32 0.0, %v1303
        %1305 = vmatmul.bf16.gmra.mxu0 %v1019
        %v1306 = vpop.f32.mrf.mxu0
        %v1307 = vadd.f32 0.0, %v1306
        %v1308 = vpop.f32.mrf.mxu0
        %v1309 = vadd.f32 0.0, %v1308
        %1310 = vmatmul.bf16.gmra.mxu0 %v1022
        %v1311 = vpop.f32.mrf.mxu0
        %v1312 = vadd.f32 0.0, %v1311
        %v1313 = vpop.f32.mrf.mxu0
        %v1314 = vadd.f32 0.0, %v1313
        %1315 = vmatmul.bf16.gmra.mxu0 %v1025
        %v1316 = vpop.f32.mrf.mxu0
        %v1317 = vadd.f32 0.0, %v1316
        %v1318 = vpop.f32.mrf.mxu0
        %v1319 = vadd.f32 0.0, %v1318
        %1320 = vmatmul.bf16.gmra.mxu0 %v1028
        %v1321 = vpop.f32.mrf.mxu0
        %v1322 = vadd.f32 0.0, %v1321
        %v1323 = vpop.f32.mrf.mxu0
        %v1324 = vadd.f32 0.0, %v1323
        %1325 = vmatmul.bf16.gmra.mxu0 %v1031
        %v1326 = vpop.f32.mrf.mxu0
        %v1327 = vadd.f32 0.0, %v1326
        %v1328 = vpop.f32.mrf.mxu0
        %v1329 = vadd.f32 0.0, %v1328
        %1330 = vmatmul.bf16.gmra.mxu0 %v1034
        %v1331 = vpop.f32.mrf.mxu0
        %v1332 = vadd.f32 0.0, %v1331
        %v1333 = vpop.f32.mrf.mxu0
        %v1334 = vadd.f32 0.0, %v1333
        %1335 = vmatmul.bf16.gmra.mxu0 %v1037
        %v1336 = vpop.f32.mrf.mxu0
        %v1337 = vadd.f32 0.0, %v1336
        %v1338 = vpop.f32.mrf.mxu0
        %v1339 = vadd.f32 0.0, %v1338
        %1340 = vmatmul.bf16.gmra.mxu0 %v1040
        %v1341 = vpop.f32.mrf.mxu0
        %v1342 = vadd.f32 0.0, %v1341
        %v1343 = vpop.f32.mrf.mxu0
        %v1344 = vadd.f32 0.0, %v1343
        %1345 = vmatmul.bf16.gmra.mxu0 %v1043
        %v1346 = vpop.f32.mrf.mxu0
        %v1347 = vadd.f32 0.0, %v1346
        %v1348 = vpop.f32.mrf.mxu0
        %v1349 = vadd.f32 0.0, %v1348
        %1350 = vmatmul.bf16.gmra.mxu0 %v1046
        %v1351 = vpop.f32.mrf.mxu0
        %v1352 = vadd.f32 0.0, %v1351
        %v1353 = vpop.f32.mrf.mxu0
        %v1354 = vadd.f32 0.0, %v1353
        %1355 = vmatmul.bf16.gmra.mxu0 %v1049
        %v1356 = vpop.f32.mrf.mxu0
        %v1357 = vadd.f32 0.0, %v1356
        %v1358 = vpop.f32.mrf.mxu0
        %v1359 = vadd.f32 0.0, %v1358
        %1360 = vmatmul.bf16.gmra.mxu0 %v1052
        %v1361 = vpop.f32.mrf.mxu0
        %v1362 = vadd.f32 0.0, %v1361
        %v1363 = vpop.f32.mrf.mxu0
        %v1364 = vadd.f32 0.0, %v1363
        %1365 = vmatmul.bf16.gmra.mxu0 %v1055
        %v1366 = vpop.f32.mrf.mxu0
        %v1367 = vadd.f32 0.0, %v1366
        %v1368 = vpop.f32.mrf.mxu0
        %v1369 = vadd.f32 0.0, %v1368
        %1370 = vmatmul.bf16.gmra.mxu0 %v1058
        %v1371 = vpop.f32.mrf.mxu0
        %v1372 = vadd.f32 0.0, %v1371
        %v1373 = vpop.f32.mrf.mxu0
        %v1374 = vadd.f32 0.0, %v1373
        %1375 = vmatmul.bf16.gmra.mxu0 %v1061
        %v1376 = vpop.f32.mrf.mxu0
        %v1377 = vadd.f32 0.0, %v1376
        %v1378 = vpop.f32.mrf.mxu0
        %v1379 = vadd.f32 0.0, %v1378
        %1380 = vmatmul.bf16.gmra.mxu0 %v1064
        %v1381 = vpop.f32.mrf.mxu0
        %v1382 = vadd.f32 0.0, %v1381
        %v1383 = vpop.f32.mrf.mxu0
        %v1384 = vadd.f32 0.0, %v1383
        %1385 = vmatmul.bf16.gmra.mxu0 %v1067
        %v1386 = vpop.f32.mrf.mxu0
        %v1387 = vadd.f32 0.0, %v1386
        %v1388 = vpop.f32.mrf.mxu0
        %v1389 = vadd.f32 0.0, %v1388
        %1390 = vmatmul.bf16.gmra.mxu0 %v1070
        %v1391 = vpop.f32.mrf.mxu0
        %v1392 = vadd.f32 0.0, %v1391
        %v1393 = vpop.f32.mrf.mxu0
        %v1394 = vadd.f32 0.0, %v1393
        %1395 = vmatmul.bf16.gmra.mxu0 %v1073
        %v1396 = vpop.f32.mrf.mxu0
        %v1397 = vadd.f32 0.0, %v1396
        %v1398 = vpop.f32.mrf.mxu0
        %v1399 = vadd.f32 0.0, %v1398
        %1400 = vmatmul.bf16.gmra.mxu0 %v1076
        %v1401 = vpop.f32.mrf.mxu0
        %v1402 = vadd.f32 0.0, %v1401
        %v1403 = vpop.f32.mrf.mxu0
        %v1404 = vadd.f32 0.0, %v1403
        %1405 = vmatmul.bf16.gmra.mxu0 %v1079
        %v1406 = vpop.f32.mrf.mxu0
        %v1407 = vadd.f32 0.0, %v1406
        %v1408 = vpop.f32.mrf.mxu0
        %v1409 = vadd.f32 0.0, %v1408
        %1410 = vmatmul.bf16.gmra.mxu0 %v1082
        %v1411 = vpop.f32.mrf.mxu0
        %v1412 = vadd.f32 0.0, %v1411
        %v1413 = vpop.f32.mrf.mxu0
        %v1414 = vadd.f32 0.0, %v1413
        %1415 = vmatmul.bf16.gmra.mxu0 %v1085
        %v1416 = vpop.f32.mrf.mxu0
        %v1417 = vadd.f32 0.0, %v1416
        %v1418 = vpop.f32.mrf.mxu0
        %v1419 = vadd.f32 0.0, %v1418
        %1420 = vmatmul.bf16.gmra.mxu0 %v1088
        %v1421 = vpop.f32.mrf.mxu0
        %v1422 = vadd.f32 0.0, %v1421
        %v1423 = vpop.f32.mrf.mxu0
        %v1424 = vadd.f32 0.0, %v1423
        %1425 = vmatmul.bf16.gmra.mxu0 %v1091
        %v1426 = vpop.f32.mrf.mxu0
        %v1427 = vadd.f32 0.0, %v1426
        %v1428 = vpop.f32.mrf.mxu0
        %v1429 = vadd.f32 0.0, %v1428
        %1430 = vmatmul.bf16.gmra.mxu0 %v1094
        %v1431 = vpop.f32.mrf.mxu0
        %v1432 = vadd.f32 0.0, %v1431
        %v1433 = vpop.f32.mrf.mxu0
        %v1434 = vadd.f32 0.0, %v1433
        %1435 = vmatmul.bf16.gmra.mxu0 %v1097
        %v1436 = vpop.f32.mrf.mxu0
        %v1437 = vadd.f32 0.0, %v1436
        %v1438 = vpop.f32.mrf.mxu0
        %v1439 = vadd.f32 0.0, %v1438
        %1440 = vmatmul.bf16.gmra.mxu0 %v1100
        %v1441 = vpop.f32.mrf.mxu0
        %v1442 = vadd.f32 0.0, %v1441
        %v1443 = vpop.f32.mrf.mxu0
        %v1444 = vadd.f32 0.0, %v1443
        %1445 = vmatmul.bf16.gmra.mxu0 %v1103
        %v1446 = vpop.f32.mrf.mxu0
        %v1447 = vadd.f32 0.0, %v1446
        %v1448 = vpop.f32.mrf.mxu0
        %v1449 = vadd.f32 0.0, %v1448
        %1450 = vmatmul.bf16.gmra.mxu0 %v1106
        %v1451 = vpop.f32.mrf.mxu0
        %v1452 = vadd.f32 0.0, %v1451
        %v1453 = vpop.f32.mrf.mxu0
        %v1454 = vadd.f32 0.0, %v1453
        %1455 = vmatmul.bf16.gmra.mxu0 %v1109
        %v1456 = vpop.f32.mrf.mxu0
        %v1457 = vadd.f32 0.0, %v1456
        %v1458 = vpop.f32.mrf.mxu0
        %v1459 = vadd.f32 0.0, %v1458
        %1460 = vmatmul.bf16.gmra.mxu0 %v1112
        %v1461 = vpop.f32.mrf.mxu0
        %v1462 = vadd.f32 0.0, %v1461
        %v1463 = vpop.f32.mrf.mxu0
        %v1464 = vadd.f32 0.0, %v1463
        %1465 = vmatmul.bf16.gmra.mxu0 %v1115
        %v1466 = vpop.f32.mrf.mxu0
        %v1467 = vadd.f32 0.0, %v1466
        %v1468 = vpop.f32.mrf.mxu0
        %v1469 = vadd.f32 0.0, %v1468
        %1470 = vmatmul.bf16.gmra.mxu0 %v1118
        %v1471 = vpop.f32.mrf.mxu0
        %v1472 = vadd.f32 0.0, %v1471
        %v1473 = vpop.f32.mrf.mxu0
        %v1474 = vadd.f32 0.0, %v1473
        %1475 = vmatmul.bf16.gmra.mxu0 %v1121
        %v1476 = vpop.f32.mrf.mxu0
        %v1477 = vadd.f32 0.0, %v1476
        %v1478 = vpop.f32.mrf.mxu0
        %v1479 = vadd.f32 0.0, %v1478
        %1480 = vmatmul.bf16.gmra.mxu0 %v1124
        %v1481 = vpop.f32.mrf.mxu0
        %v1482 = vadd.f32 0.0, %v1481
        %v1483 = vpop.f32.mrf.mxu0
        %v1484 = vadd.f32 0.0, %v1483
        %1485 = vmatmul.bf16.gmra.mxu0 %v1127
        %v1486 = vpop.f32.mrf.mxu0
        %v1487 = vadd.f32 0.0, %v1486
        %v1488 = vpop.f32.mrf.mxu0
        %v1489 = vadd.f32 0.0, %v1488
        %1490 = vmatmul.bf16.gmra.mxu0 %v1130
        %v1491 = vpop.f32.mrf.mxu0
        %v1492 = vadd.f32 0.0, %v1491
        %v1493 = vpop.f32.mrf.mxu0
        %v1494 = vadd.f32 0.0, %v1493
        %1495 = vmatmul.bf16.gmra.mxu0 %v1133
        %v1496 = vpop.f32.mrf.mxu0
        %v1497 = vadd.f32 0.0, %v1496
        %v1498 = vpop.f32.mrf.mxu0
        %v1499 = vadd.f32 0.0, %v1498
        %1500 = vmatmul.bf16.gmra.mxu0 %v1136
        %v1501 = vpop.f32.mrf.mxu0
        %v1502 = vadd.f32 0.0, %v1501
        %v1503 = vpop.f32.mrf.mxu0
        %v1504 = vadd.f32 0.0, %v1503
        %1505 = vmatmul.bf16.gmra.mxu0 %v1139
        %v1506 = vpop.f32.mrf.mxu0
        %v1507 = vadd.f32 0.0, %v1506
        %v1508 = vpop.f32.mrf.mxu0
        %v1509 = vadd.f32 0.0, %v1508
        %1510 = vmatmul.bf16.gmra.mxu0 %v1142
        %v1511 = vpop.f32.mrf.mxu0
        %v1512 = vadd.f32 0.0, %v1511
        %v1513 = vpop.f32.mrf.mxu0
        %v1514 = vadd.f32 0.0, %v1513
        %1515 = vmatmul.bf16.gmra.mxu0 %v1145
        %v1516 = vpop.f32.mrf.mxu0
        %v1517 = vadd.f32 0.0, %v1516
        %v1518 = vpop.f32.mrf.mxu0
        %v1519 = vadd.f32 0.0, %v1518
        %1520 = vmatmul.bf16.gmra.mxu0 %v1148
        %v1521 = vpop.f32.mrf.mxu0
        %v1522 = vadd.f32 0.0, %v1521
        %v1523 = vpop.f32.mrf.mxu0
        %v1524 = vadd.f32 0.0, %v1523
        %1525 = vmatmul.bf16.gmra.mxu0 %v1151
        %v1526 = vpop.f32.mrf.mxu0
        %v1527 = vadd.f32 0.0, %v1526
        %v1528 = vpop.f32.mrf.mxu0
        %v1529 = vadd.f32 0.0, %v1528
        %1530 = vmatmul.bf16.gmra.mxu0 %v1154
        %v1531 = vpop.f32.mrf.mxu0
        %v1532 = vadd.f32 0.0, %v1531
        %v1533 = vpop.f32.mrf.mxu0
        %v1534 = vadd.f32 0.0, %v1533
        %1535 = vmatmul.bf16.gmra.mxu0 %v1157
        %v1536 = vpop.f32.mrf.mxu0
        %v1537 = vadd.f32 0.0, %v1536
        %v1538 = vpop.f32.mrf.mxu0
        %v1539 = vadd.f32 0.0, %v1538
        %1540 = vmatmul.bf16.gmra.mxu0 %v1160
        %v1541 = vpop.f32.mrf.mxu0
        %v1542 = vadd.f32 0.0, %v1541
        %v1543 = vpop.f32.mrf.mxu0
        %v1544 = vadd.f32 0.0, %v1543
        %1545 = vmatmul.bf16.gmra.mxu0 %v1163
        %v1546 = vpop.f32.mrf.mxu0
        %v1547 = vadd.f32 0.0, %v1546
        %v1548 = vpop.f32.mrf.mxu0
        %v1549 = vadd.f32 0.0, %v1548
        %1550 = vmatmul.bf16.gmra.mxu0 %v1166
        %v1551 = vpop.f32.mrf.mxu0
        %v1552 = vadd.f32 0.0, %v1551
        %v1553 = vpop.f32.mrf.mxu0
        %v1554 = vadd.f32 0.0, %v1553
        %1555 = vmatmul.bf16.gmra.mxu0 %v1169
        %v1556 = vpop.f32.mrf.mxu0
        %v1557 = vadd.f32 0.0, %v1556
        %v1558 = vpop.f32.mrf.mxu0
        %v1559 = vadd.f32 0.0, %v1558
        %1560 = vmatmul.bf16.gmra.mxu0 %v1172
        %v1561 = vpop.f32.mrf.mxu0
        %v1562 = vadd.f32 0.0, %v1561
        %v1563 = vpop.f32.mrf.mxu0
        %v1564 = vadd.f32 0.0, %v1563
        %1565 = vmatmul.bf16.gmra.mxu0 %v1175
        %v1566 = vpop.f32.mrf.mxu0
        %v1567 = vadd.f32 0.0, %v1566
        %v1568 = vpop.f32.mrf.mxu0
        %v1569 = vadd.f32 0.0, %v1568
        %1570 = vmatmul.bf16.gmra.mxu0 %v1178
        %v1571 = vpop.f32.mrf.mxu0
        %v1572 = vadd.f32 0.0, %v1571
        %v1573 = vpop.f32.mrf.mxu0
        %v1574 = vadd.f32 0.0, %v1573
        %1575 = vdwg.mxu0
        %vm1576 = vcmask 523264
        %v1577 = vsel %vm1576, %v1197, -inf
        %v1578 = vsel %vm1576, %v1199, -inf
        %v1579 = vmax.f32 %v1577, %v1578
        %v1580 = vsel %vm1576, %v1202, -inf
        %v1581 = vmax.f32 %v1579, %v1580
        %v1582 = vsel %vm1576, %v1204, -inf
        %v1583 = vmax.f32 %v1581, %v1582
        %v1584 = vsel %vm1576, %v1207, -inf
        %v1585 = vmax.f32 %v1583, %v1584
        %v1586 = vsel %vm1576, %v1209, -inf
        %v1587 = vmax.f32 %v1585, %v1586
        %v1588 = vsel %vm1576, %v1212, -inf
        %v1589 = vmax.f32 %v1587, %v1588
        %v1590 = vsel %vm1576, %v1214, -inf
        %v1591 = vmax.f32 %v1589, %v1590
        %v1592 = vsel %vm1576, %v1217, -inf
        %v1593 = vmax.f32 %v1591, %v1592
        %v1594 = vsel %vm1576, %v1219, -inf
        %v1595 = vmax.f32 %v1593, %v1594
        %v1596 = vsel %vm1576, %v1222, -inf
        %v1597 = vmax.f32 %v1595, %v1596
        %v1598 = vsel %vm1576, %v1224, -inf
        %v1599 = vmax.f32 %v1597, %v1598
        %v1600 = vsel %vm1576, %v1227, -inf
        %v1601 = vmax.f32 %v1599, %v1600
        %v1602 = vsel %vm1576, %v1229, -inf
        %v1603 = vmax.f32 %v1601, %v1602
        %v1604 = vsel %vm1576, %v1232, -inf
        %v1605 = vmax.f32 %v1603, %v1604
        %v1606 = vsel %vm1576, %v1234, -inf
        %v1607 = vmax.f32 %v1605, %v1606
        %v1608 = vsel %vm1576, %v1237, -inf
        %v1609 = vmax.f32 %v1607, %v1608
        %v1610 = vsel %vm1576, %v1239, -inf
        %v1611 = vmax.f32 %v1609, %v1610
        %v1612 = vsel %vm1576, %v1242, -inf
        %v1613 = vmax.f32 %v1611, %v1612
        %v1614 = vrot.slane %v1613, 4
        %v1615 = vmax.f32 %v1613, %v1614
        %v1616 = vrot.slane %v1615, 2
        %v1617 = vmax.f32 %v1615, %v1616
        %v1618 = vrot.slane %v1617, 1
        %v1619 = vmax.f32 %v1617, %v1618
        %v1620 = vsel %vm1576, %v1244, -inf
        %v1621 = vsel %vm1576, %v1247, -inf
        %v1622 = vmax.f32 %v1620, %v1621
        %v1623 = vsel %vm1576, %v1249, -inf
        %v1624 = vmax.f32 %v1622, %v1623
        %v1625 = vsel %vm1576, %v1252, -inf
        %v1626 = vmax.f32 %v1624, %v1625
        %v1627 = vsel %vm1576, %v1254, -inf
        %v1628 = vmax.f32 %v1626, %v1627
        %v1629 = vsel %vm1576, %v1257, -inf
        %v1630 = vmax.f32 %v1628, %v1629
        %v1631 = vsel %vm1576, %v1259, -inf
        %v1632 = vmax.f32 %v1630, %v1631
        %v1633 = vsel %vm1576, %v1262, -inf
        %v1634 = vmax.f32 %v1632, %v1633
        %v1635 = vsel %vm1576, %v1264, -inf
        %v1636 = vmax.f32 %v1634, %v1635
        %v1637 = vsel %vm1576, %v1267, -inf
        %v1638 = vmax.f32 %v1636, %v1637
        %v1639 = vsel %vm1576, %v1269, -inf
        %v1640 = vmax.f32 %v1638, %v1639
        %v1641 = vsel %vm1576, %v1272, -inf
        %v1642 = vmax.f32 %v1640, %v1641
        %v1643 = vsel %vm1576, %v1274, -inf
        %v1644 = vmax.f32 %v1642, %v1643
        %v1645 = vsel %vm1576, %v1277, -inf
        %v1646 = vmax.f32 %v1644, %v1645
        %v1647 = vsel %vm1576, %v1279, -inf
        %v1648 = vmax.f32 %v1646, %v1647
        %v1649 = vsel %vm1576, %v1282, -inf
        %v1650 = vmax.f32 %v1648, %v1649
        %v1651 = vsel %vm1576, %v1284, -inf
        %v1652 = vmax.f32 %v1650, %v1651
        %v1653 = vsel %vm1576, %v1287, -inf
        %v1654 = vmax.f32 %v1652, %v1653
        %v1655 = vsel %vm1576, %v1289, -inf
        %v1656 = vmax.f32 %v1654, %v1655
        %v1657 = vrot.slane %v1656, 4
        %v1658 = vmax.f32 %v1656, %v1657
        %v1659 = vrot.slane %v1658, 2
        %v1660 = vmax.f32 %v1658, %v1659
        %v1661 = vrot.slane %v1660, 1
        %v1662 = vmax.f32 %v1660, %v1661
        %v1663 = vsel %vm1576, %v1292, -inf
        %v1664 = vsel %vm1576, %v1294, -inf
        %v1665 = vmax.f32 %v1663, %v1664
        %v1666 = vsel %vm1576, %v1297, -inf
        %v1667 = vmax.f32 %v1665, %v1666
        %v1668 = vsel %vm1576, %v1299, -inf
        %v1669 = vmax.f32 %v1667, %v1668
        %v1670 = vsel %vm1576, %v1302, -inf
        %v1671 = vmax.f32 %v1669, %v1670
        %v1672 = vsel %vm1576, %v1304, -inf
        %v1673 = vmax.f32 %v1671, %v1672
        %v1674 = vsel %vm1576, %v1307, -inf
        %v1675 = vmax.f32 %v1673, %v1674
        %v1676 = vsel %vm1576, %v1309, -inf
        %v1677 = vmax.f32 %v1675, %v1676
        %v1678 = vsel %vm1576, %v1312, -inf
        %v1679 = vmax.f32 %v1677, %v1678
        %v1680 = vsel %vm1576, %v1314, -inf
        %v1681 = vmax.f32 %v1679, %v1680
        %v1682 = vsel %vm1576, %v1317, -inf
        %v1683 = vmax.f32 %v1681, %v1682
        %v1684 = vsel %vm1576, %v1319, -inf
        %v1685 = vmax.f32 %v1683, %v1684
        %v1686 = vsel %vm1576, %v1322, -inf
        %v1687 = vmax.f32 %v1685, %v1686
        %v1688 = vsel %vm1576, %v1324, -inf
        %v1689 = vmax.f32 %v1687, %v1688
        %v1690 = vsel %vm1576, %v1327, -inf
        %v1691 = vmax.f32 %v1689, %v1690
        %v1692 = vsel %vm1576, %v1329, -inf
        %v1693 = vmax.f32 %v1691, %v1692
        %v1694 = vsel %vm1576, %v1332, -inf
        %v1695 = vmax.f32 %v1693, %v1694
        %v1696 = vsel %vm1576, %v1334, -inf
        %v1697 = vmax.f32 %v1695, %v1696
        %v1698 = vsel %vm1576, %v1337, -inf
        %v1699 = vmax.f32 %v1697, %v1698
        %v1700 = vrot.slane %v1699, 4
        %v1701 = vmax.f32 %v1699, %v1700
        %v1702 = vrot.slane %v1701, 2
        %v1703 = vmax.f32 %v1701, %v1702
        %v1704 = vrot.slane %v1703, 1
        %v1705 = vmax.f32 %v1703, %v1704
        %v1706 = vsel %vm1576, %v1339, -inf
        %v1707 = vsel %vm1576, %v1342, -inf
        %v1708 = vmax.f32 %v1706, %v1707
        %v1709 = vsel %vm1576, %v1344, -inf
        %v1710 = vmax.f32 %v1708, %v1709
        %v1711 = vsel %vm1576, %v1347, -inf
        %v1712 = vmax.f32 %v1710, %v1711
        %v1713 = vsel %vm1576, %v1349, -inf
        %v1714 = vmax.f32 %v1712, %v1713
        %v1715 = vsel %vm1576, %v1352, -inf
        %v1716 = vmax.f32 %v1714, %v1715
        %v1717 = vsel %vm1576, %v1354, -inf
        %v1718 = vmax.f32 %v1716, %v1717
        %v1719 = vsel %vm1576, %v1357, -inf
        %v1720 = vmax.f32 %v1718, %v1719
        %v1721 = vsel %vm1576, %v1359, -inf
        %v1722 = vmax.f32 %v1720, %v1721
        %v1723 = vsel %vm1576, %v1362, -inf
        %v1724 = vmax.f32 %v1722, %v1723
        %v1725 = vsel %vm1576, %v1364, -inf
        %v1726 = vmax.f32 %v1724, %v1725
        %v1727 = vsel %vm1576, %v1367, -inf
        %v1728 = vmax.f32 %v1726, %v1727
        %v1729 = vsel %vm1576, %v1369, -inf
        %v1730 = vmax.f32 %v1728, %v1729
        %v1731 = vsel %vm1576, %v1372, -inf
        %v1732 = vmax.f32 %v1730, %v1731
        %v1733 = vsel %vm1576, %v1374, -inf
        %v1734 = vmax.f32 %v1732, %v1733
        %v1735 = vsel %vm1576, %v1377, -inf
        %v1736 = vmax.f32 %v1734, %v1735
        %v1737 = vsel %vm1576, %v1379, -inf
        %v1738 = vmax.f32 %v1736, %v1737
        %v1739 = vsel %vm1576, %v1382, -inf
        %v1740 = vmax.f32 %v1738, %v1739
        %v1741 = vsel %vm1576, %v1384, -inf
        %v1742 = vmax.f32 %v1740, %v1741
        %v1743 = vrot.slane %v1742, 4
        %v1744 = vmax.f32 %v1742, %v1743
        %v1745 = vrot.slane %v1744, 2
        %v1746 = vmax.f32 %v1744, %v1745
        %v1747 = vrot.slane %v1746, 1
        %v1748 = vmax.f32 %v1746, %v1747
        %v1749 = vsel %vm1576, %v1387, -inf
        %v1750 = vsel %vm1576, %v1389, -inf
        %v1751 = vmax.f32 %v1749, %v1750
        %v1752 = vsel %vm1576, %v1392, -inf
        %v1753 = vmax.f32 %v1751, %v1752
        %v1754 = vsel %vm1576, %v1394, -inf
        %v1755 = vmax.f32 %v1753, %v1754
        %v1756 = vsel %vm1576, %v1397, -inf
        %v1757 = vmax.f32 %v1755, %v1756
        %v1758 = vsel %vm1576, %v1399, -inf
        %v1759 = vmax.f32 %v1757, %v1758
        %v1760 = vsel %vm1576, %v1402, -inf
        %v1761 = vmax.f32 %v1759, %v1760
        %v1762 = vsel %vm1576, %v1404, -inf
        %v1763 = vmax.f32 %v1761, %v1762
        %v1764 = vsel %vm1576, %v1407, -inf
        %v1765 = vmax.f32 %v1763, %v1764
        %v1766 = vsel %vm1576, %v1409, -inf
        %v1767 = vmax.f32 %v1765, %v1766
        %v1768 = vsel %vm1576, %v1412, -inf
        %v1769 = vmax.f32 %v1767, %v1768
        %v1770 = vsel %vm1576, %v1414, -inf
        %v1771 = vmax.f32 %v1769, %v1770
        %v1772 = vsel %vm1576, %v1417, -inf
        %v1773 = vmax.f32 %v1771, %v1772
        %v1774 = vsel %vm1576, %v1419, -inf
        %v1775 = vmax.f32 %v1773, %v1774
        %v1776 = vsel %vm1576, %v1422, -inf
        %v1777 = vmax.f32 %v1775, %v1776
        %v1778 = vsel %vm1576, %v1424, -inf
        %v1779 = vmax.f32 %v1777, %v1778
        %v1780 = vsel %vm1576, %v1427, -inf
        %v1781 = vmax.f32 %v1779, %v1780
        %v1782 = vsel %vm1576, %v1429, -inf
        %v1783 = vmax.f32 %v1781, %v1782
        %v1784 = vsel %vm1576, %v1432, -inf
        %v1785 = vmax.f32 %v1783, %v1784
        %v1786 = vrot.slane %v1785, 4
        %v1787 = vmax.f32 %v1785, %v1786
        %v1788 = vrot.slane %v1787, 2
        %v1789 = vmax.f32 %v1787, %v1788
        %v1790 = vrot.slane %v1789, 1
        %v1791 = vmax.f32 %v1789, %v1790
        %v1792 = vsel %vm1576, %v1434, -inf
        %v1793 = vsel %vm1576, %v1437, -inf
        %v1794 = vmax.f32 %v1792, %v1793
        %v1795 = vsel %vm1576, %v1439, -inf
        %v1796 = vmax.f32 %v1794, %v1795
        %v1797 = vsel %vm1576, %v1442, -inf
        %v1798 = vmax.f32 %v1796, %v1797
        %v1799 = vsel %vm1576, %v1444, -inf
        %v1800 = vmax.f32 %v1798, %v1799
        %v1801 = vsel %vm1576, %v1447, -inf
        %v1802 = vmax.f32 %v1800, %v1801
        %v1803 = vsel %vm1576, %v1449, -inf
        %v1804 = vmax.f32 %v1802, %v1803
        %v1805 = vsel %vm1576, %v1452, -inf
        %v1806 = vmax.f32 %v1804, %v1805
        %v1807 = vsel %vm1576, %v1454, -inf
        %v1808 = vmax.f32 %v1806, %v1807
        %v1809 = vsel %vm1576, %v1457, -inf
        %v1810 = vmax.f32 %v1808, %v1809
        %v1811 = vsel %vm1576, %v1459, -inf
        %v1812 = vmax.f32 %v1810, %v1811
        %v1813 = vsel %vm1576, %v1462, -inf
        %v1814 = vmax.f32 %v1812, %v1813
        %v1815 = vsel %vm1576, %v1464, -inf
        %v1816 = vmax.f32 %v1814, %v1815
        %v1817 = vsel %vm1576, %v1467, -inf
        %v1818 = vmax.f32 %v1816, %v1817
        %v1819 = vsel %vm1576, %v1469, -inf
        %v1820 = vmax.f32 %v1818, %v1819
        %v1821 = vsel %vm1576, %v1472, -inf
        %v1822 = vmax.f32 %v1820, %v1821
        %v1823 = vsel %vm1576, %v1474, -inf
        %v1824 = vmax.f32 %v1822, %v1823
        %v1825 = vsel %vm1576, %v1477, -inf
        %v1826 = vmax.f32 %v1824, %v1825
        %v1827 = vsel %vm1576, %v1479, -inf
        %v1828 = vmax.f32 %v1826, %v1827
        %v1829 = vrot.slane %v1828, 4
        %v1830 = vmax.f32 %v1828, %v1829
        %v1831 = vrot.slane %v1830, 2
        %v1832 = vmax.f32 %v1830, %v1831
        %v1833 = vrot.slane %v1832, 1
        %v1834 = vmax.f32 %v1832, %v1833
        %v1835 = vsel %vm1576, %v1482, -inf
        %v1836 = vsel %vm1576, %v1484, -inf
        %v1837 = vmax.f32 %v1835, %v1836
        %v1838 = vsel %vm1576, %v1487, -inf
        %v1839 = vmax.f32 %v1837, %v1838
        %v1840 = vsel %vm1576, %v1489, -inf
        %v1841 = vmax.f32 %v1839, %v1840
        %v1842 = vsel %vm1576, %v1492, -inf
        %v1843 = vmax.f32 %v1841, %v1842
        %v1844 = vsel %vm1576, %v1494, -inf
        %v1845 = vmax.f32 %v1843, %v1844
        %v1846 = vsel %vm1576, %v1497, -inf
        %v1847 = vmax.f32 %v1845, %v1846
        %v1848 = vsel %vm1576, %v1499, -inf
        %v1849 = vmax.f32 %v1847, %v1848
        %v1850 = vsel %vm1576, %v1502, -inf
        %v1851 = vmax.f32 %v1849, %v1850
        %v1852 = vsel %vm1576, %v1504, -inf
        %v1853 = vmax.f32 %v1851, %v1852
        %v1854 = vsel %vm1576, %v1507, -inf
        %v1855 = vmax.f32 %v1853, %v1854
        %v1856 = vsel %vm1576, %v1509, -inf
        %v1857 = vmax.f32 %v1855, %v1856
        %v1858 = vsel %vm1576, %v1512, -inf
        %v1859 = vmax.f32 %v1857, %v1858
        %v1860 = vsel %vm1576, %v1514, -inf
        %v1861 = vmax.f32 %v1859, %v1860
        %v1862 = vsel %vm1576, %v1517, -inf
        %v1863 = vmax.f32 %v1861, %v1862
        %v1864 = vsel %vm1576, %v1519, -inf
        %v1865 = vmax.f32 %v1863, %v1864
        %v1866 = vsel %vm1576, %v1522, -inf
        %v1867 = vmax.f32 %v1865, %v1866
        %v1868 = vsel %vm1576, %v1524, -inf
        %v1869 = vmax.f32 %v1867, %v1868
        %v1870 = vsel %vm1576, %v1527, -inf
        %v1871 = vmax.f32 %v1869, %v1870
        %v1872 = vrot.slane %v1871, 4
        %v1873 = vmax.f32 %v1871, %v1872
        %v1874 = vrot.slane %v1873, 2
        %v1875 = vmax.f32 %v1873, %v1874
        %v1876 = vrot.slane %v1875, 1
        %v1877 = vmax.f32 %v1875, %v1876
        %v1878 = vsel %vm1576, %v1529, -inf
        %v1879 = vsel %vm1576, %v1532, -inf
        %v1880 = vmax.f32 %v1878, %v1879
        %v1881 = vsel %vm1576, %v1534, -inf
        %v1882 = vmax.f32 %v1880, %v1881
        %v1883 = vsel %vm1576, %v1537, -inf
        %v1884 = vmax.f32 %v1882, %v1883
        %v1885 = vsel %vm1576, %v1539, -inf
        %v1886 = vmax.f32 %v1884, %v1885
        %v1887 = vsel %vm1576, %v1542, -inf
        %v1888 = vmax.f32 %v1886, %v1887
        %v1889 = vsel %vm1576, %v1544, -inf
        %v1890 = vmax.f32 %v1888, %v1889
        %v1891 = vsel %vm1576, %v1547, -inf
        %v1892 = vmax.f32 %v1890, %v1891
        %v1893 = vsel %vm1576, %v1549, -inf
        %v1894 = vmax.f32 %v1892, %v1893
        %v1895 = vsel %vm1576, %v1552, -inf
        %v1896 = vmax.f32 %v1894, %v1895
        %v1897 = vsel %vm1576, %v1554, -inf
        %v1898 = vmax.f32 %v1896, %v1897
        %v1899 = vsel %vm1576, %v1557, -inf
        %v1900 = vmax.f32 %v1898, %v1899
        %v1901 = vsel %vm1576, %v1559, -inf
        %v1902 = vmax.f32 %v1900, %v1901
        %v1903 = vsel %vm1576, %v1562, -inf
        %v1904 = vmax.f32 %v1902, %v1903
        %v1905 = vsel %vm1576, %v1564, -inf
        %v1906 = vmax.f32 %v1904, %v1905
        %v1907 = vsel %vm1576, %v1567, -inf
        %v1908 = vmax.f32 %v1906, %v1907
        %v1909 = vsel %vm1576, %v1569, -inf
        %v1910 = vmax.f32 %v1908, %v1909
        %v1911 = vsel %vm1576, %v1572, -inf
        %v1912 = vmax.f32 %v1910, %v1911
        %v1913 = vsel %vm1576, %v1574, -inf
        %v1914 = vmax.f32 %v1912, %v1913
        %v1915 = vrot.slane %v1914, 4
        %v1916 = vmax.f32 %v1914, %v1915
        %v1917 = vrot.slane %v1916, 2
        %v1918 = vmax.f32 %v1916, %v1917
        %v1919 = vrot.slane %v1918, 1
        %v1920 = vmax.f32 %v1918, %v1919
        %v1921 = vld [vmem:[%s2] sm:$0x1]
        %v1923 = vperm.slane %v1921, 0
        %v1925 = vadd.f32 %v1619, %v1923
        %v1926 = vadd.f32 %v1662, %v1923
        %v1927 = vadd.f32 %v1705, %v1923
        %v1928 = vadd.f32 %v1748, %v1923
        %v1929 = vadd.f32 %v1791, %v1923
        %v1930 = vadd.f32 %v1834, %v1923
        %v1931 = vadd.f32 %v1877, %v1923
        %v1932 = vadd.f32 %v1920, %v1923
        %v1933 = vpack.c.bf16 %v1925, %v1925
        %v1934 = vpack.c.bf16 %v1926, %v1926
        %v1935 = vpack.c.bf16 %v1927, %v1927
        %v1936 = vpack.c.bf16 %v1928, %v1928
        %v1937 = vpack.c.bf16 %v1929, %v1929
        %v1938 = vpack.c.bf16 %v1930, %v1930
        %v1939 = vpack.c.bf16 %v1931, %v1931
        %v1940 = vpack.c.bf16 %v1932, %v1932
        %v1941 = vld [vmem:[%s3] sm:$0xff]
        %v1942 = vld [vmem:[%s3 + $0x8] sm:$0xff]
        %v1943 = vld [vmem:[%s3 + $0x10] sm:$0xff]
        %v1944 = vld [vmem:[%s3 + $0x18] sm:$0xff]
        %v1945 = vld [vmem:[%s3 + $0x20] sm:$0xff]
        %v1946 = vld [vmem:[%s3 + $0x28] sm:$0xff]
        %v1947 = vld [vmem:[%s3 + $0x30] sm:$0xff]
        %v1948 = vld [vmem:[%s3 + $0x38] sm:$0xff]
        %v1949 = vld [vmem:[%s5] sm:$0x3]
        %v1951 = vperm.slane %v1949, 0
        %v1952 = vperm.slane %v1949, 1
        %v1963 = vunpack.c.l.b16 %v1933
        %v1964 = vunpack.c.l.b16 %v1934
        %v1965 = vunpack.c.l.b16 %v1935
        %v1966 = vunpack.c.l.b16 %v1936
        %v1967 = vunpack.c.l.b16 %v1937
        %v1968 = vunpack.c.l.b16 %v1938
        %v1969 = vunpack.c.l.b16 %v1939
        %v1970 = vunpack.c.l.b16 %v1940
        %v1971 = vrot.slane %v1964, 7
        %vm1972 = vcmask 1041409
        %v1973 = vsel %vm1972, %v1971, %v1963
        %v1974 = vrot.slane %v1965, 6
        %vm1975 = vcmask 1042434
        %v1976 = vsel %vm1975, %v1974, %v1973
        %v1977 = vrot.slane %v1966, 5
        %vm1978 = vcmask 1043459
        %v1979 = vsel %vm1978, %v1977, %v1976
        %v1980 = vrot.slane %v1967, 4
        %vm1981 = vcmask 1044484
        %v1982 = vsel %vm1981, %v1980, %v1979
        %v1983 = vrot.slane %v1968, 3
        %vm1984 = vcmask 1045509
        %v1985 = vsel %vm1984, %v1983, %v1982
        %v1986 = vrot.slane %v1969, 2
        %vm1987 = vcmask 1046534
        %v1988 = vsel %vm1987, %v1986, %v1985
        %v1989 = vrot.slane %v1970, 1
        %vm1990 = vcmask 1047559
        %v1991 = vsel %vm1990, %v1989, %v1988
        %v1992 = vpack.c.b16 %v1991, %v1991
        %v2001 = vunpack.c.l.b16 %v1941
        %v2002 = vunpack.c.h.b16 %v1941
        %v2003 = vunpack.c.l.b16 %v1942
        %v2004 = vunpack.c.h.b16 %v1942
        %v2005 = vunpack.c.l.b16 %v1943
        %v2006 = vunpack.c.h.b16 %v1943
        %v2007 = vunpack.c.l.b16 %v1944
        %v2008 = vunpack.c.h.b16 %v1944
        %v2009 = vunpack.c.l.b16 %v1945
        %v2010 = vunpack.c.h.b16 %v1945
        %v2011 = vunpack.c.l.b16 %v1946
        %v2012 = vunpack.c.h.b16 %v1946
        %v2013 = vunpack.c.l.b16 %v1947
        %v2014 = vunpack.c.h.b16 %v1947
        %v2015 = vunpack.c.l.b16 %v1948
        %v2016 = vunpack.c.h.b16 %v1948
        %v2017 = vpack.c.b16 %v2003, %v2001
        %v2018 = vpack.c.b16 %v2004, %v2002
        %v2019 = vpack.c.b16 %v2007, %v2005
        %v2020 = vpack.c.b16 %v2008, %v2006
        %v2021 = vpack.c.b16 %v2011, %v2009
        %v2022 = vpack.c.b16 %v2012, %v2010
        %v2023 = vpack.c.b16 %v2015, %v2013
        %v2024 = vpack.c.b16 %v2016, %v2014
        %v2034 = vsel %vm1576, %v1992, 0
        %2036 = vmatpush.bf16.msra.mxu0 0
        %2037 = vmatpush.bf16.msra.mxu0 0
        %2038 = vmatpush.bf16.msra.mxu0 0
        %2039 = vmatpush.bf16.msra.mxu0 0
        %2040 = vmatpush.bf16.msra.mxu0 %v2023
        %2041 = vmatpush.bf16.msra.mxu0 %v2021
        %2042 = vmatpush.bf16.msra.mxu0 %v2019
        %2043 = vmatpush.bf16.msra.mxu0 %v2017
        %2044 = vmatmul.bf16.gmra.mxu0 %v2034
        %v2045 = vpop.f32.mrf.mxu0
        %v2046 = vadd.f32 %v1951, %v2045
        %v2047 = vpop.f32.mrf.mxu0
        %2048 = vdwg.mxu0
        %2049 = vmatpush.bf16.msra.mxu0 0
        %2050 = vmatpush.bf16.msra.mxu0 0
        %2051 = vmatpush.bf16.msra.mxu0 0
        %2052 = vmatpush.bf16.msra.mxu0 0
        %2053 = vmatpush.bf16.msra.mxu0 %v2024
        %2054 = vmatpush.bf16.msra.mxu0 %v2022
        %2055 = vmatpush.bf16.msra.mxu0 %v2020
        %2056 = vmatpush.bf16.msra.mxu0 %v2018
        %2057 = vmatmul.bf16.gmra.mxu0 %v2034
        %v2058 = vpop.f32.mrf.mxu0
        %v2059 = vadd.f32 %v1952, %v2058
        %v2060 = vpop.f32.mrf.mxu0
        %2061 = vdwg.mxu0
        %v2062 = vld [vmem:[%s4] sm:$0xff]
        %v2063 = vld [vmem:[%s4 + $0x8] sm:$0xff]
        %v2064 = vld [vmem:[%s4 + $0x10] sm:$0xff]
        %v2065 = vld [vmem:[%s4 + $0x18] sm:$0xff]
        %v2066 = vld [vmem:[%s4 + $0x20] sm:$0xff]
        %v2067 = vld [vmem:[%s4 + $0x28] sm:$0xff]
        %v2068 = vld [vmem:[%s4 + $0x30] sm:$0xff]
        %v2069 = vld [vmem:[%s4 + $0x38] sm:$0xff]
        %v2078 = vunpack.c.l.b16 %v2062
        %v2079 = vunpack.c.h.b16 %v2062
        %v2080 = vunpack.c.l.b16 %v2063
        %v2081 = vunpack.c.h.b16 %v2063
        %v2082 = vunpack.c.l.b16 %v2064
        %v2083 = vunpack.c.h.b16 %v2064
        %v2084 = vunpack.c.l.b16 %v2065
        %v2085 = vunpack.c.h.b16 %v2065
        %v2086 = vunpack.c.l.b16 %v2066
        %v2087 = vunpack.c.h.b16 %v2066
        %v2088 = vunpack.c.l.b16 %v2067
        %v2089 = vunpack.c.h.b16 %v2067
        %v2090 = vunpack.c.l.b16 %v2068
        %v2091 = vunpack.c.h.b16 %v2068
        %v2092 = vunpack.c.l.b16 %v2069
        %v2093 = vunpack.c.h.b16 %v2069
        %v2094 = vpack.c.b16 %v2080, %v2078
        %v2095 = vpack.c.b16 %v2081, %v2079
        %v2096 = vpack.c.b16 %v2084, %v2082
        %v2097 = vpack.c.b16 %v2085, %v2083
        %v2098 = vpack.c.b16 %v2088, %v2086
        %v2099 = vpack.c.b16 %v2089, %v2087
        %v2100 = vpack.c.b16 %v2092, %v2090
        %v2101 = vpack.c.b16 %v2093, %v2091
        %v2111 = vsel %vm1576, 0, 0
        %2113 = vmatpush.bf16.msra.mxu0 0
        %2114 = vmatpush.bf16.msra.mxu0 0
        %2115 = vmatpush.bf16.msra.mxu0 0
        %2116 = vmatpush.bf16.msra.mxu0 0
        %2117 = vmatpush.bf16.msra.mxu0 %v2100
        %2118 = vmatpush.bf16.msra.mxu0 %v2098
        %2119 = vmatpush.bf16.msra.mxu0 %v2096
        %2120 = vmatpush.bf16.msra.mxu0 %v2094
        %2121 = vmatmul.bf16.gmra.mxu0 %v2111
        %v2122 = vpop.f32.mrf.mxu0
        %v2123 = vadd.f32 0.0, %v2122
        %v2124 = vpop.f32.mrf.mxu0
        %2125 = vdwg.mxu0
        %2126 = vmatpush.bf16.msra.mxu0 0
        %2127 = vmatpush.bf16.msra.mxu0 0
        %2128 = vmatpush.bf16.msra.mxu0 0
        %2129 = vmatpush.bf16.msra.mxu0 0
        %2130 = vmatpush.bf16.msra.mxu0 %v2101
        %2131 = vmatpush.bf16.msra.mxu0 %v2099
        %2132 = vmatpush.bf16.msra.mxu0 %v2097
        %2133 = vmatpush.bf16.msra.mxu0 %v2095
        %2134 = vmatmul.bf16.gmra.mxu0 %v2111
        %v2135 = vpop.f32.mrf.mxu0
        %v2136 = vadd.f32 0.0, %v2135
        %v2137 = vpop.f32.mrf.mxu0
        %2138 = vdwg.mxu0
        %v2139 = vadd.f32 %v2046, %v2123
        %v2140 = vadd.f32 %v2059, %v2136
        %v2141 = vxor.u32 %v2139, 2147483648
        %v2142 = vmul.f32 %v2141, 1.442695
        %v2143 = vpow.pop %v2142
        %v2144 = vadd.f32 %v2143, 1.0
        %v2145 = vrcp.pop %v2144
        %v2146 = vmul.f32 %v2144, %v2145
        %v2147 = vsub.f32 1.0, %v2146
        %v2148 = vmul.f32 %v2145, %v2147
        %v2149 = vadd.f32 %v2145, %v2148
        %vm2150 = vweird.f32 %v2144
        %vm2151 = vweird.f32 %v2145
        %vm2152 = vmor %vm2150, %vm2151
        %v2153 = vsel %vm2152, %v2145, %v2149
        %v2154 = vand.u32 2147483647, %v2144
        %vm2155 = vcmp.eq.f32.partialorder %v2154, 8.507059e+37
        %v2156 = vand.u32 %v2144, 2147483648
        %v2157 = vor.u32 1.1754944e-38, %v2156
        %v2158 = vsel %vm2155, %v2157, %v2153
        %v2159 = vmul.f32 1.0, %v2158
        %v2160 = vtanh.pop %v2140
        %v2161 = vxor.u32 %v2140, 2147483648
        %v2162 = vmul.f32 %v2161, 1.442695
        %v2163 = vpow.pop %v2162
        %v2164 = vadd.f32 %v2163, 1.0
        %v2165 = vrcp.pop %v2164
        %v2166 = vmul.f32 %v2164, %v2165
        %v2167 = vsub.f32 1.0, %v2166
        %v2168 = vmul.f32 %v2165, %v2167
        %v2169 = vadd.f32 %v2165, %v2168
        %vm2170 = vweird.f32 %v2164
        %vm2171 = vweird.f32 %v2165
        %vm2172 = vmor %vm2170, %vm2171
        %v2173 = vsel %vm2172, %v2165, %v2169
        %v2174 = vand.u32 2147483647, %v2164
        %vm2175 = vcmp.eq.f32.partialorder %v2174, 8.507059e+37
        %v2176 = vand.u32 %v2164, 2147483648
        %v2177 = vor.u32 1.1754944e-38, %v2176
        %v2178 = vsel %vm2175, %v2177, %v2173
        %v2179 = vmul.f32 1.0, %v2178
        %v2180 = vmul.f32 %v2159, 0.0
        %v2181 = vmul.f32 %v2159, %v2160
        %2183 = vrot.lane.b32.xlu0 %v2181, 64
        %v2184 = vpop.permute.xlu0 %2183
        %v2186 = vadd.f32 %v2180, %v2184
        %v2187 = vtanh.pop %v2186
        %v2188 = vmul.f32 %v2179, %v2187
        %v2189 = vpack.c.bf16 %v2188, %v2188
        %2191 = vrot.lane.b32.xlu0 %v2189, 64
        %v2192 = vpop.permute.xlu0 %2191
        %v2194 = vsel %vm1576, %v2192, 0
        %2196 = vmatpush.bf16.msra.mxu0 0
        %2197 = vmatpush.bf16.msra.mxu0 0
        %2198 = vmatpush.bf16.msra.mxu0 0
        %2199 = vmatpush.bf16.msra.mxu0 0
        %2200 = vmatpush.bf16.msra.mxu0 %v2100
        %2201 = vmatpush.bf16.msra.mxu0 %v2098
        %2202 = vmatpush.bf16.msra.mxu0 %v2096
        %2203 = vmatpush.bf16.msra.mxu0 %v2094
        %2204 = vmatmul.bf16.gmra.mxu0 %v2194
        %v2205 = vpop.f32.mrf.mxu0
        %v2206 = vadd.f32 0.0, %v2205
        %v2207 = vpop.f32.mrf.mxu0
        %2208 = vdwg.mxu0
        %2209 = vmatpush.bf16.msra.mxu0 0
        %2210 = vmatpush.bf16.msra.mxu0 0
        %2211 = vmatpush.bf16.msra.mxu0 0
        %2212 = vmatpush.bf16.msra.mxu0 0
        %2213 = vmatpush.bf16.msra.mxu0 %v2101
        %2214 = vmatpush.bf16.msra.mxu0 %v2099
        %2215 = vmatpush.bf16.msra.mxu0 %v2097
        %2216 = vmatpush.bf16.msra.mxu0 %v2095
        %2217 = vmatmul.bf16.gmra.mxu0 %v2194
        %v2218 = vpop.f32.mrf.mxu0
        %v2219 = vadd.f32 0.0, %v2218
        %v2220 = vpop.f32.mrf.mxu0
        %2221 = vdwg.mxu0
        %v2224 = vrot.slane %v2206, 7
        %v2225 = vrot.slane %v2219, 7
        %v2228 = vadd.f32 %v2046, %v2224
        %v2229 = vadd.f32 %v2059, %v2225
        %v2230 = vxor.u32 %v2228, 2147483648
        %v2231 = vmul.f32 %v2230, 1.442695
        %v2232 = vpow.pop %v2231
        %v2233 = vadd.f32 %v2232, 1.0
        %v2234 = vrcp.pop %v2233
        %v2235 = vmul.f32 %v2233, %v2234
        %v2236 = vsub.f32 1.0, %v2235
        %v2237 = vmul.f32 %v2234, %v2236
        %v2238 = vadd.f32 %v2234, %v2237
        %vm2239 = vweird.f32 %v2233
        %vm2240 = vweird.f32 %v2234
        %vm2241 = vmor %vm2239, %vm2240
        %v2242 = vsel %vm2241, %v2234, %v2238
        %v2243 = vand.u32 2147483647, %v2233
        %vm2244 = vcmp.eq.f32.partialorder %v2243, 8.507059e+37
        %v2245 = vand.u32 %v2233, 2147483648
        %v2246 = vor.u32 1.1754944e-38, %v2245
        %v2247 = vsel %vm2244, %v2246, %v2242
        %v2248 = vmul.f32 1.0, %v2247
        %v2249 = vtanh.pop %v2229
        %v2250 = vxor.u32 %v2229, 2147483648
        %v2251 = vmul.f32 %v2250, 1.442695
        %v2252 = vpow.pop %v2251
        %v2253 = vadd.f32 %v2252, 1.0
        %v2254 = vrcp.pop %v2253
        %v2255 = vmul.f32 %v2253, %v2254
        %v2256 = vsub.f32 1.0, %v2255
        %v2257 = vmul.f32 %v2254, %v2256
        %v2258 = vadd.f32 %v2254, %v2257
        %vm2259 = vweird.f32 %v2253
        %vm2260 = vweird.f32 %v2254
        %vm2261 = vmor %vm2259, %vm2260
        %v2262 = vsel %vm2261, %v2254, %v2258
        %v2263 = vand.u32 2147483647, %v2253
        %vm2264 = vcmp.eq.f32.partialorder %v2263, 8.507059e+37
        %v2265 = vand.u32 %v2253, 2147483648
        %v2266 = vor.u32 1.1754944e-38, %v2265
        %v2267 = vsel %vm2264, %v2266, %v2262
        %v2268 = vmul.f32 1.0, %v2267
        %v2270 = vrot.slane %v2186, 7
        %v2272 = vmul.f32 %v2248, %v2270
        %v2273 = vmul.f32 %v2248, %v2249
        %2275 = vrot.lane.b32.xlu0 %v2273, 64
        %v2276 = vpop.permute.xlu0 %2275
        %v2278 = vadd.f32 %v2272, %v2276
        %v2279 = vtanh.pop %v2278
        %v2280 = vmul.f32 %v2268, %v2279
        %v2281 = vpack.c.bf16 %v2280, %v2280
        %v2283 = vshrl.u32 %v2281, 16
        %2285 = vrot.lane.b32.xlu0 %v2283, 64
        %v2286 = vpop.permute.xlu0 %2285
        %v2288 = vsel %vm1576, %v2286, 0
        %2290 = vmatpush.bf16.msra.mxu0 0
        %2291 = vmatpush.bf16.msra.mxu0 0
        %2292 = vmatpush.bf16.msra.mxu0 0
        %2293 = vmatpush.bf16.msra.mxu0 0
        %2294 = vmatpush.bf16.msra.mxu0 %v2100
        %2295 = vmatpush.bf16.msra.mxu0 %v2098
        %2296 = vmatpush.bf16.msra.mxu0 %v2096
        %2297 = vmatpush.bf16.msra.mxu0 %v2094
        %2298 = vmatmul.bf16.gmra.mxu0 %v2288
        %v2299 = vpop.f32.mrf.mxu0
        %v2300 = vadd.f32 0.0, %v2299
        %v2301 = vpop.f32.mrf.mxu0
        %2302 = vdwg.mxu0
        %2303 = vmatpush.bf16.msra.mxu0 0
        %2304 = vmatpush.bf16.msra.mxu0 0
        %2305 = vmatpush.bf16.msra.mxu0 0
        %2306 = vmatpush.bf16.msra.mxu0 0
        %2307 = vmatpush.bf16.msra.mxu0 %v2101
        %2308 = vmatpush.bf16.msra.mxu0 %v2099
        %2309 = vmatpush.bf16.msra.mxu0 %v2097
        %2310 = vmatpush.bf16.msra.mxu0 %v2095
        %2311 = vmatmul.bf16.gmra.mxu0 %v2288
        %v2312 = vpop.f32.mrf.mxu0
        %v2313 = vadd.f32 0.0, %v2312
        %v2314 = vpop.f32.mrf.mxu0
        %2315 = vdwg.mxu0
        %v2318 = vrot.slane %v2300, 6
        %v2319 = vrot.slane %v2313, 6
        %v2322 = vadd.f32 %v2046, %v2318
        %v2323 = vadd.f32 %v2059, %v2319
        %v2324 = vxor.u32 %v2322, 2147483648
        %v2325 = vmul.f32 %v2324, 1.442695
        %v2326 = vpow.pop %v2325
        %v2327 = vadd.f32 %v2326, 1.0
        %v2328 = vrcp.pop %v2327
        %v2329 = vmul.f32 %v2327, %v2328
        %v2330 = vsub.f32 1.0, %v2329
        %v2331 = vmul.f32 %v2328, %v2330
        %v2332 = vadd.f32 %v2328, %v2331
        %vm2333 = vweird.f32 %v2327
        %vm2334 = vweird.f32 %v2328
        %vm2335 = vmor %vm2333, %vm2334
        %v2336 = vsel %vm2335, %v2328, %v2332
        %v2337 = vand.u32 2147483647, %v2327
        %vm2338 = vcmp.eq.f32.partialorder %v2337, 8.507059e+37
        %v2339 = vand.u32 %v2327, 2147483648
        %v2340 = vor.u32 1.1754944e-38, %v2339
        %v2341 = vsel %vm2338, %v2340, %v2336
        %v2342 = vmul.f32 1.0, %v2341
        %v2343 = vtanh.pop %v2323
        %v2344 = vxor.u32 %v2323, 2147483648
        %v2345 = vmul.f32 %v2344, 1.442695
        %v2346 = vpow.pop %v2345
        %v2347 = vadd.f32 %v2346, 1.0
        %v2348 = vrcp.pop %v2347
        %v2349 = vmul.f32 %v2347, %v2348
        %v2350 = vsub.f32 1.0, %v2349
        %v2351 = vmul.f32 %v2348, %v2350
        %v2352 = vadd.f32 %v2348, %v2351
        %vm2353 = vweird.f32 %v2347
        %vm2354 = vweird.f32 %v2348
        %vm2355 = vmor %vm2353, %vm2354
        %v2356 = vsel %vm2355, %v2348, %v2352
        %v2357 = vand.u32 2147483647, %v2347
        %vm2358 = vcmp.eq.f32.partialorder %v2357, 8.507059e+37
        %v2359 = vand.u32 %v2347, 2147483648
        %v2360 = vor.u32 1.1754944e-38, %v2359
        %v2361 = vsel %vm2358, %v2360, %v2356
        %v2362 = vmul.f32 1.0, %v2361
        %v2364 = vrot.slane %v2278, 7
        %v2366 = vmul.f32 %v2342, %v2364
        %v2367 = vmul.f32 %v2342, %v2343
        %2369 = vrot.lane.b32.xlu0 %v2367, 64
        %v2370 = vpop.permute.xlu0 %2369
        %v2372 = vadd.f32 %v2366, %v2370
        %v2373 = vtanh.pop %v2372
        %v2374 = vmul.f32 %v2362, %v2373
        %v2375 = vpack.c.bf16 %v2374, %v2374
        %v2377 = vrot.slane %v2375, 1
        %2378 = vrot.lane.b32.xlu0 %v2377, 64
        %v2379 = vpop.permute.xlu0 %2378
        %v2381 = vsel %vm1576, %v2379, 0
        %2383 = vmatpush.bf16.msra.mxu0 0
        %2384 = vmatpush.bf16.msra.mxu0 0
        %2385 = vmatpush.bf16.msra.mxu0 0
        %2386 = vmatpush.bf16.msra.mxu0 0
        %2387 = vmatpush.bf16.msra.mxu0 %v2100
        %2388 = vmatpush.bf16.msra.mxu0 %v2098
        %2389 = vmatpush.bf16.msra.mxu0 %v2096
        %2390 = vmatpush.bf16.msra.mxu0 %v2094
        %2391 = vmatmul.bf16.gmra.mxu0 %v2381
        %v2392 = vpop.f32.mrf.mxu0
        %v2393 = vadd.f32 0.0, %v2392
        %v2394 = vpop.f32.mrf.mxu0
        %2395 = vdwg.mxu0
        %2396 = vmatpush.bf16.msra.mxu0 0
        %2397 = vmatpush.bf16.msra.mxu0 0
        %2398 = vmatpush.bf16.msra.mxu0 0
        %2399 = vmatpush.bf16.msra.mxu0 0
        %2400 = vmatpush.bf16.msra.mxu0 %v2101
        %2401 = vmatpush.bf16.msra.mxu0 %v2099
        %2402 = vmatpush.bf16.msra.mxu0 %v2097
        %2403 = vmatpush.bf16.msra.mxu0 %v2095
        %2404 = vmatmul.bf16.gmra.mxu0 %v2381
        %v2405 = vpop.f32.mrf.mxu0
        %v2406 = vadd.f32 0.0, %v2405
        %v2407 = vpop.f32.mrf.mxu0
        %2408 = vdwg.mxu0
        %v2411 = vrot.slane %v2393, 5
        %v2412 = vrot.slane %v2406, 5
        %v2415 = vadd.f32 %v2046, %v2411
        %v2416 = vadd.f32 %v2059, %v2412
        %v2417 = vxor.u32 %v2415, 2147483648
        %v2418 = vmul.f32 %v2417, 1.442695
        %v2419 = vpow.pop %v2418
        %v2420 = vadd.f32 %v2419, 1.0
        %v2421 = vrcp.pop %v2420
        %v2422 = vmul.f32 %v2420, %v2421
        %v2423 = vsub.f32 1.0, %v2422
        %v2424 = vmul.f32 %v2421, %v2423
        %v2425 = vadd.f32 %v2421, %v2424
        %vm2426 = vweird.f32 %v2420
        %vm2427 = vweird.f32 %v2421
        %vm2428 = vmor %vm2426, %vm2427
        %v2429 = vsel %vm2428, %v2421, %v2425
        %v2430 = vand.u32 2147483647, %v2420
        %vm2431 = vcmp.eq.f32.partialorder %v2430, 8.507059e+37
        %v2432 = vand.u32 %v2420, 2147483648
        %v2433 = vor.u32 1.1754944e-38, %v2432
        %v2434 = vsel %vm2431, %v2433, %v2429
        %v2435 = vmul.f32 1.0, %v2434
        %v2436 = vtanh.pop %v2416
        %v2437 = vxor.u32 %v2416, 2147483648
        %v2438 = vmul.f32 %v2437, 1.442695
        %v2439 = vpow.pop %v2438
        %v2440 = vadd.f32 %v2439, 1.0
        %v2441 = vrcp.pop %v2440
        %v2442 = vmul.f32 %v2440, %v2441
        %v2443 = vsub.f32 1.0, %v2442
        %v2444 = vmul.f32 %v2441, %v2443
        %v2445 = vadd.f32 %v2441, %v2444
        %vm2446 = vweird.f32 %v2440
        %vm2447 = vweird.f32 %v2441
        %vm2448 = vmor %vm2446, %vm2447
        %v2449 = vsel %vm2448, %v2441, %v2445
        %v2450 = vand.u32 2147483647, %v2440
        %vm2451 = vcmp.eq.f32.partialorder %v2450, 8.507059e+37
        %v2452 = vand.u32 %v2440, 2147483648
        %v2453 = vor.u32 1.1754944e-38, %v2452
        %v2454 = vsel %vm2451, %v2453, %v2449
        %v2455 = vmul.f32 1.0, %v2454
        %v2457 = vrot.slane %v2372, 7
        %v2459 = vmul.f32 %v2435, %v2457
        %v2460 = vmul.f32 %v2435, %v2436
        %2462 = vrot.lane.b32.xlu0 %v2460, 64
        %v2463 = vpop.permute.xlu0 %2462
        %v2465 = vadd.f32 %v2459, %v2463
        %v2466 = vtanh.pop %v2465
        %v2467 = vmul.f32 %v2455, %v2466
        %v2468 = vpack.c.bf16 %v2467, %v2467
        %v2470 = vshrl.u32 %v2468, 16
        %v2472 = vrot.slane %v2470, 1
        %2473 = vrot.lane.b32.xlu0 %v2472, 64
        %v2474 = vpop.permute.xlu0 %2473
        %v2476 = vsel %vm1576, %v2474, 0
        %2478 = vmatpush.bf16.msra.mxu0 0
        %2479 = vmatpush.bf16.msra.mxu0 0
        %2480 = vmatpush.bf16.msra.mxu0 0
        %2481 = vmatpush.bf16.msra.mxu0 0
        %2482 = vmatpush.bf16.msra.mxu0 %v2100
        %2483 = vmatpush.bf16.msra.mxu0 %v2098
        %2484 = vmatpush.bf16.msra.mxu0 %v2096
        %2485 = vmatpush.bf16.msra.mxu0 %v2094
        %2486 = vmatmul.bf16.gmra.mxu0 %v2476
        %v2487 = vpop.f32.mrf.mxu0
        %v2488 = vadd.f32 0.0, %v2487
        %v2489 = vpop.f32.mrf.mxu0
        %2490 = vdwg.mxu0
        %2491 = vmatpush.bf16.msra.mxu0 0
        %2492 = vmatpush.bf16.msra.mxu0 0
        %2493 = vmatpush.bf16.msra.mxu0 0
        %2494 = vmatpush.bf16.msra.mxu0 0
        %2495 = vmatpush.bf16.msra.mxu0 %v2101
        %2496 = vmatpush.bf16.msra.mxu0 %v2099
        %2497 = vmatpush.bf16.msra.mxu0 %v2097
        %2498 = vmatpush.bf16.msra.mxu0 %v2095
        %2499 = vmatmul.bf16.gmra.mxu0 %v2476
        %v2500 = vpop.f32.mrf.mxu0
        %v2501 = vadd.f32 0.0, %v2500
        %v2502 = vpop.f32.mrf.mxu0
        %2503 = vdwg.mxu0
        %v2506 = vrot.slane %v2488, 4
        %v2507 = vrot.slane %v2501, 4
        %v2510 = vadd.f32 %v2046, %v2506
        %v2511 = vadd.f32 %v2059, %v2507
        %v2512 = vxor.u32 %v2510, 2147483648
        %v2513 = vmul.f32 %v2512, 1.442695
        %v2514 = vpow.pop %v2513
        %v2515 = vadd.f32 %v2514, 1.0
        %v2516 = vrcp.pop %v2515
        %v2517 = vmul.f32 %v2515, %v2516
        %v2518 = vsub.f32 1.0, %v2517
        %v2519 = vmul.f32 %v2516, %v2518
        %v2520 = vadd.f32 %v2516, %v2519
        %vm2521 = vweird.f32 %v2515
        %vm2522 = vweird.f32 %v2516
        %vm2523 = vmor %vm2521, %vm2522
        %v2524 = vsel %vm2523, %v2516, %v2520
        %v2525 = vand.u32 2147483647, %v2515
        %vm2526 = vcmp.eq.f32.partialorder %v2525, 8.507059e+37
        %v2527 = vand.u32 %v2515, 2147483648
        %v2528 = vor.u32 1.1754944e-38, %v2527
        %v2529 = vsel %vm2526, %v2528, %v2524
        %v2530 = vmul.f32 1.0, %v2529
        %v2531 = vtanh.pop %v2511
        %v2532 = vxor.u32 %v2511, 2147483648
        %v2533 = vmul.f32 %v2532, 1.442695
        %v2534 = vpow.pop %v2533
        %v2535 = vadd.f32 %v2534, 1.0
        %v2536 = vrcp.pop %v2535
        %v2537 = vmul.f32 %v2535, %v2536
        %v2538 = vsub.f32 1.0, %v2537
        %v2539 = vmul.f32 %v2536, %v2538
        %v2540 = vadd.f32 %v2536, %v2539
        %vm2541 = vweird.f32 %v2535
        %vm2542 = vweird.f32 %v2536
        %vm2543 = vmor %vm2541, %vm2542
        %v2544 = vsel %vm2543, %v2536, %v2540
        %v2545 = vand.u32 2147483647, %v2535
        %vm2546 = vcmp.eq.f32.partialorder %v2545, 8.507059e+37
        %v2547 = vand.u32 %v2535, 2147483648
        %v2548 = vor.u32 1.1754944e-38, %v2547
        %v2549 = vsel %vm2546, %v2548, %v2544
        %v2550 = vmul.f32 1.0, %v2549
        %v2552 = vrot.slane %v2465, 7
        %v2554 = vmul.f32 %v2530, %v2552
        %v2555 = vmul.f32 %v2530, %v2531
        %2557 = vrot.lane.b32.xlu0 %v2555, 64
        %v2558 = vpop.permute.xlu0 %2557
        %v2560 = vadd.f32 %v2554, %v2558
        %v2561 = vtanh.pop %v2560
        %v2562 = vmul.f32 %v2550, %v2561
        %v2563 = vpack.c.bf16 %v2562, %v2562
        %v2565 = vrot.slane %v2563, 2
        %2566 = vrot.lane.b32.xlu0 %v2565, 64
        %v2567 = vpop.permute.xlu0 %2566
        %v2569 = vsel %vm1576, %v2567, 0
        %2571 = vmatpush.bf16.msra.mxu0 0
        %2572 = vmatpush.bf16.msra.mxu0 0
        %2573 = vmatpush.bf16.msra.mxu0 0
        %2574 = vmatpush.bf16.msra.mxu0 0
        %2575 = vmatpush.bf16.msra.mxu0 %v2100
        %2576 = vmatpush.bf16.msra.mxu0 %v2098
        %2577 = vmatpush.bf16.msra.mxu0 %v2096
        %2578 = vmatpush.bf16.msra.mxu0 %v2094
        %2579 = vmatmul.bf16.gmra.mxu0 %v2569
        %v2580 = vpop.f32.mrf.mxu0
        %v2581 = vadd.f32 0.0, %v2580
        %v2582 = vpop.f32.mrf.mxu0
        %2583 = vdwg.mxu0
        %2584 = vmatpush.bf16.msra.mxu0 0
        %2585 = vmatpush.bf16.msra.mxu0 0
        %2586 = vmatpush.bf16.msra.mxu0 0
        %2587 = vmatpush.bf16.msra.mxu0 0
        %2588 = vmatpush.bf16.msra.mxu0 %v2101
        %2589 = vmatpush.bf16.msra.mxu0 %v2099
        %2590 = vmatpush.bf16.msra.mxu0 %v2097
        %2591 = vmatpush.bf16.msra.mxu0 %v2095
        %2592 = vmatmul.bf16.gmra.mxu0 %v2569
        %v2593 = vpop.f32.mrf.mxu0
        %v2594 = vadd.f32 0.0, %v2593
        %v2595 = vpop.f32.mrf.mxu0
        %2596 = vdwg.mxu0
        %v2599 = vrot.slane %v2581, 3
        %v2600 = vrot.slane %v2594, 3
        %v2603 = vadd.f32 %v2046, %v2599
        %v2604 = vadd.f32 %v2059, %v2600
        %v2605 = vxor.u32 %v2603, 2147483648
        %v2606 = vmul.f32 %v2605, 1.442695
        %v2607 = vpow.pop %v2606
        %v2608 = vadd.f32 %v2607, 1.0
        %v2609 = vrcp.pop %v2608
        %v2610 = vmul.f32 %v2608, %v2609
        %v2611 = vsub.f32 1.0, %v2610
        %v2612 = vmul.f32 %v2609, %v2611
        %v2613 = vadd.f32 %v2609, %v2612
        %vm2614 = vweird.f32 %v2608
        %vm2615 = vweird.f32 %v2609
        %vm2616 = vmor %vm2614, %vm2615
        %v2617 = vsel %vm2616, %v2609, %v2613
        %v2618 = vand.u32 2147483647, %v2608
        %vm2619 = vcmp.eq.f32.partialorder %v2618, 8.507059e+37
        %v2620 = vand.u32 %v2608, 2147483648
        %v2621 = vor.u32 1.1754944e-38, %v2620
        %v2622 = vsel %vm2619, %v2621, %v2617
        %v2623 = vmul.f32 1.0, %v2622
        %v2624 = vtanh.pop %v2604
        %v2625 = vxor.u32 %v2604, 2147483648
        %v2626 = vmul.f32 %v2625, 1.442695
        %v2627 = vpow.pop %v2626
        %v2628 = vadd.f32 %v2627, 1.0
        %v2629 = vrcp.pop %v2628
        %v2630 = vmul.f32 %v2628, %v2629
        %v2631 = vsub.f32 1.0, %v2630
        %v2632 = vmul.f32 %v2629, %v2631
        %v2633 = vadd.f32 %v2629, %v2632
        %vm2634 = vweird.f32 %v2628
        %vm2635 = vweird.f32 %v2629
        %vm2636 = vmor %vm2634, %vm2635
        %v2637 = vsel %vm2636, %v2629, %v2633
        %v2638 = vand.u32 2147483647, %v2628
        %vm2639 = vcmp.eq.f32.partialorder %v2638, 8.507059e+37
        %v2640 = vand.u32 %v2628, 2147483648
        %v2641 = vor.u32 1.1754944e-38, %v2640
        %v2642 = vsel %vm2639, %v2641, %v2637
        %v2643 = vmul.f32 1.0, %v2642
        %v2645 = vrot.slane %v2560, 7
        %v2647 = vmul.f32 %v2623, %v2645
        %v2648 = vmul.f32 %v2623, %v2624
        %2650 = vrot.lane.b32.xlu0 %v2648, 64
        %v2651 = vpop.permute.xlu0 %2650
        %v2653 = vadd.f32 %v2647, %v2651
        %v2654 = vtanh.pop %v2653
        %v2655 = vmul.f32 %v2643, %v2654
        %v2656 = vpack.c.bf16 %v2655, %v2655
        %v2658 = vshrl.u32 %v2656, 16
        %v2660 = vrot.slane %v2658, 2
        %2661 = vrot.lane.b32.xlu0 %v2660, 64
        %v2662 = vpop.permute.xlu0 %2661
        %v2664 = vsel %vm1576, %v2662, 0
        %2666 = vmatpush.bf16.msra.mxu0 0
        %2667 = vmatpush.bf16.msra.mxu0 0
        %2668 = vmatpush.bf16.msra.mxu0 0
        %2669 = vmatpush.bf16.msra.mxu0 0
        %2670 = vmatpush.bf16.msra.mxu0 %v2100
        %2671 = vmatpush.bf16.msra.mxu0 %v2098
        %2672 = vmatpush.bf16.msra.mxu0 %v2096
        %2673 = vmatpush.bf16.msra.mxu0 %v2094
        %2674 = vmatmul.bf16.gmra.mxu0 %v2664
        %v2675 = vpop.f32.mrf.mxu0
        %v2676 = vadd.f32 0.0, %v2675
        %v2677 = vpop.f32.mrf.mxu0
        %2678 = vdwg.mxu0
        %2679 = vmatpush.bf16.msra.mxu0 0
        %2680 = vmatpush.bf16.msra.mxu0 0
        %2681 = vmatpush.bf16.msra.mxu0 0
        %2682 = vmatpush.bf16.msra.mxu0 0
        %2683 = vmatpush.bf16.msra.mxu0 %v2101
        %2684 = vmatpush.bf16.msra.mxu0 %v2099
        %2685 = vmatpush.bf16.msra.mxu0 %v2097
        %2686 = vmatpush.bf16.msra.mxu0 %v2095
        %2687 = vmatmul.bf16.gmra.mxu0 %v2664
        %v2688 = vpop.f32.mrf.mxu0
        %v2689 = vadd.f32 0.0, %v2688
        %v2690 = vpop.f32.mrf.mxu0
        %2691 = vdwg.mxu0
        %v2694 = vrot.slane %v2676, 2
        %v2695 = vrot.slane %v2689, 2
        %v2698 = vadd.f32 %v2046, %v2694
        %v2699 = vadd.f32 %v2059, %v2695
        %v2700 = vxor.u32 %v2698, 2147483648
        %v2701 = vmul.f32 %v2700, 1.442695
        %v2702 = vpow.pop %v2701
        %v2703 = vadd.f32 %v2702, 1.0
        %v2704 = vrcp.pop %v2703
        %v2705 = vmul.f32 %v2703, %v2704
        %v2706 = vsub.f32 1.0, %v2705
        %v2707 = vmul.f32 %v2704, %v2706
        %v2708 = vadd.f32 %v2704, %v2707
        %vm2709 = vweird.f32 %v2703
        %vm2710 = vweird.f32 %v2704
        %vm2711 = vmor %vm2709, %vm2710
        %v2712 = vsel %vm2711, %v2704, %v2708
        %v2713 = vand.u32 2147483647, %v2703
        %vm2714 = vcmp.eq.f32.partialorder %v2713, 8.507059e+37
        %v2715 = vand.u32 %v2703, 2147483648
        %v2716 = vor.u32 1.1754944e-38, %v2715
        %v2717 = vsel %vm2714, %v2716, %v2712
        %v2718 = vmul.f32 1.0, %v2717
        %v2719 = vtanh.pop %v2699
        %v2720 = vxor.u32 %v2699, 2147483648
        %v2721 = vmul.f32 %v2720, 1.442695
        %v2722 = vpow.pop %v2721
        %v2723 = vadd.f32 %v2722, 1.0
        %v2724 = vrcp.pop %v2723
        %v2725 = vmul.f32 %v2723, %v2724
        %v2726 = vsub.f32 1.0, %v2725
        %v2727 = vmul.f32 %v2724, %v2726
        %v2728 = vadd.f32 %v2724, %v2727
        %vm2729 = vweird.f32 %v2723
        %vm2730 = vweird.f32 %v2724
        %vm2731 = vmor %vm2729, %vm2730
        %v2732 = vsel %vm2731, %v2724, %v2728
        %v2733 = vand.u32 2147483647, %v2723
        %vm2734 = vcmp.eq.f32.partialorder %v2733, 8.507059e+37
        %v2735 = vand.u32 %v2723, 2147483648
        %v2736 = vor.u32 1.1754944e-38, %v2735
        %v2737 = vsel %vm2734, %v2736, %v2732
        %v2738 = vmul.f32 1.0, %v2737
        %v2740 = vrot.slane %v2653, 7
        %v2742 = vmul.f32 %v2718, %v2740
        %v2743 = vmul.f32 %v2718, %v2719
        %2745 = vrot.lane.b32.xlu0 %v2743, 64
        %v2746 = vpop.permute.xlu0 %2745
        %v2748 = vadd.f32 %v2742, %v2746
        %v2749 = vtanh.pop %v2748
        %v2750 = vmul.f32 %v2738, %v2749
        %v2751 = vpack.c.bf16 %v2750, %v2750
        %v2753 = vrot.slane %v2751, 3
        %2754 = vrot.lane.b32.xlu0 %v2753, 64
        %v2755 = vpop.permute.xlu0 %2754
        %v2757 = vsel %vm1576, %v2755, 0
        %2759 = vmatpush.bf16.msra.mxu0 0
        %2760 = vmatpush.bf16.msra.mxu0 0
        %2761 = vmatpush.bf16.msra.mxu0 0
        %2762 = vmatpush.bf16.msra.mxu0 0
        %2763 = vmatpush.bf16.msra.mxu0 %v2100
        %2764 = vmatpush.bf16.msra.mxu0 %v2098
        %2765 = vmatpush.bf16.msra.mxu0 %v2096
        %2766 = vmatpush.bf16.msra.mxu0 %v2094
        %2767 = vmatmul.bf16.gmra.mxu0 %v2757
        %v2768 = vpop.f32.mrf.mxu0
        %v2769 = vadd.f32 0.0, %v2768
        %v2770 = vpop.f32.mrf.mxu0
        %2771 = vdwg.mxu0
        %2772 = vmatpush.bf16.msra.mxu0 0
        %2773 = vmatpush.bf16.msra.mxu0 0
        %2774 = vmatpush.bf16.msra.mxu0 0
        %2775 = vmatpush.bf16.msra.mxu0 0
        %2776 = vmatpush.bf16.msra.mxu0 %v2101
        %2777 = vmatpush.bf16.msra.mxu0 %v2099
        %2778 = vmatpush.bf16.msra.mxu0 %v2097
        %2779 = vmatpush.bf16.msra.mxu0 %v2095
        %2780 = vmatmul.bf16.gmra.mxu0 %v2757
        %v2781 = vpop.f32.mrf.mxu0
        %v2782 = vadd.f32 0.0, %v2781
        %v2783 = vpop.f32.mrf.mxu0
        %2784 = vdwg.mxu0
        %v2787 = vrot.slane %v2769, 1
        %v2788 = vrot.slane %v2782, 1
        %v2791 = vadd.f32 %v2046, %v2787
        %v2792 = vadd.f32 %v2059, %v2788
        %v2793 = vxor.u32 %v2791, 2147483648
        %v2794 = vmul.f32 %v2793, 1.442695
        %v2795 = vpow.pop %v2794
        %v2796 = vadd.f32 %v2795, 1.0
        %v2797 = vrcp.pop %v2796
        %v2798 = vmul.f32 %v2796, %v2797
        %v2799 = vsub.f32 1.0, %v2798
        %v2800 = vmul.f32 %v2797, %v2799
        %v2801 = vadd.f32 %v2797, %v2800
        %vm2802 = vweird.f32 %v2796
        %vm2803 = vweird.f32 %v2797
        %vm2804 = vmor %vm2802, %vm2803
        %v2805 = vsel %vm2804, %v2797, %v2801
        %v2806 = vand.u32 2147483647, %v2796
        %vm2807 = vcmp.eq.f32.partialorder %v2806, 8.507059e+37
        %v2808 = vand.u32 %v2796, 2147483648
        %v2809 = vor.u32 1.1754944e-38, %v2808
        %v2810 = vsel %vm2807, %v2809, %v2805
        %v2811 = vmul.f32 1.0, %v2810
        %v2812 = vtanh.pop %v2792
        %v2813 = vxor.u32 %v2792, 2147483648
        %v2814 = vmul.f32 %v2813, 1.442695
        %v2815 = vpow.pop %v2814
        %v2816 = vadd.f32 %v2815, 1.0
        %v2817 = vrcp.pop %v2816
        %v2818 = vmul.f32 %v2816, %v2817
        %v2819 = vsub.f32 1.0, %v2818
        %v2820 = vmul.f32 %v2817, %v2819
        %v2821 = vadd.f32 %v2817, %v2820
        %vm2822 = vweird.f32 %v2816
        %vm2823 = vweird.f32 %v2817
        %vm2824 = vmor %vm2822, %vm2823
        %v2825 = vsel %vm2824, %v2817, %v2821
        %v2826 = vand.u32 2147483647, %v2816
        %vm2827 = vcmp.eq.f32.partialorder %v2826, 8.507059e+37
        %v2828 = vand.u32 %v2816, 2147483648
        %v2829 = vor.u32 1.1754944e-38, %v2828
        %v2830 = vsel %vm2827, %v2829, %v2825
        %v2831 = vmul.f32 1.0, %v2830
        %v2833 = vrot.slane %v2748, 7
        %v2835 = vmul.f32 %v2811, %v2833
        %v2836 = vmul.f32 %v2811, %v2812
        %2838 = vrot.lane.b32.xlu0 %v2836, 64
        %v2839 = vpop.permute.xlu0 %2838
        %v2841 = vadd.f32 %v2835, %v2839
        %v2842 = vtanh.pop %v2841
        %v2843 = vmul.f32 %v2831, %v2842
        %v2844 = vpack.c.bf16 %v2843, %v2843
        %v2845 = vld [vmem:[%s6] sm:$0xff]
        %v2846 = vld [vmem:[%s6 + $0x8] sm:$0xff]
        %v2847 = vld [vmem:[%s6 + $0x10] sm:$0xff]
        %v2848 = vld [vmem:[%s6 + $0x18] sm:$0xff]
        %v2849 = vld [vmem:[%s6 + $0x20] sm:$0xff]
        %v2850 = vld [vmem:[%s6 + $0x28] sm:$0xff]
        %v2851 = vld [vmem:[%s6 + $0x30] sm:$0xff]
        %v2852 = vld [vmem:[%s6 + $0x38] sm:$0xff]
        %v2853 = vld [vmem:[%s7] sm:$0x3]
        %v2855 = vshrl.u32 %v2844, 16
        %v2857 = vrot.slane %v2855, 3
        %2858 = vrot.lane.b32.xlu0 %v2857, 64
        %v2859 = vpop.permute.xlu0 %2858
        %v2868 = vunpack.c.l.b16 %v2845
        %v2869 = vunpack.c.h.b16 %v2845
        %v2870 = vunpack.c.l.b16 %v2846
        %v2871 = vunpack.c.h.b16 %v2846
        %v2872 = vunpack.c.l.b16 %v2847
        %v2873 = vunpack.c.h.b16 %v2847
        %v2874 = vunpack.c.l.b16 %v2848
        %v2875 = vunpack.c.h.b16 %v2848
        %v2876 = vunpack.c.l.b16 %v2849
        %v2877 = vunpack.c.h.b16 %v2849
        %v2878 = vunpack.c.l.b16 %v2850
        %v2879 = vunpack.c.h.b16 %v2850
        %v2880 = vunpack.c.l.b16 %v2851
        %v2881 = vunpack.c.h.b16 %v2851
        %v2882 = vunpack.c.l.b16 %v2852
        %v2883 = vunpack.c.h.b16 %v2852
        %v2884 = vpack.c.b16 %v2870, %v2868
        %v2885 = vpack.c.b16 %v2871, %v2869
        %v2886 = vpack.c.b16 %v2874, %v2872
        %v2887 = vpack.c.b16 %v2875, %v2873
        %v2888 = vpack.c.b16 %v2878, %v2876
        %v2889 = vpack.c.b16 %v2879, %v2877
        %v2890 = vpack.c.b16 %v2882, %v2880
        %v2891 = vpack.c.b16 %v2883, %v2881
        %v2901 = vperm.slane %v2853, 0
        %v2902 = vperm.slane %v2853, 1
        %v2906 = vsel %vm1576, %v2859, 0
        %2908 = vmatpush.bf16.msra.mxu0 0
        %2909 = vmatpush.bf16.msra.mxu0 0
        %2910 = vmatpush.bf16.msra.mxu0 0
        %2911 = vmatpush.bf16.msra.mxu0 0
        %2912 = vmatpush.bf16.msra.mxu0 %v2890
        %2913 = vmatpush.bf16.msra.mxu0 %v2888
        %2914 = vmatpush.bf16.msra.mxu0 %v2886
        %2915 = vmatpush.bf16.msra.mxu0 %v2884
        %2916 = vmatmul.bf16.gmra.mxu0 %v2906
        %v2917 = vpop.f32.mrf.mxu0
        %v2918 = vadd.f32 %v2901, %v2917
        %v2919 = vpop.f32.mrf.mxu0
        %2920 = vdwg.mxu0
        %2921 = vmatpush.bf16.msra.mxu0 0
        %2922 = vmatpush.bf16.msra.mxu0 0
        %2923 = vmatpush.bf16.msra.mxu0 0
        %2924 = vmatpush.bf16.msra.mxu0 0
        %2925 = vmatpush.bf16.msra.mxu0 %v2891
        %2926 = vmatpush.bf16.msra.mxu0 %v2889
        %2927 = vmatpush.bf16.msra.mxu0 %v2887
        %2928 = vmatpush.bf16.msra.mxu0 %v2885
        %2929 = vmatmul.bf16.gmra.mxu0 %v2906
        %v2930 = vpop.f32.mrf.mxu0
        %v2931 = vadd.f32 %v2902, %v2930
        %v2932 = vpop.f32.mrf.mxu0
        %2933 = vdwg.mxu0
        %v2934 = vmax.f32 %v2918, 0.0
        %v2935 = vmax.f32 %v2931, 0.0
        %v2936 = vpack.c.bf16 %v2934, %v2934
        %v2937 = vpack.c.bf16 %v2935, %v2935
        %v2938 = vld [vmem:[%s8] sm:$0xf]
        %v2939 = vld [vmem:[%s8 + $0x4] sm:$0xf]
        %v2940 = vld [vmem:[%s8 + $0x8] sm:$0xf]
        %v2941 = vld [vmem:[%s8 + $0xc] sm:$0xf]
        %v2942 = vld [vmem:[%s8 + $0x10] sm:$0xf]
        %v2943 = vld [vmem:[%s8 + $0x14] sm:$0xf]
        %v2944 = vld [vmem:[%s8 + $0x18] sm:$0xf]
        %v2945 = vld [vmem:[%s8 + $0x1c] sm:$0xf]
        %v2946 = vld [vmem:[%s8 + $0x20] sm:$0xf]
        %v2947 = vld [vmem:[%s8 + $0x24] sm:$0xf]
        %v2948 = vld [vmem:[%s8 + $0x28] sm:$0xf]
        %v2949 = vld [vmem:[%s8 + $0x2c] sm:$0xf]
        %v2950 = vld [vmem:[%s8 + $0x30] sm:$0xf]
        %v2951 = vld [vmem:[%s8 + $0x34] sm:$0xf]
        %v2952 = vld [vmem:[%s8 + $0x38] sm:$0xf]
        %v2953 = vld [vmem:[%s8 + $0x3c] sm:$0xf]
        %v2954 = vld [vmem:[%s8 + $0x40] sm:$0xf]
        %v2955 = vld [vmem:[%s8 + $0x44] sm:$0xf]
        %v2956 = vld [vmem:[%s8 + $0x48] sm:$0xf]
        %v2957 = vld [vmem:[%s8 + $0x4c] sm:$0xf]
        %v2958 = vld [vmem:[%s8 + $0x50] sm:$0xf]
        %v2959 = vld [vmem:[%s8 + $0x54] sm:$0xf]
        %v2960 = vld [vmem:[%s8 + $0x58] sm:$0xf]
        %v2961 = vld [vmem:[%s8 + $0x5c] sm:$0xf]
        %v2962 = vld [vmem:[%s8 + $0x60] sm:$0xf]
        %v2963 = vld [vmem:[%s8 + $0x64] sm:$0xf]
        %v2964 = vld [vmem:[%s8 + $0x68] sm:$0xf]
        %v2965 = vld [vmem:[%s8 + $0x6c] sm:$0xf]
        %v2966 = vld [vmem:[%s8 + $0x70] sm:$0xf]
        %v2967 = vld [vmem:[%s8 + $0x74] sm:$0xf]
        %v2968 = vld [vmem:[%s8 + $0x78] sm:$0xf]
        %v2969 = vld [vmem:[%s8 + $0x7c] sm:$0xf]
        %v2970 = vld [vmem:[%s9] sm:$0x1]
        %v3003 = vunpack.c.l.b16 %v2938
        %v3004 = vunpack.c.l.b16 %v2939
        %v3005 = vunpack.c.l.b16 %v2940
        %v3006 = vunpack.c.l.b16 %v2941
        %v3007 = vunpack.c.l.b16 %v2942
        %v3008 = vunpack.c.l.b16 %v2943
        %v3009 = vunpack.c.l.b16 %v2944
        %v3010 = vunpack.c.l.b16 %v2945
        %v3011 = vunpack.c.l.b16 %v2946
        %v3012 = vunpack.c.l.b16 %v2947
        %v3013 = vunpack.c.l.b16 %v2948
        %v3014 = vunpack.c.l.b16 %v2949
        %v3015 = vunpack.c.l.b16 %v2950
        %v3016 = vunpack.c.l.b16 %v2951
        %v3017 = vunpack.c.l.b16 %v2952
        %v3018 = vunpack.c.l.b16 %v2953
        %v3019 = vunpack.c.l.b16 %v2954
        %v3020 = vunpack.c.l.b16 %v2955
        %v3021 = vunpack.c.l.b16 %v2956
        %v3022 = vunpack.c.l.b16 %v2957
        %v3023 = vunpack.c.l.b16 %v2958
        %v3024 = vunpack.c.l.b16 %v2959
        %v3025 = vunpack.c.l.b16 %v2960
        %v3026 = vunpack.c.l.b16 %v2961
        %v3027 = vunpack.c.l.b16 %v2962
        %v3028 = vunpack.c.l.b16 %v2963
        %v3029 = vunpack.c.l.b16 %v2964
        %v3030 = vunpack.c.l.b16 %v2965
        %v3031 = vunpack.c.l.b16 %v2966
        %v3032 = vunpack.c.l.b16 %v2967
        %v3033 = vunpack.c.l.b16 %v2968
        %v3034 = vunpack.c.l.b16 %v2969
        %v3035 = vpack.c.b16 %v3004, %v3003
        %v3036 = vpack.c.b16 %v3006, %v3005
        %v3037 = vpack.c.b16 %v3008, %v3007
        %v3038 = vpack.c.b16 %v3010, %v3009
        %v3039 = vpack.c.b16 %v3012, %v3011
        %v3040 = vpack.c.b16 %v3014, %v3013
        %v3041 = vpack.c.b16 %v3016, %v3015
        %v3042 = vpack.c.b16 %v3018, %v3017
        %v3043 = vpack.c.b16 %v3020, %v3019
        %v3044 = vpack.c.b16 %v3022, %v3021
        %v3045 = vpack.c.b16 %v3024, %v3023
        %v3046 = vpack.c.b16 %v3026, %v3025
        %v3047 = vpack.c.b16 %v3028, %v3027
        %v3048 = vpack.c.b16 %v3030, %v3029
        %v3049 = vpack.c.b16 %v3032, %v3031
        %v3050 = vpack.c.b16 %v3034, %v3033
        %3067 = vmatpush.bf16.msra.mxu0 %v3042
        %3068 = vmatpush.bf16.msra.mxu0 %v3041
        %3069 = vmatpush.bf16.msra.mxu0 %v3040
        %3070 = vmatpush.bf16.msra.mxu0 %v3039
        %3071 = vmatpush.bf16.msra.mxu0 %v3038
        %3072 = vmatpush.bf16.msra.mxu0 %v3037
        %3073 = vmatpush.bf16.msra.mxu0 %v3036
        %3074 = vmatpush.bf16.msra.mxu0 %v3035
        %3075 = vmatmul.bf16.gmra.mxu0 %v2936
        %v3076 = vpop.f32.mrf.mxu0
        %v3077 = vadd.f32 %v2970, %v3076
        %v3078 = vpop.f32.mrf.mxu0
        %3079 = vdwg.mxu0
        %3080 = vmatpush.bf16.msra.mxu0 %v3050
        %3081 = vmatpush.bf16.msra.mxu0 %v3049
        %3082 = vmatpush.bf16.msra.mxu0 %v3048
        %3083 = vmatpush.bf16.msra.mxu0 %v3047
        %3084 = vmatpush.bf16.msra.mxu0 %v3046
        %3085 = vmatpush.bf16.msra.mxu0 %v3045
        %3086 = vmatpush.bf16.msra.mxu0 %v3044
        %3087 = vmatpush.bf16.msra.mxu0 %v3043
        %3088 = vmatmul.bf16.gmra.mxu0 %v2937
        %v3089 = vpop.f32.mrf.mxu0
        %v3090 = vadd.f32 %v3077, %v3089
        %v3091 = vpop.f32.mrf.mxu0
        %3092 = vdwg.mxu0
        %v3093 = vmax.f32 %v3090, 0.0
        %v3094 = vpack.c.bf16 %v3093, %v3093
        %v3095 = vld [vmem:[%s10] sm:$0xf]
        %v3096 = vld [vmem:[%s10 + $0x4] sm:$0xf]
        %v3097 = vld [vmem:[%s10 + $0x8] sm:$0xf]
        %v3098 = vld [vmem:[%s10 + $0xc] sm:$0xf]
        %v3099 = vld [vmem:[%s11] sm:$0x1]
        %v3104 = vunpack.c.l.b16 %v3095
        %v3105 = vunpack.c.l.b16 %v3096
        %v3106 = vunpack.c.l.b16 %v3097
        %v3107 = vunpack.c.l.b16 %v3098
        %v3108 = vpack.c.b16 %v3105, %v3104
        %v3109 = vpack.c.b16 %v3107, %v3106
        %vm3112 = vcmask 261120
        %v3114 = vsel %vm3112, %v3094, 0
        %3116 = vmatpush.bf16.msra.mxu0 0
        %3117 = vmatpush.bf16.msra.mxu0 0
        %3118 = vmatpush.bf16.msra.mxu0 0
        %3119 = vmatpush.bf16.msra.mxu0 0
        %3120 = vmatpush.bf16.msra.mxu0 0
        %3121 = vmatpush.bf16.msra.mxu0 0
        %3122 = vmatpush.bf16.msra.mxu0 %v3109
        %3123 = vmatpush.bf16.msra.mxu0 %v3108
        %3124 = vmatmul.bf16.gmra.mxu0 %v3114
        %v3125 = vpop.f32.mrf.mxu0
        %v3126 = vadd.f32 %v3099, %v3125
        %v3127 = vpop.f32.mrf.mxu0
        %3128 = vdwg.mxu0
        %vm3129 = vcmask 8192
        %3130 = vst.msk [vmem:[%s405] sm:$0x1] %vm3129, %v3126
        %s3131 = sand.u32 %s291, 1
        %s3132 = scalar_lea.sflag [#allocation3], %s3131
        %s3133 = sand.u32 %s291, 1
        %s3134 = scalar_lea.vmem [#allocation2], %s3133
        // Predicated region
        $region69: #{neural_classifier_forward.1} parent=67 // pred_check
          %p3135 = pneg %p301
        $region70: #{neural_classifier_forward.1} parent=67 // pred_check_branch
          %3137 = sbr.rel (%p3135) target = $region72
        $region71: #{neural_classifier_forward.1} parent=67 // pred_region
          %3139 = vsyncadd %s3132, 0
          %s3140 = scalar_lea.hbm %s12, %s26
          %s3142 = sshll.u32 %s3134, 4
          %s3143 = int_to_ptr.vmem [resolvable:$true] %s3142
          %s3144 = sshll.u32 %s3140, 4
          %s3145 = int_to_ptr.hbm [resolvable:$true] %s3144
          %3147 = dma.vmem_to_hbm [thread:$0]  %s3143, 16, %s3145, %s3132
        $region72: #{neural_classifier_forward.1} parent=67 // pred_fallthru
          _
      $region68: #{neural_classifier_forward.1} parent=5 // pred_fallthru
        _
      %p3148 = scmp.le.s32.totalorder 2, %s21
      // Predicated region
      $region73: #{neural_classifier_forward.1} parent=5 // pred_check
        %p3149 = pneg %p3148
      $region74: #{neural_classifier_forward.1} parent=5 // pred_check_branch
        %3151 = sbr.rel (%p3149) target = $region76
      $region75: #{neural_classifier_forward.1} parent=5 // pred_region
        %s3152 = ssub.s32 %s21, 2
        // Predicated region
        $region77: #{neural_classifier_forward.1} parent=75 // pred_check
          %p3153 = pneg %p307
        $region78: #{neural_classifier_forward.1} parent=75 // pred_check_branch
          %3155 = sbr.rel (%p3153) target = $region80
        $region79: #{neural_classifier_forward.1} parent=75 // pred_region
          %s3156 = sand.u32 %s292, 1
          %s3157 = scalar_lea.sflag [#allocation3], %s3156
          %s3158 = sand.u32 %s292, 1
          %s3159 = scalar_lea.vmem [#allocation2], %s3158
          %3161 = dma.done %s3157, 16
        $region80: #{neural_classifier_forward.1} parent=75 // pred_fallthru
          _
      $region76: #{neural_classifier_forward.1} parent=5 // pred_fallthru
        _
    $region6: #{neural_classifier_forward.1} parent=1 // loop_footer
      %s25 = sadd.s32 1, %s21
    $region7: #{neural_classifier_forward.1} parent=1 // loop_footer_branch
      %20 = sbr.rel target = $region3
    $region8: #{neural_classifier_forward.1} parent=1 // loop_exit
      _
    %3162 = vsyncpa [#allocation3], 1
    %s3163 = scalar_lea.sflag [#allocation3], 1
    %3164 = vsyncpa %s3163, 1

</llo_original>
